<compile_context>
chip_gen: v6e
topology: v6e:2x2x1
jax: 0.10.0
libtpu: 0.0.40
codegen_flags: <defaults>
</compile_context>

<pallas_src>
import functools

import jax
import jax.numpy as jnp
from jax.experimental import pallas as pl
from jax.experimental.pallas import tpu as pltpu


# ----------------------------------------------------------------------------
# Generic stride-1 "tap conv" kernel.  One grid step == one batch element:
#   o(C_out, L_out) = [relu]( sum_t  W_t(C_out, C_eff) @ x[:, t:t+L_out] + b )
# Taps are contiguous lane slices of the VMEM-resident input row (no HBM
# re-reads).  Operands are up-cast to f32 before the dot: f32 accumulation on
# the MXU, and the interpret-mode CPU dot thunk only supports same-type dots.
# ----------------------------------------------------------------------------
def _taps_conv_kernel(w_ref, b_ref, x_ref, o_ref, *, n_taps, relu):
    l_out = o_ref.shape[-1]
    acc = jnp.zeros(o_ref.shape, jnp.float32)
    for t in range(n_taps):                      # static unroll, n_taps <= 7
        w_t = w_ref[t].astype(jnp.float32)                    # (C_out, C_eff)
        x_t = x_ref[:, t:t + l_out].astype(jnp.float32)       # (C_eff, L_out)
        acc = acc + jnp.dot(w_t, x_t, preferred_element_type=jnp.float32)
    acc = acc + b_ref[...]                       # (C_out, 1) broadcasts on lanes
    if relu:
        acc = jnp.maximum(acc, 0.0)
    o_ref[...] = acc.astype(o_ref.dtype)


def _taps_conv(xs, w_eff, bias, *, relu, out_dtype):
    """xs: (B, C_eff, Lh); w_eff: (T, C_out, C_eff); bias: (C_out,).
    Returns (B, C_out, L_out) with L_out = Lh - T + 1."""
    B, C_eff, Lh = xs.shape
    T, C_out, _ = w_eff.shape
    L_out = Lh - T + 1
    b2 = bias.reshape(C_out, 1).astype(jnp.float32)

    flops = 2 * B * T * C_out * C_eff * L_out
    bytes_accessed = (int(xs.size) * xs.dtype.itemsize
                      + int(w_eff.size) * w_eff.dtype.itemsize
                      + C_out * 4
                      + B * C_out * L_out * jnp.dtype(out_dtype).itemsize)

    return pl.pallas_call(
        functools.partial(_taps_conv_kernel, n_taps=T, relu=relu),
        out_shape=jax.ShapeDtypeStruct((B, C_out, L_out), out_dtype),
        grid=(B,),
        in_specs=[
            pl.BlockSpec((T, C_out, C_eff), lambda b: (0, 0, 0)),  # weights resident
            pl.BlockSpec((C_out, 1), lambda b: (0, 0)),            # bias resident
            pl.BlockSpec((None, C_eff, Lh), lambda b: (b, 0, 0)),  # one batch row
        ],
        out_specs=pl.BlockSpec((None, C_out, L_out), lambda b: (b, 0, 0)),
        compiler_params=pltpu.CompilerParams(
            dimension_semantics=("parallel",)),   # batch rows split across TCs (v7x)
        cost_estimate=pl.CostEstimate(flops=flops, transcendentals=0,
                                      bytes_accessed=bytes_accessed),
    )(w_eff, b2, xs)


def _fit_length(a, length):
    cur = a.shape[-1]
    if cur < length:
        a = jnp.pad(a, ((0, 0), (0, 0), (0, length - cur)))
    return a[:, :, :length]


# ---------------------------- layer wrappers --------------------------------
def conv1d_stride2(x, w, b, *, padding, relu, out_dtype):
    """PyTorch nn.Conv1d(stride=2) semantics.  x: (B, C_in, L); w: (C_out, C_in, K).
    Stride-2 conv == stride-1 conv over the even/odd phase-stacked input with
    ceil(K/2) taps (phase selection folded into the weights)."""
    B, C_in, L = x.shape
    C_out, _, K = w.shape
    L_out = (L + 2 * padding - K) // 2 + 1
    T = (K + 1) // 2                       # folded taps after phase stacking
    Lh = L_out + T - 1

    xp = jnp.pad(x, ((0, 0), (0, 0), (padding, padding)))
    # one even/odd split (single pass) instead of K strided tap slices
    xs = jnp.concatenate([_fit_length(xp[:, :, 0::2], Lh),
                          _fit_length(xp[:, :, 1::2], Lh)], axis=1)  # (B, 2C_in, Lh)

    w_even = w[:, :, 0::2]                                           # (C_out, C_in, T)
    w_odd = w[:, :, 1::2]                                            # (C_out, C_in, K//2)
    if w_odd.shape[-1] < T:
        w_odd = jnp.pad(w_odd, ((0, 0), (0, 0), (0, T - w_odd.shape[-1])))
    w_eff = jnp.transpose(jnp.concatenate([w_even, w_odd], axis=1), (2, 0, 1))
    return _taps_conv(xs, w_eff.astype(x.dtype), b, relu=relu, out_dtype=out_dtype)


def conv_transpose1d_stride1(x, w, b, *, padding, output_padding, relu, out_dtype):
    """PyTorch nn.ConvTranspose1d(stride=1).  x: (B, C_in, L); w: (C_in, C_out, K)."""
    K = w.shape[2]
    wf = jnp.transpose(w[:, :, ::-1], (2, 1, 0))          # flipped, (K, C_out, C_in)
    pad_l = K - 1 - padding
    pad_r = K - 1 - padding + output_padding
    xs = jnp.pad(x, ((0, 0), (0, 0), (pad_l, pad_r)))
    return _taps_conv(xs, wf.astype(x.dtype), b, relu=relu, out_dtype=out_dtype)


def conv_transpose1d_stride2(x, w, b, *, padding, output_padding, relu, out_dtype):
    """PyTorch nn.ConvTranspose1d(stride=2) via polyphase decomposition; BOTH
    output phases fused into one pallas_call (weights stacked along C_out).
    x: (B, C_in, L); w: (C_in, C_out, K)."""
    B, C_in, L = x.shape
    _, C_out, K = w.shape
    L_out = (L - 1) * 2 - 2 * padding + K + output_padding
    pad_l = K - 1 - padding
    wf = jnp.transpose(w[:, :, ::-1], (2, 1, 0))          # flipped, (K, C_out, C_in)

    # output phase r (n = 2m + r) is a dense stride-1 conv over the *undilated*
    # input using only the taps of one parity
    phases = []
    for r in range(2):
        k0 = (pad_l + r) % 2                  # tap parity feeding phase r
        off = (r + k0 - pad_l) // 2           # input index of tap s=0 at m=0 (exact)
        Kr = (K - k0 + 1) // 2                # taps of that parity
        Lr = (L_out - r + 1) // 2             # outputs with parity r
        phases.append((k0, off, Kr, Lr))
    first = min(p[1] for p in phases)
    Lc = max(p[3] for p in phases)
    T = max(p[1] - first + p[2] for p in phases)          # common tap count
    Lh = Lc + T - 1

    # common input window [first, first + Lh), zero-padded outside [0, L)
    lo, hi = first, first + Lh
    xs = x[:, :, max(0, lo):min(L, hi)]
    xs = jnp.pad(xs, ((0, 0), (0, 0), (max(0, -lo), max(0, hi - L))))

    # phase weights stacked along C_out (zero-padded onto the common tap grid)
    blocks = []
    for (k0, off, Kr, Lr) in phases:
        d = off - first
        blocks.append(jnp.pad(wf[k0::2], ((d, T - d - Kr), (0, 0), (0, 0))))
    w_eff = jnp.concatenate(blocks, axis=1)               # (T, 2*C_out, C_in)
    b_eff = jnp.concatenate([b, b])

    y = _taps_conv(xs, w_eff.astype(x.dtype), b_eff, relu=relu, out_dtype=out_dtype)
    # interleave the two output phases with a contiguous stack+reshape
    # (no zeros-init + strided scatters)
    y0 = y[:, :C_out, :]                                  # outputs 0, 2, 4, ...
    y1 = y[:, C_out:, :]                                  # outputs 1, 3, 5, ...
    out = jnp.stack([y0, y1], axis=-1).reshape(B, C_out, 2 * Lc)
    return out[:, :, :L_out]


# --------------------------- model definition -------------------------------
def init_params(key, num_channels, filter_size=7, num_filters=16, num_downsamples=2):
    params = {}
    ks = jax.random.split(key, 16)
    ki = iter(range(16))

    def u(k, shape, fan_in):
        bound = 1.0 / jnp.sqrt(jnp.float32(fan_in))
        return jax.random.uniform(k, shape, jnp.float32, -bound, bound)

    in_ch = num_channels
    for i in range(num_downsamples):                      # Conv1d: (C_out, C_in, K)
        out_ch = (num_downsamples - i) * num_filters
        fan_in = in_ch * filter_size
        params[f"enc{i}_w"] = u(ks[next(ki)], (out_ch, in_ch, filter_size), fan_in)
        params[f"enc{i}_b"] = u(ks[next(ki)], (out_ch,), fan_in)
        in_ch = out_ch
    for i in range(num_downsamples):                      # ConvTranspose1d: (C_in, C_out, K)
        out_ch = (i + 1) * num_filters
        fan_in = in_ch * filter_size
        params[f"dec{i}_w"] = u(ks[next(ki)], (in_ch, out_ch, filter_size), fan_in)
        params[f"dec{i}_b"] = u(ks[next(ki)], (out_ch,), fan_in)
        in_ch = out_ch
    fan_in = in_ch * filter_size
    params["dec_final_w"] = u(ks[next(ki)], (in_ch, num_channels, filter_size), fan_in)
    params["dec_final_b"] = u(ks[next(ki)], (num_channels,), fan_in)
    return params


def autoencoder_forward(x, params, *, filter_size=7, num_downsamples=2,
                        compute_dtype=jnp.bfloat16):
    """x: (B, T, C) -> (B, T, C). Matches Conv1DAutoencoder.forward (eval mode).
    compute_dtype gates the activation/weight storage dtype (bf16 default for
    the memory-bound path; jnp.float32 for a bit-faithful run)."""
    pad = filter_size // 2
    h = jnp.transpose(x, (0, 2, 1)).astype(compute_dtype)     # (B, C, T) channel-first
    for i in range(num_downsamples):
        h = conv1d_stride2(h, params[f"enc{i}_w"], params[f"enc{i}_b"],
                           padding=pad, relu=True, out_dtype=compute_dtype)
        # nn.Dropout -> identity (inference)
    for i in range(num_downsamples):
        h = conv_transpose1d_stride2(h, params[f"dec{i}_w"], params[f"dec{i}_b"],
                                     padding=pad, output_padding=1, relu=True,
                                     out_dtype=compute_dtype)
        # nn.Dropout -> identity (inference)
    h = conv_transpose1d_stride1(h, params["dec_final_w"], params["dec_final_b"],
                                 padding=pad, output_padding=0, relu=False,
                                 out_dtype=jnp.float32)
    return jnp.transpose(h, (0, 2, 1))                        # (B, C, T) -> (B, T, C)


# -------------------------- pure-JAX reference ------------------------------
def _ref_forward(x, params, *, filter_size=7, num_downsamples=2):
    pad = filter_size // 2
    h = jnp.transpose(x, (0, 2, 1))  # (B, C, T) like PyTorch

    def conv(h, w, b, stride, p):
        y = jax.lax.conv_general_dilated(
            h, w, (stride,), [(p, p)], dimension_numbers=("NCH", "OIH", "NCH"))
        return y + b[None, :, None]

    def convT(h, w, b, stride, p, op):
        K = w.shape[2]
        w2 = jnp.transpose(w, (1, 0, 2))[:, :, ::-1]
        y = jax.lax.conv_general_dilated(
            h, w2, (1,), [(K - 1 - p, K - 1 - p + op)],
            lhs_dilation=(stride,), dimension_numbers=("NCH", "OIH", "NCH"))
        return y + b[None, :, None]

    for i in range(num_downsamples):
        h = jax.nn.relu(conv(h, params[f"enc{i}_w"], params[f"enc{i}_b"], 2, pad))
    for i in range(num_downsamples):
        h = jax.nn.relu(convT(h, params[f"dec{i}_w"], params[f"dec{i}_b"], 2, pad, 1))
    h = convT(h, params["dec_final_w"], params["dec_final_b"], 1, pad, 0)
    return jnp.transpose(h, (0, 2, 1))


# --------------------------------- main --------------------------------------
if __name__ == "__main__":
    B, T_len, C = 2, 16, 4          # batch, sequence length, num_channels
    key = jax.random.PRNGKey(0)
    kx, kp = jax.random.split(key)

    x = jax.random.normal(kx, (B, T_len, C), jnp.float32)
    params = init_params(kp, num_channels=C, filter_size=7,
                         num_filters=16, num_downsamples=2)

    fwd = jax.jit(functools.partial(autoencoder_forward,
                                    filter_size=7, num_downsamples=2))
    out = jax.block_until_ready(fwd(x, params))

    assert out.shape == (B, T_len, C), out.shape
    ref = _ref_forward(x, params, filter_size=7, num_downsamples=2)
    # bf16 storage for operands/inter-layer activations vs the f32 reference:
    # f32 accumulation keeps the error ~1e-2 absolute -> loosened tolerance.
    max_err = float(jnp.max(jnp.abs(out - ref)))
    assert jnp.allclose(out, ref, atol=5e-2, rtol=5e-2), max_err

    print("KERNEL_OK")
</pallas_src>

<mosaic_0001>
module attributes {stable_mosaic.version = 11 : i64} {
  func.func @_taps_conv_kernel(%arg0: i32, %arg1: memref<4x32x8xbf16, #tpu.memory_space<vmem>>, %arg2: memref<32x1xf32, #tpu.memory_space<vmem>>, %arg3: memref<1x8x11xbf16, #tpu.memory_space<vmem>>, %arg4: memref<1x32x8xbf16, #tpu.memory_space<vmem>>) attributes {dimension_semantics = [#tpu.dimension_semantics<parallel>], iteration_bounds = array<i64: 2>, scalar_prefetch = 0 : i64, scratch_operands = 0 : i64, tpu.core_type = #tpu.core_type<tc>, window_params = [{pipeline_mode = #tpu.pipeline_mode<synchronous>, transform_indices = @transform_0, window_bounds = array<i64: 4, 32, 8>}, {pipeline_mode = #tpu.pipeline_mode<synchronous>, transform_indices = @transform_1, window_bounds = array<i64: 32, 1>}, {transform_indices = @transform_2, window_bounds = array<i64: 1, 8, 11>}, {transform_indices = @transform_3, window_bounds = array<i64: 1, 32, 8>}]} {
    %cst = arith.constant 0.000000e+00 : f32
    %0 = vector.broadcast %cst : f32 to vector<32x8xf32>
    %c0 = arith.constant 0 : index
    %c0_0 = arith.constant 0 : index
    %c0_1 = arith.constant 0 : index
    %1 = vector.load %arg1[%c0, %c0_0, %c0_1] : memref<4x32x8xbf16, #tpu.memory_space<vmem>>, vector<1x32x8xbf16>
    %2 = vector.shape_cast %1 : vector<1x32x8xbf16> to vector<32x8xbf16>
    %3 = arith.extf %2 : vector<32x8xbf16> to vector<32x8xf32>
    %c0_2 = arith.constant 0 : index
    %c0_3 = arith.constant 0 : index
    %c0_4 = arith.constant 0 : index
    %4 = vector.load %arg3[%c0_2, %c0_3, %c0_4] : memref<1x8x11xbf16, #tpu.memory_space<vmem>>, vector<1x8x8xbf16>
    %5 = vector.shape_cast %4 : vector<1x8x8xbf16> to vector<8x8xbf16>
    %6 = arith.extf %5 : vector<8x8xbf16> to vector<8x8xf32>
    %cst_5 = arith.constant dense<0.000000e+00> : vector<32x8xf32>
    %7 = tpu.matmul %3, %6, %cst_5 {dimension_numbers = #tpu.dot_dimension_numbers<[1], [0], [0], [1], [0, 0, 1, 1], [], []>} : vector<32x8xf32>, vector<8x8xf32>, vector<32x8xf32> -> vector<32x8xf32>
    %8 = arith.addf %0, %7 : vector<32x8xf32>
    %c1 = arith.constant 1 : index
    %c0_6 = arith.constant 0 : index
    %c0_7 = arith.constant 0 : index
    %9 = vector.load %arg1[%c1, %c0_6, %c0_7] : memref<4x32x8xbf16, #tpu.memory_space<vmem>>, vector<1x32x8xbf16>
    %10 = vector.shape_cast %9 : vector<1x32x8xbf16> to vector<32x8xbf16>
    %11 = arith.extf %10 : vector<32x8xbf16> to vector<32x8xf32>
    %c0_8 = arith.constant 0 : index
    %c0_9 = arith.constant 0 : index
    %c1_10 = arith.constant 1 : index
    %12 = vector.load %arg3[%c0_8, %c0_9, %c1_10] : memref<1x8x11xbf16, #tpu.memory_space<vmem>>, vector<1x8x8xbf16>
    %13 = vector.shape_cast %12 : vector<1x8x8xbf16> to vector<8x8xbf16>
    %14 = arith.extf %13 : vector<8x8xbf16> to vector<8x8xf32>
    %cst_11 = arith.constant dense<0.000000e+00> : vector<32x8xf32>
    %15 = tpu.matmul %11, %14, %cst_11 {dimension_numbers = #tpu.dot_dimension_numbers<[1], [0], [0], [1], [0, 0, 1, 1], [], []>} : vector<32x8xf32>, vector<8x8xf32>, vector<32x8xf32> -> vector<32x8xf32>
    %16 = arith.addf %8, %15 : vector<32x8xf32>
    %c2 = arith.constant 2 : index
    %c0_12 = arith.constant 0 : index
    %c0_13 = arith.constant 0 : index
    %17 = vector.load %arg1[%c2, %c0_12, %c0_13] : memref<4x32x8xbf16, #tpu.memory_space<vmem>>, vector<1x32x8xbf16>
    %18 = vector.shape_cast %17 : vector<1x32x8xbf16> to vector<32x8xbf16>
    %19 = arith.extf %18 : vector<32x8xbf16> to vector<32x8xf32>
    %c0_14 = arith.constant 0 : index
    %c0_15 = arith.constant 0 : index
    %c2_16 = arith.constant 2 : index
    %20 = vector.load %arg3[%c0_14, %c0_15, %c2_16] : memref<1x8x11xbf16, #tpu.memory_space<vmem>>, vector<1x8x8xbf16>
    %21 = vector.shape_cast %20 : vector<1x8x8xbf16> to vector<8x8xbf16>
    %22 = arith.extf %21 : vector<8x8xbf16> to vector<8x8xf32>
    %cst_17 = arith.constant dense<0.000000e+00> : vector<32x8xf32>
    %23 = tpu.matmul %19, %22, %cst_17 {dimension_numbers = #tpu.dot_dimension_numbers<[1], [0], [0], [1], [0, 0, 1, 1], [], []>} : vector<32x8xf32>, vector<8x8xf32>, vector<32x8xf32> -> vector<32x8xf32>
    %24 = arith.addf %16, %23 : vector<32x8xf32>
    %c3 = arith.constant 3 : index
    %c0_18 = arith.constant 0 : index
    %c0_19 = arith.constant 0 : index
    %25 = vector.load %arg1[%c3, %c0_18, %c0_19] : memref<4x32x8xbf16, #tpu.memory_space<vmem>>, vector<1x32x8xbf16>
    %26 = vector.shape_cast %25 : vector<1x32x8xbf16> to vector<32x8xbf16>
    %27 = arith.extf %26 : vector<32x8xbf16> to vector<32x8xf32>
    %c0_20 = arith.constant 0 : index
    %c0_21 = arith.constant 0 : index
    %c3_22 = arith.constant 3 : index
    %28 = vector.load %arg3[%c0_20, %c0_21, %c3_22] : memref<1x8x11xbf16, #tpu.memory_space<vmem>>, vector<1x8x8xbf16>
    %29 = vector.shape_cast %28 : vector<1x8x8xbf16> to vector<8x8xbf16>
    %30 = arith.extf %29 : vector<8x8xbf16> to vector<8x8xf32>
    %cst_23 = arith.constant dense<0.000000e+00> : vector<32x8xf32>
    %31 = tpu.matmul %27, %30, %cst_23 {dimension_numbers = #tpu.dot_dimension_numbers<[1], [0], [0], [1], [0, 0, 1, 1], [], []>} : vector<32x8xf32>, vector<8x8xf32>, vector<32x8xf32> -> vector<32x8xf32>
    %32 = arith.addf %24, %31 : vector<32x8xf32>
    %c0_24 = arith.constant 0 : index
    %c0_25 = arith.constant 0 : index
    %33 = vector.load %arg2[%c0_24, %c0_25] : memref<32x1xf32, #tpu.memory_space<vmem>>, vector<32x1xf32>
    %34 = vector.broadcast %33 : vector<32x1xf32> to vector<32x8xf32>
    %35 = arith.addf %32, %34 : vector<32x8xf32>
    %cst_26 = arith.constant 0.000000e+00 : f32
    %36 = vector.broadcast %cst_26 : f32 to vector<32x8xf32>
    %37 = arith.maximumf %35, %36 : vector<32x8xf32>
    %38 = arith.truncf %37 : vector<32x8xf32> to vector<32x8xbf16>
    %c0_27 = arith.constant 0 : index
    %c0_28 = arith.constant 0 : index
    %c0_29 = arith.constant 0 : index
    %39 = vector.load %arg4[%c0_27, %c0_28, %c0_29] : memref<1x32x8xbf16, #tpu.memory_space<vmem>>, vector<1x32x8xbf16>
    %40 = vector.shape_cast %39 : vector<1x32x8xbf16> to vector<32x8xbf16>
    %41 = vector.shape_cast %38 : vector<32x8xbf16> to vector<1x32x8xbf16>
    tpu.vector_store %arg4[%c0_27, %c0_28, %c0_29], %41 {strides = array<i32>} : memref<1x32x8xbf16, #tpu.memory_space<vmem>>, vector<1x32x8xbf16>,
    return
  }
  func.func @transform_0(%arg0: i32) -> (i32, i32, i32) {
    %c0_i32 = arith.constant 0 : i32
    %c0_i32_0 = arith.constant 0 : i32
    %c0_i32_1 = arith.constant 0 : i32
    %c0_i32_2 = arith.constant 0 : i32
    return %c0_i32, %c0_i32_0, %c0_i32_1 : i32, i32, i32
  }
  func.func @transform_1(%arg0: i32) -> (i32, i32) {
    %c0_i32 = arith.constant 0 : i32
    %c0_i32_0 = arith.constant 0 : i32
    %c0_i32_1 = arith.constant 0 : i32
    return %c0_i32, %c0_i32_0 : i32, i32
  }
  func.func @transform_2(%arg0: i32) -> (i32, i32, i32) {
    %c0_i32 = arith.constant 0 : i32
    %c0_i32_0 = arith.constant 0 : i32
    %c0_i32_1 = arith.constant 0 : i32
    return %arg0, %c0_i32, %c0_i32_0 : i32, i32, i32
  }
  func.func @transform_3(%arg0: i32) -> (i32, i32, i32) {
    %c0_i32 = arith.constant 0 : i32
    %c0_i32_0 = arith.constant 0 : i32
    %c0_i32_1 = arith.constant 0 : i32
    return %arg0, %c0_i32, %c0_i32_0 : i32, i32, i32
  }
}

module attributes {stable_mosaic.version = 11 : i64} {
  func.func @_taps_conv_kernel(%arg0: i32, %arg1: memref<4x16x64xbf16, #tpu.memory_space<vmem>>, %arg2: memref<16x1xf32, #tpu.memory_space<vmem>>, %arg3: memref<1x64x7xbf16, #tpu.memory_space<vmem>>, %arg4: memref<1x16x4xbf16, #tpu.memory_space<vmem>>) attributes {dimension_semantics = [#tpu.dimension_semantics<parallel>], iteration_bounds = array<i64: 2>, scalar_prefetch = 0 : i64, scratch_operands = 0 : i64, tpu.core_type = #tpu.core_type<tc>, window_params = [{pipeline_mode = #tpu.pipeline_mode<synchronous>, transform_indices = @transform_0, window_bounds = array<i64: 4, 16, 64>}, {pipeline_mode = #tpu.pipeline_mode<synchronous>, transform_indices = @transform_1, window_bounds = array<i64: 16, 1>}, {transform_indices = @transform_2, window_bounds = array<i64: 1, 64, 7>}, {transform_indices = @transform_3, window_bounds = array<i64: 1, 16, 4>}]} {
    %cst = arith.constant 0.000000e+00 : f32
    %0 = vector.broadcast %cst : f32 to vector<16x4xf32>
    %c0 = arith.constant 0 : index
    %c0_0 = arith.constant 0 : index
    %c0_1 = arith.constant 0 : index
    %1 = vector.load %arg1[%c0, %c0_0, %c0_1] : memref<4x16x64xbf16, #tpu.memory_space<vmem>>, vector<1x16x64xbf16>
    %2 = vector.shape_cast %1 : vector<1x16x64xbf16> to vector<16x64xbf16>
    %3 = arith.extf %2 : vector<16x64xbf16> to vector<16x64xf32>
    %c0_2 = arith.constant 0 : index
    %c0_3 = arith.constant 0 : index
    %c0_4 = arith.constant 0 : index
    %4 = vector.load %arg3[%c0_2, %c0_3, %c0_4] : memref<1x64x7xbf16, #tpu.memory_space<vmem>>, vector<1x64x4xbf16>
    %5 = vector.shape_cast %4 : vector<1x64x4xbf16> to vector<64x4xbf16>
    %6 = arith.extf %5 : vector<64x4xbf16> to vector<64x4xf32>
    %cst_5 = arith.constant dense<0.000000e+00> : vector<16x4xf32>
    %7 = tpu.matmul %3, %6, %cst_5 {dimension_numbers = #tpu.dot_dimension_numbers<[1], [0], [0], [1], [0, 0, 1, 1], [], []>} : vector<16x64xf32>, vector<64x4xf32>, vector<16x4xf32> -> vector<16x4xf32>
    %8 = arith.addf %0, %7 : vector<16x4xf32>
    %c1 = arith.constant 1 : index
    %c0_6 = arith.constant 0 : index
    %c0_7 = arith.constant 0 : index
    %9 = vector.load %arg1[%c1, %c0_6, %c0_7] : memref<4x16x64xbf16, #tpu.memory_space<vmem>>, vector<1x16x64xbf16>
    %10 = vector.shape_cast %9 : vector<1x16x64xbf16> to vector<16x64xbf16>
    %11 = arith.extf %10 : vector<16x64xbf16> to vector<16x64xf32>
    %c0_8 = arith.constant 0 : index
    %c0_9 = arith.constant 0 : index
    %c1_10 = arith.constant 1 : index
    %12 = vector.load %arg3[%c0_8, %c0_9, %c1_10] : memref<1x64x7xbf16, #tpu.memory_space<vmem>>, vector<1x64x4xbf16>
    %13 = vector.shape_cast %12 : vector<1x64x4xbf16> to vector<64x4xbf16>
    %14 = arith.extf %13 : vector<64x4xbf16> to vector<64x4xf32>
    %cst_11 = arith.constant dense<0.000000e+00> : vector<16x4xf32>
    %15 = tpu.matmul %11, %14, %cst_11 {dimension_numbers = #tpu.dot_dimension_numbers<[1], [0], [0], [1], [0, 0, 1, 1], [], []>} : vector<16x64xf32>, vector<64x4xf32>, vector<16x4xf32> -> vector<16x4xf32>
    %16 = arith.addf %8, %15 : vector<16x4xf32>
    %c2 = arith.constant 2 : index
    %c0_12 = arith.constant 0 : index
    %c0_13 = arith.constant 0 : index
    %17 = vector.load %arg1[%c2, %c0_12, %c0_13] : memref<4x16x64xbf16, #tpu.memory_space<vmem>>, vector<1x16x64xbf16>
    %18 = vector.shape_cast %17 : vector<1x16x64xbf16> to vector<16x64xbf16>
    %19 = arith.extf %18 : vector<16x64xbf16> to vector<16x64xf32>
    %c0_14 = arith.constant 0 : index
    %c0_15 = arith.constant 0 : index
    %c2_16 = arith.constant 2 : index
    %20 = vector.load %arg3[%c0_14, %c0_15, %c2_16] : memref<1x64x7xbf16, #tpu.memory_space<vmem>>, vector<1x64x4xbf16>
    %21 = vector.shape_cast %20 : vector<1x64x4xbf16> to vector<64x4xbf16>
    %22 = arith.extf %21 : vector<64x4xbf16> to vector<64x4xf32>
    %cst_17 = arith.constant dense<0.000000e+00> : vector<16x4xf32>
    %23 = tpu.matmul %19, %22, %cst_17 {dimension_numbers = #tpu.dot_dimension_numbers<[1], [0], [0], [1], [0, 0, 1, 1], [], []>} : vector<16x64xf32>, vector<64x4xf32>, vector<16x4xf32> -> vector<16x4xf32>
    %24 = arith.addf %16, %23 : vector<16x4xf32>
    %c3 = arith.constant 3 : index
    %c0_18 = arith.constant 0 : index
    %c0_19 = arith.constant 0 : index
    %25 = vector.load %arg1[%c3, %c0_18, %c0_19] : memref<4x16x64xbf16, #tpu.memory_space<vmem>>, vector<1x16x64xbf16>
    %26 = vector.shape_cast %25 : vector<1x16x64xbf16> to vector<16x64xbf16>
    %27 = arith.extf %26 : vector<16x64xbf16> to vector<16x64xf32>
    %c0_20 = arith.constant 0 : index
    %c0_21 = arith.constant 0 : index
    %c3_22 = arith.constant 3 : index
    %28 = vector.load %arg3[%c0_20, %c0_21, %c3_22] : memref<1x64x7xbf16, #tpu.memory_space<vmem>>, vector<1x64x4xbf16>
    %29 = vector.shape_cast %28 : vector<1x64x4xbf16> to vector<64x4xbf16>
    %30 = arith.extf %29 : vector<64x4xbf16> to vector<64x4xf32>
    %cst_23 = arith.constant dense<0.000000e+00> : vector<16x4xf32>
    %31 = tpu.matmul %27, %30, %cst_23 {dimension_numbers = #tpu.dot_dimension_numbers<[1], [0], [0], [1], [0, 0, 1, 1], [], []>} : vector<16x64xf32>, vector<64x4xf32>, vector<16x4xf32> -> vector<16x4xf32>
    %32 = arith.addf %24, %31 : vector<16x4xf32>
    %c0_24 = arith.constant 0 : index
    %c0_25 = arith.constant 0 : index
    %33 = vector.load %arg2[%c0_24, %c0_25] : memref<16x1xf32, #tpu.memory_space<vmem>>, vector<16x1xf32>
    %34 = vector.broadcast %33 : vector<16x1xf32> to vector<16x4xf32>
    %35 = arith.addf %32, %34 : vector<16x4xf32>
    %cst_26 = arith.constant 0.000000e+00 : f32
    %36 = vector.broadcast %cst_26 : f32 to vector<16x4xf32>
    %37 = arith.maximumf %35, %36 : vector<16x4xf32>
    %38 = arith.truncf %37 : vector<16x4xf32> to vector<16x4xbf16>
    %c0_27 = arith.constant 0 : index
    %c0_28 = arith.constant 0 : index
    %c0_29 = arith.constant 0 : index
    %39 = vector.load %arg4[%c0_27, %c0_28, %c0_29] : memref<1x16x4xbf16, #tpu.memory_space<vmem>>, vector<1x16x4xbf16>
    %40 = vector.shape_cast %39 : vector<1x16x4xbf16> to vector<16x4xbf16>
    %41 = vector.shape_cast %38 : vector<16x4xbf16> to vector<1x16x4xbf16>
    tpu.vector_store %arg4[%c0_27, %c0_28, %c0_29], %41 {strides = array<i32>} : memref<1x16x4xbf16, #tpu.memory_space<vmem>>, vector<1x16x4xbf16>,
    return
  }
  func.func @transform_0(%arg0: i32) -> (i32, i32, i32) {
    %c0_i32 = arith.constant 0 : i32
    %c0_i32_0 = arith.constant 0 : i32
    %c0_i32_1 = arith.constant 0 : i32
    %c0_i32_2 = arith.constant 0 : i32
    return %c0_i32, %c0_i32_0, %c0_i32_1 : i32, i32, i32
  }
  func.func @transform_1(%arg0: i32) -> (i32, i32) {
    %c0_i32 = arith.constant 0 : i32
    %c0_i32_0 = arith.constant 0 : i32
    %c0_i32_1 = arith.constant 0 : i32
    return %c0_i32, %c0_i32_0 : i32, i32
  }
  func.func @transform_2(%arg0: i32) -> (i32, i32, i32) {
    %c0_i32 = arith.constant 0 : i32
    %c0_i32_0 = arith.constant 0 : i32
    %c0_i32_1 = arith.constant 0 : i32
    return %arg0, %c0_i32, %c0_i32_0 : i32, i32, i32
  }
  func.func @transform_3(%arg0: i32) -> (i32, i32, i32) {
    %c0_i32 = arith.constant 0 : i32
    %c0_i32_0 = arith.constant 0 : i32
    %c0_i32_1 = arith.constant 0 : i32
    return %arg0, %c0_i32, %c0_i32_0 : i32, i32, i32
  }
}

module attributes {stable_mosaic.version = 11 : i64} {
  func.func @_taps_conv_kernel(%arg0: i32, %arg1: memref<4x32x16xbf16, #tpu.memory_space<vmem>>, %arg2: memref<32x1xf32, #tpu.memory_space<vmem>>, %arg3: memref<1x16x7xbf16, #tpu.memory_space<vmem>>, %arg4: memref<1x32x4xbf16, #tpu.memory_space<vmem>>) attributes {dimension_semantics = [#tpu.dimension_semantics<parallel>], iteration_bounds = array<i64: 2>, scalar_prefetch = 0 : i64, scratch_operands = 0 : i64, tpu.core_type = #tpu.core_type<tc>, window_params = [{pipeline_mode = #tpu.pipeline_mode<synchronous>, transform_indices = @transform_0, window_bounds = array<i64: 4, 32, 16>}, {pipeline_mode = #tpu.pipeline_mode<synchronous>, transform_indices = @transform_1, window_bounds = array<i64: 32, 1>}, {transform_indices = @transform_2, window_bounds = array<i64: 1, 16, 7>}, {transform_indices = @transform_3, window_bounds = array<i64: 1, 32, 4>}]} {
    %cst = arith.constant 0.000000e+00 : f32
    %0 = vector.broadcast %cst : f32 to vector<32x4xf32>
    %c0 = arith.constant 0 : index
    %c0_0 = arith.constant 0 : index
    %c0_1 = arith.constant 0 : index
    %1 = vector.load %arg1[%c0, %c0_0, %c0_1] : memref<4x32x16xbf16, #tpu.memory_space<vmem>>, vector<1x32x16xbf16>
    %2 = vector.shape_cast %1 : vector<1x32x16xbf16> to vector<32x16xbf16>
    %3 = arith.extf %2 : vector<32x16xbf16> to vector<32x16xf32>
    %c0_2 = arith.constant 0 : index
    %c0_3 = arith.constant 0 : index
    %c0_4 = arith.constant 0 : index
    %4 = vector.load %arg3[%c0_2, %c0_3, %c0_4] : memref<1x16x7xbf16, #tpu.memory_space<vmem>>, vector<1x16x4xbf16>
    %5 = vector.shape_cast %4 : vector<1x16x4xbf16> to vector<16x4xbf16>
    %6 = arith.extf %5 : vector<16x4xbf16> to vector<16x4xf32>
    %cst_5 = arith.constant dense<0.000000e+00> : vector<32x4xf32>
    %7 = tpu.matmul %3, %6, %cst_5 {dimension_numbers = #tpu.dot_dimension_numbers<[1], [0], [0], [1], [0, 0, 1, 1], [], []>} : vector<32x16xf32>, vector<16x4xf32>, vector<32x4xf32> -> vector<32x4xf32>
    %8 = arith.addf %0, %7 : vector<32x4xf32>
    %c1 = arith.constant 1 : index
    %c0_6 = arith.constant 0 : index
    %c0_7 = arith.constant 0 : index
    %9 = vector.load %arg1[%c1, %c0_6, %c0_7] : memref<4x32x16xbf16, #tpu.memory_space<vmem>>, vector<1x32x16xbf16>
    %10 = vector.shape_cast %9 : vector<1x32x16xbf16> to vector<32x16xbf16>
    %11 = arith.extf %10 : vector<32x16xbf16> to vector<32x16xf32>
    %c0_8 = arith.constant 0 : index
    %c0_9 = arith.constant 0 : index
    %c1_10 = arith.constant 1 : index
    %12 = vector.load %arg3[%c0_8, %c0_9, %c1_10] : memref<1x16x7xbf16, #tpu.memory_space<vmem>>, vector<1x16x4xbf16>
    %13 = vector.shape_cast %12 : vector<1x16x4xbf16> to vector<16x4xbf16>
    %14 = arith.extf %13 : vector<16x4xbf16> to vector<16x4xf32>
    %cst_11 = arith.constant dense<0.000000e+00> : vector<32x4xf32>
    %15 = tpu.matmul %11, %14, %cst_11 {dimension_numbers = #tpu.dot_dimension_numbers<[1], [0], [0], [1], [0, 0, 1, 1], [], []>} : vector<32x16xf32>, vector<16x4xf32>, vector<32x4xf32> -> vector<32x4xf32>
    %16 = arith.addf %8, %15 : vector<32x4xf32>
    %c2 = arith.constant 2 : index
    %c0_12 = arith.constant 0 : index
    %c0_13 = arith.constant 0 : index
    %17 = vector.load %arg1[%c2, %c0_12, %c0_13] : memref<4x32x16xbf16, #tpu.memory_space<vmem>>, vector<1x32x16xbf16>
    %18 = vector.shape_cast %17 : vector<1x32x16xbf16> to vector<32x16xbf16>
    %19 = arith.extf %18 : vector<32x16xbf16> to vector<32x16xf32>
    %c0_14 = arith.constant 0 : index
    %c0_15 = arith.constant 0 : index
    %c2_16 = arith.constant 2 : index
    %20 = vector.load %arg3[%c0_14, %c0_15, %c2_16] : memref<1x16x7xbf16, #tpu.memory_space<vmem>>, vector<1x16x4xbf16>
    %21 = vector.shape_cast %20 : vector<1x16x4xbf16> to vector<16x4xbf16>
    %22 = arith.extf %21 : vector<16x4xbf16> to vector<16x4xf32>
    %cst_17 = arith.constant dense<0.000000e+00> : vector<32x4xf32>
    %23 = tpu.matmul %19, %22, %cst_17 {dimension_numbers = #tpu.dot_dimension_numbers<[1], [0], [0], [1], [0, 0, 1, 1], [], []>} : vector<32x16xf32>, vector<16x4xf32>, vector<32x4xf32> -> vector<32x4xf32>
    %24 = arith.addf %16, %23 : vector<32x4xf32>
    %c3 = arith.constant 3 : index
    %c0_18 = arith.constant 0 : index
    %c0_19 = arith.constant 0 : index
    %25 = vector.load %arg1[%c3, %c0_18, %c0_19] : memref<4x32x16xbf16, #tpu.memory_space<vmem>>, vector<1x32x16xbf16>
    %26 = vector.shape_cast %25 : vector<1x32x16xbf16> to vector<32x16xbf16>
    %27 = arith.extf %26 : vector<32x16xbf16> to vector<32x16xf32>
    %c0_20 = arith.constant 0 : index
    %c0_21 = arith.constant 0 : index
    %c3_22 = arith.constant 3 : index
    %28 = vector.load %arg3[%c0_20, %c0_21, %c3_22] : memref<1x16x7xbf16, #tpu.memory_space<vmem>>, vector<1x16x4xbf16>
    %29 = vector.shape_cast %28 : vector<1x16x4xbf16> to vector<16x4xbf16>
    %30 = arith.extf %29 : vector<16x4xbf16> to vector<16x4xf32>
    %cst_23 = arith.constant dense<0.000000e+00> : vector<32x4xf32>
    %31 = tpu.matmul %27, %30, %cst_23 {dimension_numbers = #tpu.dot_dimension_numbers<[1], [0], [0], [1], [0, 0, 1, 1], [], []>} : vector<32x16xf32>, vector<16x4xf32>, vector<32x4xf32> -> vector<32x4xf32>
    %32 = arith.addf %24, %31 : vector<32x4xf32>
    %c0_24 = arith.constant 0 : index
    %c0_25 = arith.constant 0 : index
    %33 = vector.load %arg2[%c0_24, %c0_25] : memref<32x1xf32, #tpu.memory_space<vmem>>, vector<32x1xf32>
    %34 = vector.broadcast %33 : vector<32x1xf32> to vector<32x4xf32>
    %35 = arith.addf %32, %34 : vector<32x4xf32>
    %cst_26 = arith.constant 0.000000e+00 : f32
    %36 = vector.broadcast %cst_26 : f32 to vector<32x4xf32>
    %37 = arith.maximumf %35, %36 : vector<32x4xf32>
    %38 = arith.truncf %37 : vector<32x4xf32> to vector<32x4xbf16>
    %c0_27 = arith.constant 0 : index
    %c0_28 = arith.constant 0 : index
    %c0_29 = arith.constant 0 : index
    %39 = vector.load %arg4[%c0_27, %c0_28, %c0_29] : memref<1x32x4xbf16, #tpu.memory_space<vmem>>, vector<1x32x4xbf16>
    %40 = vector.shape_cast %39 : vector<1x32x4xbf16> to vector<32x4xbf16>
    %41 = vector.shape_cast %38 : vector<32x4xbf16> to vector<1x32x4xbf16>
    tpu.vector_store %arg4[%c0_27, %c0_28, %c0_29], %41 {strides = array<i32>} : memref<1x32x4xbf16, #tpu.memory_space<vmem>>, vector<1x32x4xbf16>,
    return
  }
  func.func @transform_0(%arg0: i32) -> (i32, i32, i32) {
    %c0_i32 = arith.constant 0 : i32
    %c0_i32_0 = arith.constant 0 : i32
    %c0_i32_1 = arith.constant 0 : i32
    %c0_i32_2 = arith.constant 0 : i32
    return %c0_i32, %c0_i32_0, %c0_i32_1 : i32, i32, i32
  }
  func.func @transform_1(%arg0: i32) -> (i32, i32) {
    %c0_i32 = arith.constant 0 : i32
    %c0_i32_0 = arith.constant 0 : i32
    %c0_i32_1 = arith.constant 0 : i32
    return %c0_i32, %c0_i32_0 : i32, i32
  }
  func.func @transform_2(%arg0: i32) -> (i32, i32, i32) {
    %c0_i32 = arith.constant 0 : i32
    %c0_i32_0 = arith.constant 0 : i32
    %c0_i32_1 = arith.constant 0 : i32
    return %arg0, %c0_i32, %c0_i32_0 : i32, i32, i32
  }
  func.func @transform_3(%arg0: i32) -> (i32, i32, i32) {
    %c0_i32 = arith.constant 0 : i32
    %c0_i32_0 = arith.constant 0 : i32
    %c0_i32_1 = arith.constant 0 : i32
    return %arg0, %c0_i32, %c0_i32_0 : i32, i32, i32
  }
}

module attributes {stable_mosaic.version = 11 : i64} {
  func.func @_taps_conv_kernel(%arg0: i32, %arg1: memref<4x64x16xbf16, #tpu.memory_space<vmem>>, %arg2: memref<64x1xf32, #tpu.memory_space<vmem>>, %arg3: memref<1x16x11xbf16, #tpu.memory_space<vmem>>, %arg4: memref<1x64x8xbf16, #tpu.memory_space<vmem>>) attributes {dimension_semantics = [#tpu.dimension_semantics<parallel>], iteration_bounds = array<i64: 2>, scalar_prefetch = 0 : i64, scratch_operands = 0 : i64, tpu.core_type = #tpu.core_type<tc>, window_params = [{pipeline_mode = #tpu.pipeline_mode<synchronous>, transform_indices = @transform_0, window_bounds = array<i64: 4, 64, 16>}, {pipeline_mode = #tpu.pipeline_mode<synchronous>, transform_indices = @transform_1, window_bounds = array<i64: 64, 1>}, {transform_indices = @transform_2, window_bounds = array<i64: 1, 16, 11>}, {transform_indices = @transform_3, window_bounds = array<i64: 1, 64, 8>}]} {
    %cst = arith.constant 0.000000e+00 : f32
    %0 = vector.broadcast %cst : f32 to vector<64x8xf32>
    %c0 = arith.constant 0 : index
    %c0_0 = arith.constant 0 : index
    %c0_1 = arith.constant 0 : index
    %1 = vector.load %arg1[%c0, %c0_0, %c0_1] : memref<4x64x16xbf16, #tpu.memory_space<vmem>>, vector<1x64x16xbf16>
    %2 = vector.shape_cast %1 : vector<1x64x16xbf16> to vector<64x16xbf16>
    %3 = arith.extf %2 : vector<64x16xbf16> to vector<64x16xf32>
    %c0_2 = arith.constant 0 : index
    %c0_3 = arith.constant 0 : index
    %c0_4 = arith.constant 0 : index
    %4 = vector.load %arg3[%c0_2, %c0_3, %c0_4] : memref<1x16x11xbf16, #tpu.memory_space<vmem>>, vector<1x16x8xbf16>
    %5 = vector.shape_cast %4 : vector<1x16x8xbf16> to vector<16x8xbf16>
    %6 = arith.extf %5 : vector<16x8xbf16> to vector<16x8xf32>
    %cst_5 = arith.constant dense<0.000000e+00> : vector<64x8xf32>
    %7 = tpu.matmul %3, %6, %cst_5 {dimension_numbers = #tpu.dot_dimension_numbers<[1], [0], [0], [1], [0, 0, 1, 1], [], []>} : vector<64x16xf32>, vector<16x8xf32>, vector<64x8xf32> -> vector<64x8xf32>
    %8 = arith.addf %0, %7 : vector<64x8xf32>
    %c1 = arith.constant 1 : index
    %c0_6 = arith.constant 0 : index
    %c0_7 = arith.constant 0 : index
    %9 = vector.load %arg1[%c1, %c0_6, %c0_7] : memref<4x64x16xbf16, #tpu.memory_space<vmem>>, vector<1x64x16xbf16>
    %10 = vector.shape_cast %9 : vector<1x64x16xbf16> to vector<64x16xbf16>
    %11 = arith.extf %10 : vector<64x16xbf16> to vector<64x16xf32>
    %c0_8 = arith.constant 0 : index
    %c0_9 = arith.constant 0 : index
    %c1_10 = arith.constant 1 : index
    %12 = vector.load %arg3[%c0_8, %c0_9, %c1_10] : memref<1x16x11xbf16, #tpu.memory_space<vmem>>, vector<1x16x8xbf16>
    %13 = vector.shape_cast %12 : vector<1x16x8xbf16> to vector<16x8xbf16>
    %14 = arith.extf %13 : vector<16x8xbf16> to vector<16x8xf32>
    %cst_11 = arith.constant dense<0.000000e+00> : vector<64x8xf32>
    %15 = tpu.matmul %11, %14, %cst_11 {dimension_numbers = #tpu.dot_dimension_numbers<[1], [0], [0], [1], [0, 0, 1, 1], [], []>} : vector<64x16xf32>, vector<16x8xf32>, vector<64x8xf32> -> vector<64x8xf32>
    %16 = arith.addf %8, %15 : vector<64x8xf32>
    %c2 = arith.constant 2 : index
    %c0_12 = arith.constant 0 : index
    %c0_13 = arith.constant 0 : index
    %17 = vector.load %arg1[%c2, %c0_12, %c0_13] : memref<4x64x16xbf16, #tpu.memory_space<vmem>>, vector<1x64x16xbf16>
    %18 = vector.shape_cast %17 : vector<1x64x16xbf16> to vector<64x16xbf16>
    %19 = arith.extf %18 : vector<64x16xbf16> to vector<64x16xf32>
    %c0_14 = arith.constant 0 : index
    %c0_15 = arith.constant 0 : index
    %c2_16 = arith.constant 2 : index
    %20 = vector.load %arg3[%c0_14, %c0_15, %c2_16] : memref<1x16x11xbf16, #tpu.memory_space<vmem>>, vector<1x16x8xbf16>
    %21 = vector.shape_cast %20 : vector<1x16x8xbf16> to vector<16x8xbf16>
    %22 = arith.extf %21 : vector<16x8xbf16> to vector<16x8xf32>
    %cst_17 = arith.constant dense<0.000000e+00> : vector<64x8xf32>
    %23 = tpu.matmul %19, %22, %cst_17 {dimension_numbers = #tpu.dot_dimension_numbers<[1], [0], [0], [1], [0, 0, 1, 1], [], []>} : vector<64x16xf32>, vector<16x8xf32>, vector<64x8xf32> -> vector<64x8xf32>
    %24 = arith.addf %16, %23 : vector<64x8xf32>
    %c3 = arith.constant 3 : index
    %c0_18 = arith.constant 0 : index
    %c0_19 = arith.constant 0 : index
    %25 = vector.load %arg1[%c3, %c0_18, %c0_19] : memref<4x64x16xbf16, #tpu.memory_space<vmem>>, vector<1x64x16xbf16>
    %26 = vector.shape_cast %25 : vector<1x64x16xbf16> to vector<64x16xbf16>
    %27 = arith.extf %26 : vector<64x16xbf16> to vector<64x16xf32>
    %c0_20 = arith.constant 0 : index
    %c0_21 = arith.constant 0 : index
    %c3_22 = arith.constant 3 : index
    %28 = vector.load %arg3[%c0_20, %c0_21, %c3_22] : memref<1x16x11xbf16, #tpu.memory_space<vmem>>, vector<1x16x8xbf16>
    %29 = vector.shape_cast %28 : vector<1x16x8xbf16> to vector<16x8xbf16>
    %30 = arith.extf %29 : vector<16x8xbf16> to vector<16x8xf32>
    %cst_23 = arith.constant dense<0.000000e+00> : vector<64x8xf32>
    %31 = tpu.matmul %27, %30, %cst_23 {dimension_numbers = #tpu.dot_dimension_numbers<[1], [0], [0], [1], [0, 0, 1, 1], [], []>} : vector<64x16xf32>, vector<16x8xf32>, vector<64x8xf32> -> vector<64x8xf32>
    %32 = arith.addf %24, %31 : vector<64x8xf32>
    %c0_24 = arith.constant 0 : index
    %c0_25 = arith.constant 0 : index
    %33 = vector.load %arg2[%c0_24, %c0_25] : memref<64x1xf32, #tpu.memory_space<vmem>>, vector<64x1xf32>
    %34 = vector.broadcast %33 : vector<64x1xf32> to vector<64x8xf32>
    %35 = arith.addf %32, %34 : vector<64x8xf32>
    %cst_26 = arith.constant 0.000000e+00 : f32
    %36 = vector.broadcast %cst_26 : f32 to vector<64x8xf32>
    %37 = arith.maximumf %35, %36 : vector<64x8xf32>
    %38 = arith.truncf %37 : vector<64x8xf32> to vector<64x8xbf16>
    %c0_27 = arith.constant 0 : index
    %c0_28 = arith.constant 0 : index
    %c0_29 = arith.constant 0 : index
    %39 = vector.load %arg4[%c0_27, %c0_28, %c0_29] : memref<1x64x8xbf16, #tpu.memory_space<vmem>>, vector<1x64x8xbf16>
    %40 = vector.shape_cast %39 : vector<1x64x8xbf16> to vector<64x8xbf16>
    %41 = vector.shape_cast %38 : vector<64x8xbf16> to vector<1x64x8xbf16>
    tpu.vector_store %arg4[%c0_27, %c0_28, %c0_29], %41 {strides = array<i32>} : memref<1x64x8xbf16, #tpu.memory_space<vmem>>, vector<1x64x8xbf16>,
    return
  }
  func.func @transform_0(%arg0: i32) -> (i32, i32, i32) {
    %c0_i32 = arith.constant 0 : i32
    %c0_i32_0 = arith.constant 0 : i32
    %c0_i32_1 = arith.constant 0 : i32
    %c0_i32_2 = arith.constant 0 : i32
    return %c0_i32, %c0_i32_0, %c0_i32_1 : i32, i32, i32
  }
  func.func @transform_1(%arg0: i32) -> (i32, i32) {
    %c0_i32 = arith.constant 0 : i32
    %c0_i32_0 = arith.constant 0 : i32
    %c0_i32_1 = arith.constant 0 : i32
    return %c0_i32, %c0_i32_0 : i32, i32
  }
  func.func @transform_2(%arg0: i32) -> (i32, i32, i32) {
    %c0_i32 = arith.constant 0 : i32
    %c0_i32_0 = arith.constant 0 : i32
    %c0_i32_1 = arith.constant 0 : i32
    return %arg0, %c0_i32, %c0_i32_0 : i32, i32, i32
  }
  func.func @transform_3(%arg0: i32) -> (i32, i32, i32) {
    %c0_i32 = arith.constant 0 : i32
    %c0_i32_0 = arith.constant 0 : i32
    %c0_i32_1 = arith.constant 0 : i32
    return %arg0, %c0_i32, %c0_i32_0 : i32, i32, i32
  }
}

module attributes {stable_mosaic.version = 11 : i64} {
  func.func @_taps_conv_kernel(%arg0: i32, %arg1: memref<7x4x32xbf16, #tpu.memory_space<vmem>>, %arg2: memref<4x1xf32, #tpu.memory_space<vmem>>, %arg3: memref<1x32x22xbf16, #tpu.memory_space<vmem>>, %arg4: memref<1x4x16xf32, #tpu.memory_space<vmem>>) attributes {dimension_semantics = [#tpu.dimension_semantics<parallel>], iteration_bounds = array<i64: 2>, scalar_prefetch = 0 : i64, scratch_operands = 0 : i64, tpu.core_type = #tpu.core_type<tc>, window_params = [{pipeline_mode = #tpu.pipeline_mode<synchronous>, transform_indices = @transform_0, window_bounds = array<i64: 7, 4, 32>}, {pipeline_mode = #tpu.pipeline_mode<synchronous>, transform_indices = @transform_1, window_bounds = array<i64: 4, 1>}, {transform_indices = @transform_2, window_bounds = array<i64: 1, 32, 22>}, {transform_indices = @transform_3, window_bounds = array<i64: 1, 4, 16>}]} {
    %cst = arith.constant 0.000000e+00 : f32
    %0 = vector.broadcast %cst : f32 to vector<4x16xf32>
    %c0 = arith.constant 0 : index
    %c0_0 = arith.constant 0 : index
    %c0_1 = arith.constant 0 : index
    %1 = vector.load %arg1[%c0, %c0_0, %c0_1] : memref<7x4x32xbf16, #tpu.memory_space<vmem>>, vector<1x4x32xbf16>
    %2 = vector.shape_cast %1 : vector<1x4x32xbf16> to vector<4x32xbf16>
    %3 = arith.extf %2 : vector<4x32xbf16> to vector<4x32xf32>
    %c0_2 = arith.constant 0 : index
    %c0_3 = arith.constant 0 : index
    %c0_4 = arith.constant 0 : index
    %4 = vector.load %arg3[%c0_2, %c0_3, %c0_4] : memref<1x32x22xbf16, #tpu.memory_space<vmem>>, vector<1x32x16xbf16>
    %5 = vector.shape_cast %4 : vector<1x32x16xbf16> to vector<32x16xbf16>
    %6 = arith.extf %5 : vector<32x16xbf16> to vector<32x16xf32>
    %cst_5 = arith.constant dense<0.000000e+00> : vector<4x16xf32>
    %7 = tpu.matmul %3, %6, %cst_5 {dimension_numbers = #tpu.dot_dimension_numbers<[1], [0], [0], [1], [0, 0, 1, 1], [], []>} : vector<4x32xf32>, vector<32x16xf32>, vector<4x16xf32> -> vector<4x16xf32>
    %8 = arith.addf %0, %7 : vector<4x16xf32>
    %c1 = arith.constant 1 : index
    %c0_6 = arith.constant 0 : index
    %c0_7 = arith.constant 0 : index
    %9 = vector.load %arg1[%c1, %c0_6, %c0_7] : memref<7x4x32xbf16, #tpu.memory_space<vmem>>, vector<1x4x32xbf16>
    %10 = vector.shape_cast %9 : vector<1x4x32xbf16> to vector<4x32xbf16>
    %11 = arith.extf %10 : vector<4x32xbf16> to vector<4x32xf32>
    %c0_8 = arith.constant 0 : index
    %c0_9 = arith.constant 0 : index
    %c1_10 = arith.constant 1 : index
    %12 = vector.load %arg3[%c0_8, %c0_9, %c1_10] : memref<1x32x22xbf16, #tpu.memory_space<vmem>>, vector<1x32x16xbf16>
    %13 = vector.shape_cast %12 : vector<1x32x16xbf16> to vector<32x16xbf16>
    %14 = arith.extf %13 : vector<32x16xbf16> to vector<32x16xf32>
    %cst_11 = arith.constant dense<0.000000e+00> : vector<4x16xf32>
    %15 = tpu.matmul %11, %14, %cst_11 {dimension_numbers = #tpu.dot_dimension_numbers<[1], [0], [0], [1], [0, 0, 1, 1], [], []>} : vector<4x32xf32>, vector<32x16xf32>, vector<4x16xf32> -> vector<4x16xf32>
    %16 = arith.addf %8, %15 : vector<4x16xf32>
    %c2 = arith.constant 2 : index
    %c0_12 = arith.constant 0 : index
    %c0_13 = arith.constant 0 : index
    %17 = vector.load %arg1[%c2, %c0_12, %c0_13] : memref<7x4x32xbf16, #tpu.memory_space<vmem>>, vector<1x4x32xbf16>
    %18 = vector.shape_cast %17 : vector<1x4x32xbf16> to vector<4x32xbf16>
    %19 = arith.extf %18 : vector<4x32xbf16> to vector<4x32xf32>
    %c0_14 = arith.constant 0 : index
    %c0_15 = arith.constant 0 : index
    %c2_16 = arith.constant 2 : index
    %20 = vector.load %arg3[%c0_14, %c0_15, %c2_16] : memref<1x32x22xbf16, #tpu.memory_space<vmem>>, vector<1x32x16xbf16>
    %21 = vector.shape_cast %20 : vector<1x32x16xbf16> to vector<32x16xbf16>
    %22 = arith.extf %21 : vector<32x16xbf16> to vector<32x16xf32>
    %cst_17 = arith.constant dense<0.000000e+00> : vector<4x16xf32>
    %23 = tpu.matmul %19, %22, %cst_17 {dimension_numbers = #tpu.dot_dimension_numbers<[1], [0], [0], [1], [0, 0, 1, 1], [], []>} : vector<4x32xf32>, vector<32x16xf32>, vector<4x16xf32> -> vector<4x16xf32>
    %24 = arith.addf %16, %23 : vector<4x16xf32>
    %c3 = arith.constant 3 : index
    %c0_18 = arith.constant 0 : index
    %c0_19 = arith.constant 0 : index
    %25 = vector.load %arg1[%c3, %c0_18, %c0_19] : memref<7x4x32xbf16, #tpu.memory_space<vmem>>, vector<1x4x32xbf16>
    %26 = vector.shape_cast %25 : vector<1x4x32xbf16> to vector<4x32xbf16>
    %27 = arith.extf %26 : vector<4x32xbf16> to vector<4x32xf32>
    %c0_20 = arith.constant 0 : index
    %c0_21 = arith.constant 0 : index
    %c3_22 = arith.constant 3 : index
    %28 = vector.load %arg3[%c0_20, %c0_21, %c3_22] : memref<1x32x22xbf16, #tpu.memory_space<vmem>>, vector<1x32x16xbf16>
    %29 = vector.shape_cast %28 : vector<1x32x16xbf16> to vector<32x16xbf16>
    %30 = arith.extf %29 : vector<32x16xbf16> to vector<32x16xf32>
    %cst_23 = arith.constant dense<0.000000e+00> : vector<4x16xf32>
    %31 = tpu.matmul %27, %30, %cst_23 {dimension_numbers = #tpu.dot_dimension_numbers<[1], [0], [0], [1], [0, 0, 1, 1], [], []>} : vector<4x32xf32>, vector<32x16xf32>, vector<4x16xf32> -> vector<4x16xf32>
    %32 = arith.addf %24, %31 : vector<4x16xf32>
    %c4 = arith.constant 4 : index
    %c0_24 = arith.constant 0 : index
    %c0_25 = arith.constant 0 : index
    %33 = vector.load %arg1[%c4, %c0_24, %c0_25] : memref<7x4x32xbf16, #tpu.memory_space<vmem>>, vector<1x4x32xbf16>
    %34 = vector.shape_cast %33 : vector<1x4x32xbf16> to vector<4x32xbf16>
    %35 = arith.extf %34 : vector<4x32xbf16> to vector<4x32xf32>
    %c0_26 = arith.constant 0 : index
    %c0_27 = arith.constant 0 : index
    %c4_28 = arith.constant 4 : index
    %36 = vector.load %arg3[%c0_26, %c0_27, %c4_28] : memref<1x32x22xbf16, #tpu.memory_space<vmem>>, vector<1x32x16xbf16>
    %37 = vector.shape_cast %36 : vector<1x32x16xbf16> to vector<32x16xbf16>
    %38 = arith.extf %37 : vector<32x16xbf16> to vector<32x16xf32>
    %cst_29 = arith.constant dense<0.000000e+00> : vector<4x16xf32>
    %39 = tpu.matmul %35, %38, %cst_29 {dimension_numbers = #tpu.dot_dimension_numbers<[1], [0], [0], [1], [0, 0, 1, 1], [], []>} : vector<4x32xf32>, vector<32x16xf32>, vector<4x16xf32> -> vector<4x16xf32>
    %40 = arith.addf %32, %39 : vector<4x16xf32>
    %c5 = arith.constant 5 : index
    %c0_30 = arith.constant 0 : index
    %c0_31 = arith.constant 0 : index
    %41 = vector.load %arg1[%c5, %c0_30, %c0_31] : memref<7x4x32xbf16, #tpu.memory_space<vmem>>, vector<1x4x32xbf16>
    %42 = vector.shape_cast %41 : vector<1x4x32xbf16> to vector<4x32xbf16>
    %43 = arith.extf %42 : vector<4x32xbf16> to vector<4x32xf32>
    %c0_32 = arith.constant 0 : index
    %c0_33 = arith.constant 0 : index
    %c5_34 = arith.constant 5 : index
    %44 = vector.load %arg3[%c0_32, %c0_33, %c5_34] : memref<1x32x22xbf16, #tpu.memory_space<vmem>>, vector<1x32x16xbf16>
    %45 = vector.shape_cast %44 : vector<1x32x16xbf16> to vector<32x16xbf16>
    %46 = arith.extf %45 : vector<32x16xbf16> to vector<32x16xf32>
    %cst_35 = arith.constant dense<0.000000e+00> : vector<4x16xf32>
    %47 = tpu.matmul %43, %46, %cst_35 {dimension_numbers = #tpu.dot_dimension_numbers<[1], [0], [0], [1], [0, 0, 1, 1], [], []>} : vector<4x32xf32>, vector<32x16xf32>, vector<4x16xf32> -> vector<4x16xf32>
    %48 = arith.addf %40, %47 : vector<4x16xf32>
    %c6 = arith.constant 6 : index
    %c0_36 = arith.constant 0 : index
    %c0_37 = arith.constant 0 : index
    %49 = vector.load %arg1[%c6, %c0_36, %c0_37] : memref<7x4x32xbf16, #tpu.memory_space<vmem>>, vector<1x4x32xbf16>
    %50 = vector.shape_cast %49 : vector<1x4x32xbf16> to vector<4x32xbf16>
    %51 = arith.extf %50 : vector<4x32xbf16> to vector<4x32xf32>
    %c0_38 = arith.constant 0 : index
    %c0_39 = arith.constant 0 : index
    %c6_40 = arith.constant 6 : index
    %52 = vector.load %arg3[%c0_38, %c0_39, %c6_40] : memref<1x32x22xbf16, #tpu.memory_space<vmem>>, vector<1x32x16xbf16>
    %53 = vector.shape_cast %52 : vector<1x32x16xbf16> to vector<32x16xbf16>
    %54 = arith.extf %53 : vector<32x16xbf16> to vector<32x16xf32>
    %cst_41 = arith.constant dense<0.000000e+00> : vector<4x16xf32>
    %55 = tpu.matmul %51, %54, %cst_41 {dimension_numbers = #tpu.dot_dimension_numbers<[1], [0], [0], [1], [0, 0, 1, 1], [], []>} : vector<4x32xf32>, vector<32x16xf32>, vector<4x16xf32> -> vector<4x16xf32>
    %56 = arith.addf %48, %55 : vector<4x16xf32>
    %c0_42 = arith.constant 0 : index
    %c0_43 = arith.constant 0 : index
    %57 = vector.load %arg2[%c0_42, %c0_43] : memref<4x1xf32, #tpu.memory_space<vmem>>, vector<4x1xf32>
    %58 = vector.broadcast %57 : vector<4x1xf32> to vector<4x16xf32>
    %59 = arith.addf %56, %58 : vector<4x16xf32>
    %c0_44 = arith.constant 0 : index
    %c0_45 = arith.constant 0 : index
    %c0_46 = arith.constant 0 : index
    %60 = vector.load %arg4[%c0_44, %c0_45, %c0_46] : memref<1x4x16xf32, #tpu.memory_space<vmem>>, vector<1x4x16xf32>
    %61 = vector.shape_cast %60 : vector<1x4x16xf32> to vector<4x16xf32>
    %62 = vector.shape_cast %59 : vector<4x16xf32> to vector<1x4x16xf32>
    tpu.vector_store %arg4[%c0_44, %c0_45, %c0_46], %62 {strides = array<i32>} : memref<1x4x16xf32, #tpu.memory_space<vmem>>, vector<1x4x16xf32>,
    return
  }
  func.func @transform_0(%arg0: i32) -> (i32, i32, i32) {
    %c0_i32 = arith.constant 0 : i32
    %c0_i32_0 = arith.constant 0 : i32
    %c0_i32_1 = arith.constant 0 : i32
    %c0_i32_2 = arith.constant 0 : i32
    return %c0_i32, %c0_i32_0, %c0_i32_1 : i32, i32, i32
  }
  func.func @transform_1(%arg0: i32) -> (i32, i32) {
    %c0_i32 = arith.constant 0 : i32
    %c0_i32_0 = arith.constant 0 : i32
    %c0_i32_1 = arith.constant 0 : i32
    return %c0_i32, %c0_i32_0 : i32, i32
  }
  func.func @transform_2(%arg0: i32) -> (i32, i32, i32) {
    %c0_i32 = arith.constant 0 : i32
    %c0_i32_0 = arith.constant 0 : i32
    %c0_i32_1 = arith.constant 0 : i32
    return %arg0, %c0_i32, %c0_i32_0 : i32, i32, i32
  }
  func.func @transform_3(%arg0: i32) -> (i32, i32, i32) {
    %c0_i32 = arith.constant 0 : i32
    %c0_i32_0 = arith.constant 0 : i32
    %c0_i32_1 = arith.constant 0 : i32
    return %arg0, %c0_i32, %c0_i32_0 : i32, i32, i32
  }
}

</mosaic_0001>

<llo_original>
// kernel: autoencoder_forward.7
$region0: #{autoencoder_forward.7}
  #allocation0 [shape = 'u32[]', space=smem, size = 0x4, offset = 0x4, fixed_abs, tag = 'smem constant byte address 0x4 - core index']
  #allocation1 [shape = 'u32[144,128]{1,0:T(1,128)}', space=vmem, size = 0x12000, scoped, tag = 'internal scratch']
  %s0 = inlined_call_operand.vmem [shape: bf16[4,32,16], index: 0, kind: input, shape index: {}]
  %s1 = inlined_call_operand.vmem [shape: f32[32,1], index: 1, kind: input, shape index: {}]
  %s2 = inlined_call_operand.vmem [shape: bf16[2,16,7], index: 2, kind: input, shape index: {}]
  %s3 = inlined_call_operand.vmem [shape: bf16[2,32,4], index: 3, kind: output, shape index: {}]
  %s4 = sld [smem:[#allocation0]]
  $region45: #{autoencoder_forward.7} parent=0
    _
  %s6 = ssub.s32 1, %s4
  %s7 = scalar_select 0, %s6, %s4
  loop: start=0, step=1, limit=4
  $region2: #{autoencoder_forward.7} parent=0 // loop_pre_header
    _
  $region3: #{autoencoder_forward.7} parent=0 // loop_header
    %s9 = sphi 0, %s13
    %p10 = scmp.ge.s32.totalorder %s9, 4
    %s17 = sphi 0, %s17
    %s19 = sphi 0, %s17
    %s20 = sphi 0, %s19
    %s34 = sphi 0, %s20
    %s38 = sphi 0, %s38
    %s40 = sphi 0, %s38
    %s41 = sphi 0, %s40
    %s55 = sphi 0, %s41
    %s61 = sphi 0, %s63
    %s64 = sphi 0, %s61
    %s65 = sphi 0, %s64
    %s81 = sphi 0, %s65
    %s87 = sphi 0, %s89
    %s90 = sphi 0, %s87
    %s91 = sphi 0, %s90
    %s107 = sphi 0, %s91
  $region4: #{autoencoder_forward.7} parent=0 // loop_header_branch
    %12 = sbr.rel (%p10) target = $region8
  $region5: #{autoencoder_forward.7} parent=0 // loop_body
    %s14 = ssub.s32 %s9, 1
    %s15 = ssub.s32 %s9, 2
    %s16 = sadd.s32 %s9, 1
    %s18 = sadd.s32 %s17, 1
    %p21 = scmp.eq.s32.totalorder %s9, 1
    %p22 = scmp.ne.s32.totalorder %s17, %s19
    %p23 = scmp.eq.s32.totalorder %s9, 0
    %p24 = por %p22, %p23
    %p25 = scmp.ne.s32.totalorder %s17, %s19
    %p26 = scmp.eq.s32.totalorder %s14, 1
    %p27 = por %p25, %p26
    %p28 = scmp.ne.s32.totalorder %s19, %s20
    %p29 = scmp.eq.s32.totalorder %s14, 0
    %p30 = por %p28, %p29
    %p31 = scmp.ne.s32.totalorder %s19, %s20
    %p32 = scmp.eq.s32.totalorder %s15, 1
    %p33 = por %p31, %p32
    %p35 = scmp.ne.s32.totalorder %s20, %s34
    %p36 = scmp.eq.s32.totalorder %s15, 0
    %p37 = por %p35, %p36
    %s39 = sadd.s32 %s38, 1
    %p42 = scmp.eq.s32.totalorder %s9, 1
    %p43 = scmp.ne.s32.totalorder %s38, %s40
    %p44 = scmp.eq.s32.totalorder %s9, 0
    %p45 = por %p43, %p44
    %p46 = scmp.ne.s32.totalorder %s38, %s40
    %p47 = scmp.eq.s32.totalorder %s14, 1
    %p48 = por %p46, %p47
    %p49 = scmp.ne.s32.totalorder %s40, %s41
    %p50 = scmp.eq.s32.totalorder %s14, 0
    %p51 = por %p49, %p50
    %p52 = scmp.ne.s32.totalorder %s40, %s41
    %p53 = scmp.eq.s32.totalorder %s15, 1
    %p54 = por %p52, %p53
    %p56 = scmp.ne.s32.totalorder %s41, %s55
    %p57 = scmp.eq.s32.totalorder %s15, 0
    %p58 = por %p56, %p57
    %s59 = ssub.s32 %s9, %s16
    %p60 = scmp.eq.s32.totalorder %s59, 0
    %s62 = sadd.s32 %s61, 1
    %s63 = scalar_select %p60, %s61, %s62
    %p66 = pneg %p60
    %p67 = scmp.eq.s32.totalorder %s9, 1
    %p68 = por %p66, %p67
    %p69 = scmp.ne.s32.totalorder %s61, %s64
    %p70 = scmp.eq.s32.totalorder %s9, 0
    %p71 = por %p69, %p70
    %p72 = scmp.ne.s32.totalorder %s61, %s64
    %p73 = scmp.eq.s32.totalorder %s14, 1
    %p74 = por %p72, %p73
    %p75 = scmp.ne.s32.totalorder %s64, %s65
    %p76 = scmp.eq.s32.totalorder %s14, 0
    %p77 = por %p75, %p76
    %p78 = scmp.ne.s32.totalorder %s64, %s65
    %p79 = scmp.eq.s32.totalorder %s15, 1
    %p80 = por %p78, %p79
    %p82 = scmp.ne.s32.totalorder %s65, %s81
    %p83 = scmp.eq.s32.totalorder %s15, 0
    %p84 = por %p82, %p83
    %s85 = ssub.s32 %s9, %s16
    %p86 = scmp.eq.s32.totalorder %s85, 0
    %s88 = sadd.s32 %s87, 1
    %s89 = scalar_select %p86, %s87, %s88
    %p92 = pneg %p86
    %p93 = scmp.eq.s32.totalorder %s9, 1
    %p94 = por %p92, %p93
    %p95 = scmp.ne.s32.totalorder %s87, %s90
    %p96 = scmp.eq.s32.totalorder %s9, 0
    %p97 = por %p95, %p96
    %p98 = scmp.ne.s32.totalorder %s87, %s90
    %p99 = scmp.eq.s32.totalorder %s14, 1
    %p100 = por %p98, %p99
    %p101 = scmp.ne.s32.totalorder %s90, %s91
    %p102 = scmp.eq.s32.totalorder %s14, 0
    %p103 = por %p101, %p102
    %p104 = scmp.ne.s32.totalorder %s90, %s91
    %p105 = scmp.eq.s32.totalorder %s15, 1
    %p106 = por %p104, %p105
    %p108 = scmp.ne.s32.totalorder %s91, %s107
    %p109 = scmp.eq.s32.totalorder %s15, 0
    %p110 = por %p108, %p109
    %p111 = scmp.le.s32.totalorder 1, %s9
    %p112 = scmp.lt.s32.totalorder %s9, 3
    %p113 = pnand %p111, %p112
    %p114 = pneg %p113
    // Predicated region
    $region9: #{autoencoder_forward.7} parent=5 // pred_check
      _
    $region10: #{autoencoder_forward.7} parent=5 // pred_check_branch
      %116 = sbr.rel (%p113) target = $region12
    $region11: #{autoencoder_forward.7} parent=5 // pred_region
      %s117 = ssub.s32 %s9, 1
      // Predicated region
      $region13: #{autoencoder_forward.7} parent=11 // pred_check
        %p118 = pneg %p30
      $region14: #{autoencoder_forward.7} parent=11 // pred_check_branch
        %120 = sbr.rel (%p118) target = $region16
      $region15: #{autoencoder_forward.7} parent=11 // pred_region
        _
      $region16: #{autoencoder_forward.7} parent=11 // pred_fallthru
        _
      // Predicated region
      $region17: #{autoencoder_forward.7} parent=11 // pred_check
        %p121 = pneg %p51
      $region18: #{autoencoder_forward.7} parent=11 // pred_check_branch
        %123 = sbr.rel (%p121) target = $region20
      $region19: #{autoencoder_forward.7} parent=11 // pred_region
        _
      $region20: #{autoencoder_forward.7} parent=11 // pred_fallthru
        _
    $region12: #{autoencoder_forward.7} parent=5 // pred_fallthru
      _
    %p124 = scmp.lt.s32.totalorder %s9, 2
    // Predicated region
    $region21: #{autoencoder_forward.7} parent=5 // pred_check
      %p125 = pneg %p124
    $region22: #{autoencoder_forward.7} parent=5 // pred_check_branch
      %127 = sbr.rel (%p125) target = $region24
    $region23: #{autoencoder_forward.7} parent=5 // pred_region
      // Predicated region
      $region25: #{autoencoder_forward.7} parent=23 // pred_check
        %p128 = pneg %p71
      $region26: #{autoencoder_forward.7} parent=23 // pred_check_branch
        %130 = sbr.rel (%p128) target = $region28
      $region27: #{autoencoder_forward.7} parent=23 // pred_region
        %p131 = scmp.lt.s32.totalorder %s9, 1
        %s132 = scalar_select %p131, %s9, 1
        %s133 = smul.addr %s132, 2
        %s134 = smul.addr %s133, 4
        %s135 = scalar_lea.vmem %s2, %s134
      $region28: #{autoencoder_forward.7} parent=23 // pred_fallthru
        _
    $region24: #{autoencoder_forward.7} parent=5 // pred_fallthru
      _
    %p136 = scmp.le.s32.totalorder 1, %s9
    %p137 = scmp.lt.s32.totalorder %s9, 3
    %p138 = pnand %p136, %p137
    %p139 = pneg %p138
    // Predicated region
    $region29: #{autoencoder_forward.7} parent=5 // pred_check
      _
    $region30: #{autoencoder_forward.7} parent=5 // pred_check_branch
      %141 = sbr.rel (%p138) target = $region32
    $region31: #{autoencoder_forward.7} parent=5 // pred_region
      %s142 = ssub.s32 %s9, 1
      %p143 = pneg %p30
      %p144 = pneg %p27
      %p145 = pneg %p51
      %p146 = pneg %p48
      %p147 = scmp.lt.s32.totalorder %s14, 1
      %s148 = scalar_select %p147, %s14, 1
      %s149 = smul.addr %s148, 2
      %s150 = smul.addr %s149, 4
      %s151 = scalar_lea.vmem %s2, %s150
      %p152 = pneg %p77
      %p153 = pneg %p74
      %p154 = pneg %p103
      %p155 = pneg %p100
      %p156 = scmp.lt.s32.totalorder %s14, 1
      %s157 = scalar_select %p156, %s14, 1
      %s158 = smul.addr %s157, 4
      %s159 = smul.addr %s158, 4
      %s160 = scalar_lea.vmem %s3, %s159
      %p161 = scmp.lt.s32.totalorder %s14, 1
      %s162 = scalar_select %p161, %s14, 1
      %s163 = smul.addr %s162, 2
      %s164 = smul.addr %s163, 4
      %s165 = scalar_lea.vmem %s2, %s164
      %p166 = scmp.lt.s32.totalorder %s14, 1
      %s167 = scalar_select %p166, %s14, 1
      %s168 = smul.addr %s167, 4
      %s169 = smul.addr %s168, 4
      %s170 = scalar_lea.vmem %s3, %s169
      %v171 = vld [vmem:[%s0] sm:$0xf]
      %v172 = vld [vmem:[%s0 + $0x4] sm:$0xf]
      %v173 = vld [vmem:[%s0 + $0x8] sm:$0xf]
      %v174 = vld [vmem:[%s0 + $0xc] sm:$0xf]
      %v175 = vunpack.c.l.bf16 %v171
      %v176 = vunpack.c.l.bf16 %v172
      %v177 = vunpack.c.l.bf16 %v173
      %v178 = vunpack.c.l.bf16 %v174
      %v179 = vld [vmem:[%s165] sm:$0xf]
      %v180 = vld [vmem:[%s165 + $0x4] sm:$0xf]
      %v181 = vunpack.c.l.bf16 %v179
      %v182 = vunpack.c.l.bf16 %v180
      %s183 = scalar_lea.vmem %s0, 16
      %v184 = vld [vmem:[%s183] sm:$0xf]
      %v185 = vld [vmem:[%s183 + $0x4] sm:$0xf]
      %v186 = vld [vmem:[%s183 + $0x8] sm:$0xf]
      %v187 = vld [vmem:[%s183 + $0xc] sm:$0xf]
      %v188 = vunpack.c.l.bf16 %v184
      %v189 = vunpack.c.l.bf16 %v185
      %v190 = vunpack.c.l.bf16 %v186
      %v191 = vunpack.c.l.bf16 %v187
      %194 = vrot.lane.b32.xlu0 %v181, 127
      %v195 = vpop.permute.xlu0 %194
      %196 = vrot.lane.b32.xlu0 %v182, 127
      %v197 = vpop.permute.xlu0 %196
      %vm200 = vcmask 130048
      %v202 = vsel %vm200, %v188, 0
      %v205 = vsel %vm200, %v189, 0
      %v208 = vsel %vm200, %v190, 0
      %v211 = vsel %vm200, %v191, 0
      %213 = vmatprep.subr.mxu0 0.0
      %214 = vmatpush1.msra.mxu0 0.0
      %215 = vmatprep.subr.mxu0 0.0
      %216 = vmatpush1.msra.mxu0 0.0
      %217 = vmatprep.subr.mxu0 0.0
      %218 = vmatpush1.msra.mxu0 0.0
      %219 = vmatprep.subr.mxu0 0.0
      %220 = vmatpush1.msra.mxu0 0.0
      %221 = vmatprep.subr.mxu0 0.0
      %222 = vmatpush1.msra.mxu0 0.0
      %223 = vmatprep.subr.mxu0 0.0
      %224 = vmatpush1.msra.mxu0 0.0
      %225 = vmatprep.subr.mxu0 0.0
      %226 = vmatpush1.msra.mxu0 0.0
      %227 = vmatprep.subr.mxu0 0.0
      %228 = vmatpush1.msra.mxu0 0.0
      %229 = vmatprep.subr.mxu0 0.0
      %230 = vmatpush1.msra.mxu0 0.0
      %231 = vmatprep.subr.mxu0 0.0
      %232 = vmatpush1.msra.mxu0 0.0
      %233 = vmatprep.subr.mxu0 0.0
      %234 = vmatpush1.msra.mxu0 0.0
      %235 = vmatprep.subr.mxu0 0.0
      %236 = vmatpush1.msra.mxu0 0.0
      %237 = vmatprep.subr.mxu0 0.0
      %238 = vmatpush1.msra.mxu0 0.0
      %239 = vmatprep.subr.mxu0 0.0
      %240 = vmatpush1.msra.mxu0 0.0
      %241 = vmatprep.subr.mxu0 0.0
      %242 = vmatpush1.msra.mxu0 %v197
      %243 = vmatprep.subr.mxu0 0.0
      %244 = vmatpush1.msra.mxu0 %v195
      %245 = vmatprep.subr.mxu0 0.0
      %246 = vmatpush2.msra.mxu0 0.0
      %247 = vmatprep.subr.mxu0 0.0
      %248 = vmatpush2.msra.mxu0 0.0
      %249 = vmatprep.subr.mxu0 0.0
      %250 = vmatpush2.msra.mxu0 0.0
      %251 = vmatprep.subr.mxu0 0.0
      %252 = vmatpush2.msra.mxu0 0.0
      %253 = vmatprep.subr.mxu0 0.0
      %254 = vmatpush2.msra.mxu0 0.0
      %255 = vmatprep.subr.mxu0 0.0
      %256 = vmatpush2.msra.mxu0 0.0
      %257 = vmatprep.subr.mxu0 0.0
      %258 = vmatpush2.msra.mxu0 0.0
      %259 = vmatprep.subr.mxu0 0.0
      %260 = vmatpush2.msra.mxu0 0.0
      %261 = vmatprep.subr.mxu0 0.0
      %262 = vmatpush2.msra.mxu0 0.0
      %263 = vmatprep.subr.mxu0 0.0
      %264 = vmatpush2.msra.mxu0 0.0
      %265 = vmatprep.subr.mxu0 0.0
      %266 = vmatpush2.msra.mxu0 0.0
      %267 = vmatprep.subr.mxu0 0.0
      %268 = vmatpush2.msra.mxu0 0.0
      %269 = vmatprep.subr.mxu0 0.0
      %270 = vmatpush2.msra.mxu0 0.0
      %271 = vmatprep.subr.mxu0 0.0
      %272 = vmatpush2.msra.mxu0 0.0
      %273 = vmatprep.subr.mxu0 0.0
      %274 = vmatpush2.msra.mxu0 0.0
      %275 = vmatprep.subr.mxu0 0.0
      %276 = vmatpush2.msra.mxu0 0.0
      %277 = vmatprep.mubr.f32.mxu0 0.0
      %278 = vmatmul.mubr.f32.gmra.mxu0 %v202
      %v279 = vpop.f32.mrf.mxu0
      %v280 = vadd.f32 0.0, %v279
      %v281 = vpop.f32.mrf.mxu0
      %282 = vmatprep.mubr.f32.mxu0 0.0
      %283 = vmatmul.mubr.f32.gmra.mxu0 %v205
      %v284 = vpop.f32.mrf.mxu0
      %v285 = vadd.f32 0.0, %v284
      %v286 = vpop.f32.mrf.mxu0
      %287 = vmatprep.mubr.f32.mxu0 0.0
      %288 = vmatmul.mubr.f32.gmra.mxu0 %v208
      %v289 = vpop.f32.mrf.mxu0
      %v290 = vadd.f32 0.0, %v289
      %v291 = vpop.f32.mrf.mxu0
      %292 = vmatprep.mubr.f32.mxu0 0.0
      %293 = vmatmul.mubr.f32.gmra.mxu0 %v211
      %v294 = vpop.f32.mrf.mxu0
      %v295 = vadd.f32 0.0, %v294
      %v296 = vpop.f32.mrf.mxu0
      %297 = vdwg.mxu0
      %v299 = vsel %vm200, %v175, 0
      %v302 = vsel %vm200, %v176, 0
      %v305 = vsel %vm200, %v177, 0
      %v308 = vsel %vm200, %v178, 0
      %310 = vmatprep.subr.mxu0 0.0
      %311 = vmatpush1.msra.mxu0 0.0
      %312 = vmatprep.subr.mxu0 0.0
      %313 = vmatpush1.msra.mxu0 0.0
      %314 = vmatprep.subr.mxu0 0.0
      %315 = vmatpush1.msra.mxu0 0.0
      %316 = vmatprep.subr.mxu0 0.0
      %317 = vmatpush1.msra.mxu0 0.0
      %318 = vmatprep.subr.mxu0 0.0
      %319 = vmatpush1.msra.mxu0 0.0
      %320 = vmatprep.subr.mxu0 0.0
      %321 = vmatpush1.msra.mxu0 0.0
      %322 = vmatprep.subr.mxu0 0.0
      %323 = vmatpush1.msra.mxu0 0.0
      %324 = vmatprep.subr.mxu0 0.0
      %325 = vmatpush1.msra.mxu0 0.0
      %326 = vmatprep.subr.mxu0 0.0
      %327 = vmatpush1.msra.mxu0 0.0
      %328 = vmatprep.subr.mxu0 0.0
      %329 = vmatpush1.msra.mxu0 0.0
      %330 = vmatprep.subr.mxu0 0.0
      %331 = vmatpush1.msra.mxu0 0.0
      %332 = vmatprep.subr.mxu0 0.0
      %333 = vmatpush1.msra.mxu0 0.0
      %334 = vmatprep.subr.mxu0 0.0
      %335 = vmatpush1.msra.mxu0 0.0
      %336 = vmatprep.subr.mxu0 0.0
      %337 = vmatpush1.msra.mxu0 0.0
      %338 = vmatprep.subr.mxu0 0.0
      %339 = vmatpush1.msra.mxu0 %v182
      %340 = vmatprep.subr.mxu0 0.0
      %341 = vmatpush1.msra.mxu0 %v181
      %342 = vmatprep.subr.mxu0 0.0
      %343 = vmatpush2.msra.mxu0 0.0
      %344 = vmatprep.subr.mxu0 0.0
      %345 = vmatpush2.msra.mxu0 0.0
      %346 = vmatprep.subr.mxu0 0.0
      %347 = vmatpush2.msra.mxu0 0.0
      %348 = vmatprep.subr.mxu0 0.0
      %349 = vmatpush2.msra.mxu0 0.0
      %350 = vmatprep.subr.mxu0 0.0
      %351 = vmatpush2.msra.mxu0 0.0
      %352 = vmatprep.subr.mxu0 0.0
      %353 = vmatpush2.msra.mxu0 0.0
      %354 = vmatprep.subr.mxu0 0.0
      %355 = vmatpush2.msra.mxu0 0.0
      %356 = vmatprep.subr.mxu0 0.0
      %357 = vmatpush2.msra.mxu0 0.0
      %358 = vmatprep.subr.mxu0 0.0
      %359 = vmatpush2.msra.mxu0 0.0
      %360 = vmatprep.subr.mxu0 0.0
      %361 = vmatpush2.msra.mxu0 0.0
      %362 = vmatprep.subr.mxu0 0.0
      %363 = vmatpush2.msra.mxu0 0.0
      %364 = vmatprep.subr.mxu0 0.0
      %365 = vmatpush2.msra.mxu0 0.0
      %366 = vmatprep.subr.mxu0 0.0
      %367 = vmatpush2.msra.mxu0 0.0
      %368 = vmatprep.subr.mxu0 0.0
      %369 = vmatpush2.msra.mxu0 0.0
      %370 = vmatprep.subr.mxu0 0.0
      %371 = vmatpush2.msra.mxu0 0.0
      %372 = vmatprep.subr.mxu0 0.0
      %373 = vmatpush2.msra.mxu0 0.0
      %374 = vmatprep.mubr.f32.mxu0 0.0
      %375 = vmatmul.mubr.f32.gmra.mxu0 %v299
      %v376 = vpop.f32.mrf.mxu0
      %v377 = vadd.f32 %v280, %v376
      %v378 = vpop.f32.mrf.mxu0
      %379 = vmatprep.mubr.f32.mxu0 0.0
      %380 = vmatmul.mubr.f32.gmra.mxu0 %v302
      %v381 = vpop.f32.mrf.mxu0
      %v382 = vadd.f32 %v285, %v381
      %v383 = vpop.f32.mrf.mxu0
      %384 = vmatprep.mubr.f32.mxu0 0.0
      %385 = vmatmul.mubr.f32.gmra.mxu0 %v305
      %v386 = vpop.f32.mrf.mxu0
      %v387 = vadd.f32 %v290, %v386
      %v388 = vpop.f32.mrf.mxu0
      %389 = vmatprep.mubr.f32.mxu0 0.0
      %390 = vmatmul.mubr.f32.gmra.mxu0 %v308
      %v391 = vpop.f32.mrf.mxu0
      %v392 = vadd.f32 %v295, %v391
      %v393 = vpop.f32.mrf.mxu0
      %394 = vdwg.mxu0
      %s395 = scalar_lea.vmem %s0, 32
      %v396 = vld [vmem:[%s395] sm:$0xf]
      %v397 = vld [vmem:[%s395 + $0x4] sm:$0xf]
      %v398 = vld [vmem:[%s395 + $0x8] sm:$0xf]
      %v399 = vld [vmem:[%s395 + $0xc] sm:$0xf]
      %v400 = vunpack.c.l.bf16 %v396
      %v401 = vunpack.c.l.bf16 %v397
      %v402 = vunpack.c.l.bf16 %v398
      %v403 = vunpack.c.l.bf16 %v399
      %404 = vrot.lane.b32.xlu0 %v181, 126
      %v405 = vpop.permute.xlu0 %404
      %406 = vrot.lane.b32.xlu0 %v182, 126
      %v407 = vpop.permute.xlu0 %406
      %v411 = vsel %vm200, %v400, 0
      %v414 = vsel %vm200, %v401, 0
      %v417 = vsel %vm200, %v402, 0
      %v420 = vsel %vm200, %v403, 0
      %422 = vmatprep.subr.mxu0 0.0
      %423 = vmatpush1.msra.mxu0 0.0
      %424 = vmatprep.subr.mxu0 0.0
      %425 = vmatpush1.msra.mxu0 0.0
      %426 = vmatprep.subr.mxu0 0.0
      %427 = vmatpush1.msra.mxu0 0.0
      %428 = vmatprep.subr.mxu0 0.0
      %429 = vmatpush1.msra.mxu0 0.0
      %430 = vmatprep.subr.mxu0 0.0
      %431 = vmatpush1.msra.mxu0 0.0
      %432 = vmatprep.subr.mxu0 0.0
      %433 = vmatpush1.msra.mxu0 0.0
      %434 = vmatprep.subr.mxu0 0.0
      %435 = vmatpush1.msra.mxu0 0.0
      %436 = vmatprep.subr.mxu0 0.0
      %437 = vmatpush1.msra.mxu0 0.0
      %438 = vmatprep.subr.mxu0 0.0
      %439 = vmatpush1.msra.mxu0 0.0
      %440 = vmatprep.subr.mxu0 0.0
      %441 = vmatpush1.msra.mxu0 0.0
      %442 = vmatprep.subr.mxu0 0.0
      %443 = vmatpush1.msra.mxu0 0.0
      %444 = vmatprep.subr.mxu0 0.0
      %445 = vmatpush1.msra.mxu0 0.0
      %446 = vmatprep.subr.mxu0 0.0
      %447 = vmatpush1.msra.mxu0 0.0
      %448 = vmatprep.subr.mxu0 0.0
      %449 = vmatpush1.msra.mxu0 0.0
      %450 = vmatprep.subr.mxu0 0.0
      %451 = vmatpush1.msra.mxu0 %v407
      %452 = vmatprep.subr.mxu0 0.0
      %453 = vmatpush1.msra.mxu0 %v405
      %454 = vmatprep.subr.mxu0 0.0
      %455 = vmatpush2.msra.mxu0 0.0
      %456 = vmatprep.subr.mxu0 0.0
      %457 = vmatpush2.msra.mxu0 0.0
      %458 = vmatprep.subr.mxu0 0.0
      %459 = vmatpush2.msra.mxu0 0.0
      %460 = vmatprep.subr.mxu0 0.0
      %461 = vmatpush2.msra.mxu0 0.0
      %462 = vmatprep.subr.mxu0 0.0
      %463 = vmatpush2.msra.mxu0 0.0
      %464 = vmatprep.subr.mxu0 0.0
      %465 = vmatpush2.msra.mxu0 0.0
      %466 = vmatprep.subr.mxu0 0.0
      %467 = vmatpush2.msra.mxu0 0.0
      %468 = vmatprep.subr.mxu0 0.0
      %469 = vmatpush2.msra.mxu0 0.0
      %470 = vmatprep.subr.mxu0 0.0
      %471 = vmatpush2.msra.mxu0 0.0
      %472 = vmatprep.subr.mxu0 0.0
      %473 = vmatpush2.msra.mxu0 0.0
      %474 = vmatprep.subr.mxu0 0.0
      %475 = vmatpush2.msra.mxu0 0.0
      %476 = vmatprep.subr.mxu0 0.0
      %477 = vmatpush2.msra.mxu0 0.0
      %478 = vmatprep.subr.mxu0 0.0
      %479 = vmatpush2.msra.mxu0 0.0
      %480 = vmatprep.subr.mxu0 0.0
      %481 = vmatpush2.msra.mxu0 0.0
      %482 = vmatprep.subr.mxu0 0.0
      %483 = vmatpush2.msra.mxu0 0.0
      %484 = vmatprep.subr.mxu0 0.0
      %485 = vmatpush2.msra.mxu0 0.0
      %486 = vmatprep.mubr.f32.mxu0 0.0
      %487 = vmatmul.mubr.f32.gmra.mxu0 %v411
      %v488 = vpop.f32.mrf.mxu0
      %v489 = vadd.f32 0.0, %v488
      %v490 = vpop.f32.mrf.mxu0
      %491 = vmatprep.mubr.f32.mxu0 0.0
      %492 = vmatmul.mubr.f32.gmra.mxu0 %v414
      %v493 = vpop.f32.mrf.mxu0
      %v494 = vadd.f32 0.0, %v493
      %v495 = vpop.f32.mrf.mxu0
      %496 = vmatprep.mubr.f32.mxu0 0.0
      %497 = vmatmul.mubr.f32.gmra.mxu0 %v417
      %v498 = vpop.f32.mrf.mxu0
      %v499 = vadd.f32 0.0, %v498
      %v500 = vpop.f32.mrf.mxu0
      %501 = vmatprep.mubr.f32.mxu0 0.0
      %502 = vmatmul.mubr.f32.gmra.mxu0 %v420
      %v503 = vpop.f32.mrf.mxu0
      %v504 = vadd.f32 0.0, %v503
      %v505 = vpop.f32.mrf.mxu0
      %506 = vdwg.mxu0
      %v507 = vadd.f32 %v377, %v489
      %v508 = vadd.f32 %v382, %v494
      %v509 = vadd.f32 %v387, %v499
      %v510 = vadd.f32 %v392, %v504
      %s511 = scalar_lea.vmem %s0, 48
      %v512 = vld [vmem:[%s511] sm:$0xf]
      %v513 = vld [vmem:[%s511 + $0x4] sm:$0xf]
      %v514 = vld [vmem:[%s511 + $0x8] sm:$0xf]
      %v515 = vld [vmem:[%s511 + $0xc] sm:$0xf]
      %v516 = vunpack.c.l.bf16 %v512
      %v517 = vunpack.c.l.bf16 %v513
      %v518 = vunpack.c.l.bf16 %v514
      %v519 = vunpack.c.l.bf16 %v515
      %520 = vrot.lane.b32.xlu0 %v181, 125
      %v521 = vpop.permute.xlu0 %520
      %522 = vrot.lane.b32.xlu0 %v182, 125
      %v523 = vpop.permute.xlu0 %522
      %v527 = vsel %vm200, %v516, 0
      %v530 = vsel %vm200, %v517, 0
      %v533 = vsel %vm200, %v518, 0
      %v536 = vsel %vm200, %v519, 0
      %538 = vmatprep.subr.mxu0 0.0
      %539 = vmatpush1.msra.mxu0 0.0
      %540 = vmatprep.subr.mxu0 0.0
      %541 = vmatpush1.msra.mxu0 0.0
      %542 = vmatprep.subr.mxu0 0.0
      %543 = vmatpush1.msra.mxu0 0.0
      %544 = vmatprep.subr.mxu0 0.0
      %545 = vmatpush1.msra.mxu0 0.0
      %546 = vmatprep.subr.mxu0 0.0
      %547 = vmatpush1.msra.mxu0 0.0
      %548 = vmatprep.subr.mxu0 0.0
      %549 = vmatpush1.msra.mxu0 0.0
      %550 = vmatprep.subr.mxu0 0.0
      %551 = vmatpush1.msra.mxu0 0.0
      %552 = vmatprep.subr.mxu0 0.0
      %553 = vmatpush1.msra.mxu0 0.0
      %554 = vmatprep.subr.mxu0 0.0
      %555 = vmatpush1.msra.mxu0 0.0
      %556 = vmatprep.subr.mxu0 0.0
      %557 = vmatpush1.msra.mxu0 0.0
      %558 = vmatprep.subr.mxu0 0.0
      %559 = vmatpush1.msra.mxu0 0.0
      %560 = vmatprep.subr.mxu0 0.0
      %561 = vmatpush1.msra.mxu0 0.0
      %562 = vmatprep.subr.mxu0 0.0
      %563 = vmatpush1.msra.mxu0 0.0
      %564 = vmatprep.subr.mxu0 0.0
      %565 = vmatpush1.msra.mxu0 0.0
      %566 = vmatprep.subr.mxu0 0.0
      %567 = vmatpush1.msra.mxu0 %v523
      %568 = vmatprep.subr.mxu0 0.0
      %569 = vmatpush1.msra.mxu0 %v521
      %570 = vmatprep.subr.mxu0 0.0
      %571 = vmatpush2.msra.mxu0 0.0
      %572 = vmatprep.subr.mxu0 0.0
      %573 = vmatpush2.msra.mxu0 0.0
      %574 = vmatprep.subr.mxu0 0.0
      %575 = vmatpush2.msra.mxu0 0.0
      %576 = vmatprep.subr.mxu0 0.0
      %577 = vmatpush2.msra.mxu0 0.0
      %578 = vmatprep.subr.mxu0 0.0
      %579 = vmatpush2.msra.mxu0 0.0
      %580 = vmatprep.subr.mxu0 0.0
      %581 = vmatpush2.msra.mxu0 0.0
      %582 = vmatprep.subr.mxu0 0.0
      %583 = vmatpush2.msra.mxu0 0.0
      %584 = vmatprep.subr.mxu0 0.0
      %585 = vmatpush2.msra.mxu0 0.0
      %586 = vmatprep.subr.mxu0 0.0
      %587 = vmatpush2.msra.mxu0 0.0
      %588 = vmatprep.subr.mxu0 0.0
      %589 = vmatpush2.msra.mxu0 0.0
      %590 = vmatprep.subr.mxu0 0.0
      %591 = vmatpush2.msra.mxu0 0.0
      %592 = vmatprep.subr.mxu0 0.0
      %593 = vmatpush2.msra.mxu0 0.0
      %594 = vmatprep.subr.mxu0 0.0
      %595 = vmatpush2.msra.mxu0 0.0
      %596 = vmatprep.subr.mxu0 0.0
      %597 = vmatpush2.msra.mxu0 0.0
      %598 = vmatprep.subr.mxu0 0.0
      %599 = vmatpush2.msra.mxu0 0.0
      %600 = vmatprep.subr.mxu0 0.0
      %601 = vmatpush2.msra.mxu0 0.0
      %602 = vmatprep.mubr.f32.mxu0 0.0
      %603 = vmatmul.mubr.f32.gmra.mxu0 %v527
      %v604 = vpop.f32.mrf.mxu0
      %v605 = vadd.f32 0.0, %v604
      %v606 = vpop.f32.mrf.mxu0
      %607 = vmatprep.mubr.f32.mxu0 0.0
      %608 = vmatmul.mubr.f32.gmra.mxu0 %v530
      %v609 = vpop.f32.mrf.mxu0
      %v610 = vadd.f32 0.0, %v609
      %v611 = vpop.f32.mrf.mxu0
      %612 = vmatprep.mubr.f32.mxu0 0.0
      %613 = vmatmul.mubr.f32.gmra.mxu0 %v533
      %v614 = vpop.f32.mrf.mxu0
      %v615 = vadd.f32 0.0, %v614
      %v616 = vpop.f32.mrf.mxu0
      %617 = vmatprep.mubr.f32.mxu0 0.0
      %618 = vmatmul.mubr.f32.gmra.mxu0 %v536
      %v619 = vpop.f32.mrf.mxu0
      %v620 = vadd.f32 0.0, %v619
      %v621 = vpop.f32.mrf.mxu0
      %622 = vdwg.mxu0
      %v623 = vadd.f32 %v507, %v605
      %v624 = vadd.f32 %v508, %v610
      %v625 = vadd.f32 %v509, %v615
      %v626 = vadd.f32 %v510, %v620
      %v627 = vld [vmem:[%s1] sm:$0xff]
      %v628 = vld [vmem:[%s1 + $0x8] sm:$0xff]
      %v629 = vld [vmem:[%s1 + $0x10] sm:$0xff]
      %v630 = vld [vmem:[%s1 + $0x18] sm:$0xff]
      %632 = vset.pattern.permute.xlu0 0
      %633 = vperm.xlu0 %632, %v627
      %v634 = vpop.permute.xlu0 %633
      %637 = vset.pattern.permute.xlu0 0
      %638 = vperm.xlu0 %637, %v628
      %v639 = vpop.permute.xlu0 %638
      %642 = vset.pattern.permute.xlu0 0
      %643 = vperm.xlu0 %642, %v629
      %v644 = vpop.permute.xlu0 %643
      %647 = vset.pattern.permute.xlu0 0
      %648 = vperm.xlu0 %647, %v630
      %v649 = vpop.permute.xlu0 %648
      %v651 = vadd.f32 %v623, %v634
      %v652 = vadd.f32 %v624, %v639
      %v653 = vadd.f32 %v625, %v644
      %v654 = vadd.f32 %v626, %v649
      %v655 = vmax.f32 %v651, 0.0
      %v656 = vmax.f32 %v652, 0.0
      %v657 = vmax.f32 %v653, 0.0
      %v658 = vmax.f32 %v654, 0.0
      %v659 = vpack.c.bf16 %v656, %v655
      %v660 = vpack.c.bf16 %v658, %v657
      %v663 = vunpack.c.l.b16 %v659
      %v664 = vunpack.c.h.b16 %v659
      %v665 = vunpack.c.l.b16 %v660
      %v666 = vunpack.c.h.b16 %v660
      %v667 = vpack.c.b16 %v663, %v663
      %v668 = vpack.c.b16 %v664, %v664
      %v669 = vpack.c.b16 %v665, %v665
      %v670 = vpack.c.b16 %v666, %v666
      %vm675 = vcmask 27648
      %676 = vst.msk [vmem:[%s170] sm:$0xf] %vm675, %v667
      %677 = vst.msk [vmem:[%s170 + $0x4] sm:$0xf] %vm675, %v668
      %678 = vst.msk [vmem:[%s170 + $0x8] sm:$0xf] %vm675, %v669
      %679 = vst.msk [vmem:[%s170 + $0xc] sm:$0xf] %vm675, %v670
      %p680 = scmp.lt.s32.totalorder %s14, 1
      %s681 = scalar_select %p680, %s14, 1
      %s682 = smul.addr %s681, 4
      %s683 = smul.addr %s682, 4
      %s684 = scalar_lea.vmem %s3, %s683
      // Predicated region
      $region33: #{autoencoder_forward.7} parent=31 // pred_check
        %p685 = pneg %p100
      $region34: #{autoencoder_forward.7} parent=31 // pred_check_branch
        %687 = sbr.rel (%p685) target = $region36
      $region35: #{autoencoder_forward.7} parent=31 // pred_region
        _
      $region36: #{autoencoder_forward.7} parent=31 // pred_fallthru
        _
    $region32: #{autoencoder_forward.7} parent=5 // pred_fallthru
      _
    %p688 = scmp.le.s32.totalorder 2, %s9
    // Predicated region
    $region37: #{autoencoder_forward.7} parent=5 // pred_check
      %p689 = pneg %p688
    $region38: #{autoencoder_forward.7} parent=5 // pred_check_branch
      %691 = sbr.rel (%p689) target = $region40
    $region39: #{autoencoder_forward.7} parent=5 // pred_region
      %s692 = ssub.s32 %s9, 2
      // Predicated region
      $region41: #{autoencoder_forward.7} parent=39 // pred_check
        %p693 = pneg %p106
      $region42: #{autoencoder_forward.7} parent=39 // pred_check_branch
        %695 = sbr.rel (%p693) target = $region44
      $region43: #{autoencoder_forward.7} parent=39 // pred_region
        %p696 = scmp.lt.s32.totalorder %s15, 1
        %s697 = scalar_select %p696, %s15, 1
        %s698 = smul.addr %s697, 4
        %s699 = smul.addr %s698, 4
        %s700 = scalar_lea.vmem %s3, %s699
      $region44: #{autoencoder_forward.7} parent=39 // pred_fallthru
        _
    $region40: #{autoencoder_forward.7} parent=5 // pred_fallthru
      _
  $region6: #{autoencoder_forward.7} parent=0 // loop_footer
    %s13 = sadd.s32 1, %s9
  $region7: #{autoencoder_forward.7} parent=0 // loop_footer_branch
    %8 = sbr.rel target = $region3
  $region8: #{autoencoder_forward.7} parent=0 // loop_exit
    _

// kernel: autoencoder_forward.5
$region0: #{autoencoder_forward.5}
  #allocation0 [shape = 'u32[]', space=smem, size = 0x4, offset = 0x4, fixed_abs, tag = 'smem constant byte address 0x4 - core index']
  #allocation1 [shape = 'u32[144,128]{1,0:T(1,128)}', space=vmem, size = 0x12000, scoped, tag = 'internal scratch']
  %s0 = inlined_call_operand.vmem [shape: bf16[4,32,8], index: 0, kind: input, shape index: {}]
  %s1 = inlined_call_operand.vmem [shape: f32[32,1], index: 1, kind: input, shape index: {}]
  %s2 = inlined_call_operand.vmem [shape: bf16[2,8,11], index: 2, kind: input, shape index: {}]
  %s3 = inlined_call_operand.vmem [shape: bf16[2,32,8], index: 3, kind: output, shape index: {}]
  %s4 = sld [smem:[#allocation0]]
  $region45: #{autoencoder_forward.5} parent=0
    _
  %s6 = ssub.s32 1, %s4
  %s7 = scalar_select 0, %s6, %s4
  loop: start=0, step=1, limit=4
  $region2: #{autoencoder_forward.5} parent=0 // loop_pre_header
    _
  $region3: #{autoencoder_forward.5} parent=0 // loop_header
    %s9 = sphi 0, %s13
    %p10 = scmp.ge.s32.totalorder %s9, 4
    %s17 = sphi 0, %s17
    %s19 = sphi 0, %s17
    %s20 = sphi 0, %s19
    %s34 = sphi 0, %s20
    %s38 = sphi 0, %s38
    %s40 = sphi 0, %s38
    %s41 = sphi 0, %s40
    %s55 = sphi 0, %s41
    %s61 = sphi 0, %s63
    %s64 = sphi 0, %s61
    %s65 = sphi 0, %s64
    %s81 = sphi 0, %s65
    %s87 = sphi 0, %s89
    %s90 = sphi 0, %s87
    %s91 = sphi 0, %s90
    %s107 = sphi 0, %s91
  $region4: #{autoencoder_forward.5} parent=0 // loop_header_branch
    %12 = sbr.rel (%p10) target = $region8
  $region5: #{autoencoder_forward.5} parent=0 // loop_body
    %s14 = ssub.s32 %s9, 1
    %s15 = ssub.s32 %s9, 2
    %s16 = sadd.s32 %s9, 1
    %s18 = sadd.s32 %s17, 1
    %p21 = scmp.eq.s32.totalorder %s9, 1
    %p22 = scmp.ne.s32.totalorder %s17, %s19
    %p23 = scmp.eq.s32.totalorder %s9, 0
    %p24 = por %p22, %p23
    %p25 = scmp.ne.s32.totalorder %s17, %s19
    %p26 = scmp.eq.s32.totalorder %s14, 1
    %p27 = por %p25, %p26
    %p28 = scmp.ne.s32.totalorder %s19, %s20
    %p29 = scmp.eq.s32.totalorder %s14, 0
    %p30 = por %p28, %p29
    %p31 = scmp.ne.s32.totalorder %s19, %s20
    %p32 = scmp.eq.s32.totalorder %s15, 1
    %p33 = por %p31, %p32
    %p35 = scmp.ne.s32.totalorder %s20, %s34
    %p36 = scmp.eq.s32.totalorder %s15, 0
    %p37 = por %p35, %p36
    %s39 = sadd.s32 %s38, 1
    %p42 = scmp.eq.s32.totalorder %s9, 1
    %p43 = scmp.ne.s32.totalorder %s38, %s40
    %p44 = scmp.eq.s32.totalorder %s9, 0
    %p45 = por %p43, %p44
    %p46 = scmp.ne.s32.totalorder %s38, %s40
    %p47 = scmp.eq.s32.totalorder %s14, 1
    %p48 = por %p46, %p47
    %p49 = scmp.ne.s32.totalorder %s40, %s41
    %p50 = scmp.eq.s32.totalorder %s14, 0
    %p51 = por %p49, %p50
    %p52 = scmp.ne.s32.totalorder %s40, %s41
    %p53 = scmp.eq.s32.totalorder %s15, 1
    %p54 = por %p52, %p53
    %p56 = scmp.ne.s32.totalorder %s41, %s55
    %p57 = scmp.eq.s32.totalorder %s15, 0
    %p58 = por %p56, %p57
    %s59 = ssub.s32 %s9, %s16
    %p60 = scmp.eq.s32.totalorder %s59, 0
    %s62 = sadd.s32 %s61, 1
    %s63 = scalar_select %p60, %s61, %s62
    %p66 = pneg %p60
    %p67 = scmp.eq.s32.totalorder %s9, 1
    %p68 = por %p66, %p67
    %p69 = scmp.ne.s32.totalorder %s61, %s64
    %p70 = scmp.eq.s32.totalorder %s9, 0
    %p71 = por %p69, %p70
    %p72 = scmp.ne.s32.totalorder %s61, %s64
    %p73 = scmp.eq.s32.totalorder %s14, 1
    %p74 = por %p72, %p73
    %p75 = scmp.ne.s32.totalorder %s64, %s65
    %p76 = scmp.eq.s32.totalorder %s14, 0
    %p77 = por %p75, %p76
    %p78 = scmp.ne.s32.totalorder %s64, %s65
    %p79 = scmp.eq.s32.totalorder %s15, 1
    %p80 = por %p78, %p79
    %p82 = scmp.ne.s32.totalorder %s65, %s81
    %p83 = scmp.eq.s32.totalorder %s15, 0
    %p84 = por %p82, %p83
    %s85 = ssub.s32 %s9, %s16
    %p86 = scmp.eq.s32.totalorder %s85, 0
    %s88 = sadd.s32 %s87, 1
    %s89 = scalar_select %p86, %s87, %s88
    %p92 = pneg %p86
    %p93 = scmp.eq.s32.totalorder %s9, 1
    %p94 = por %p92, %p93
    %p95 = scmp.ne.s32.totalorder %s87, %s90
    %p96 = scmp.eq.s32.totalorder %s9, 0
    %p97 = por %p95, %p96
    %p98 = scmp.ne.s32.totalorder %s87, %s90
    %p99 = scmp.eq.s32.totalorder %s14, 1
    %p100 = por %p98, %p99
    %p101 = scmp.ne.s32.totalorder %s90, %s91
    %p102 = scmp.eq.s32.totalorder %s14, 0
    %p103 = por %p101, %p102
    %p104 = scmp.ne.s32.totalorder %s90, %s91
    %p105 = scmp.eq.s32.totalorder %s15, 1
    %p106 = por %p104, %p105
    %p108 = scmp.ne.s32.totalorder %s91, %s107
    %p109 = scmp.eq.s32.totalorder %s15, 0
    %p110 = por %p108, %p109
    %p111 = scmp.le.s32.totalorder 1, %s9
    %p112 = scmp.lt.s32.totalorder %s9, 3
    %p113 = pnand %p111, %p112
    %p114 = pneg %p113
    // Predicated region
    $region9: #{autoencoder_forward.5} parent=5 // pred_check
      _
    $region10: #{autoencoder_forward.5} parent=5 // pred_check_branch
      %116 = sbr.rel (%p113) target = $region12
    $region11: #{autoencoder_forward.5} parent=5 // pred_region
      %s117 = ssub.s32 %s9, 1
      // Predicated region
      $region13: #{autoencoder_forward.5} parent=11 // pred_check
        %p118 = pneg %p30
      $region14: #{autoencoder_forward.5} parent=11 // pred_check_branch
        %120 = sbr.rel (%p118) target = $region16
      $region15: #{autoencoder_forward.5} parent=11 // pred_region
        _
      $region16: #{autoencoder_forward.5} parent=11 // pred_fallthru
        _
      // Predicated region
      $region17: #{autoencoder_forward.5} parent=11 // pred_check
        %p121 = pneg %p51
      $region18: #{autoencoder_forward.5} parent=11 // pred_check_branch
        %123 = sbr.rel (%p121) target = $region20
      $region19: #{autoencoder_forward.5} parent=11 // pred_region
        _
      $region20: #{autoencoder_forward.5} parent=11 // pred_fallthru
        _
    $region12: #{autoencoder_forward.5} parent=5 // pred_fallthru
      _
    %p124 = scmp.lt.s32.totalorder %s9, 2
    // Predicated region
    $region21: #{autoencoder_forward.5} parent=5 // pred_check
      %p125 = pneg %p124
    $region22: #{autoencoder_forward.5} parent=5 // pred_check_branch
      %127 = sbr.rel (%p125) target = $region24
    $region23: #{autoencoder_forward.5} parent=5 // pred_region
      // Predicated region
      $region25: #{autoencoder_forward.5} parent=23 // pred_check
        %p128 = pneg %p71
      $region26: #{autoencoder_forward.5} parent=23 // pred_check_branch
        %130 = sbr.rel (%p128) target = $region28
      $region27: #{autoencoder_forward.5} parent=23 // pred_region
        %p131 = scmp.lt.s32.totalorder %s9, 1
        %s132 = scalar_select %p131, %s9, 1
        %s133 = smul.addr %s132, 4
        %s134 = scalar_lea.vmem %s2, %s133
      $region28: #{autoencoder_forward.5} parent=23 // pred_fallthru
        _
    $region24: #{autoencoder_forward.5} parent=5 // pred_fallthru
      _
    %p135 = scmp.le.s32.totalorder 1, %s9
    %p136 = scmp.lt.s32.totalorder %s9, 3
    %p137 = pnand %p135, %p136
    %p138 = pneg %p137
    // Predicated region
    $region29: #{autoencoder_forward.5} parent=5 // pred_check
      _
    $region30: #{autoencoder_forward.5} parent=5 // pred_check_branch
      %140 = sbr.rel (%p137) target = $region32
    $region31: #{autoencoder_forward.5} parent=5 // pred_region
      %s141 = ssub.s32 %s9, 1
      %p142 = pneg %p30
      %p143 = pneg %p27
      %p144 = pneg %p51
      %p145 = pneg %p48
      %p146 = scmp.lt.s32.totalorder %s14, 1
      %s147 = scalar_select %p146, %s14, 1
      %s148 = smul.addr %s147, 4
      %s149 = scalar_lea.vmem %s2, %s148
      %p150 = pneg %p77
      %p151 = pneg %p74
      %p152 = pneg %p103
      %p153 = pneg %p100
      %p154 = scmp.lt.s32.totalorder %s14, 1
      %s155 = scalar_select %p154, %s14, 1
      %s156 = smul.addr %s155, 4
      %s157 = smul.addr %s156, 4
      %s158 = scalar_lea.vmem %s3, %s157
      %p159 = scmp.lt.s32.totalorder %s14, 1
      %s160 = scalar_select %p159, %s14, 1
      %s161 = smul.addr %s160, 4
      %s162 = scalar_lea.vmem %s2, %s161
      %p163 = scmp.lt.s32.totalorder %s14, 1
      %s164 = scalar_select %p163, %s14, 1
      %s165 = smul.addr %s164, 4
      %s166 = smul.addr %s165, 4
      %s167 = scalar_lea.vmem %s3, %s166
      %v168 = vld [vmem:[%s0] sm:$0xf]
      %v169 = vld [vmem:[%s0 + $0x4] sm:$0xf]
      %v170 = vld [vmem:[%s0 + $0x8] sm:$0xf]
      %v171 = vld [vmem:[%s0 + $0xc] sm:$0xf]
      %v172 = vunpack.c.l.bf16 %v168
      %v173 = vunpack.c.l.bf16 %v169
      %v174 = vunpack.c.l.bf16 %v170
      %v175 = vunpack.c.l.bf16 %v171
      %v176 = vld [vmem:[%s162] sm:$0xf]
      %v177 = vunpack.c.l.bf16 %v176
      %s178 = scalar_lea.vmem %s0, 16
      %v179 = vld [vmem:[%s178] sm:$0xf]
      %v180 = vld [vmem:[%s178 + $0x4] sm:$0xf]
      %v181 = vld [vmem:[%s178 + $0x8] sm:$0xf]
      %v182 = vld [vmem:[%s178 + $0xc] sm:$0xf]
      %v183 = vunpack.c.l.bf16 %v179
      %v184 = vunpack.c.l.bf16 %v180
      %v185 = vunpack.c.l.bf16 %v181
      %v186 = vunpack.c.l.bf16 %v182
      %188 = vrot.lane.b32.xlu0 %v177, 127
      %v189 = vpop.permute.xlu0 %188
      %vm191 = vcmask 64512
      %v193 = vsel %vm191, %v183, 0
      %v196 = vsel %vm191, %v184, 0
      %v199 = vsel %vm191, %v185, 0
      %v202 = vsel %vm191, %v186, 0
      %204 = vmatprep.subr.mxu0 0.0
      %205 = vmatpush1.msra.mxu0 0.0
      %206 = vmatprep.subr.mxu0 0.0
      %207 = vmatpush1.msra.mxu0 0.0
      %208 = vmatprep.subr.mxu0 0.0
      %209 = vmatpush1.msra.mxu0 0.0
      %210 = vmatprep.subr.mxu0 0.0
      %211 = vmatpush1.msra.mxu0 0.0
      %212 = vmatprep.subr.mxu0 0.0
      %213 = vmatpush1.msra.mxu0 0.0
      %214 = vmatprep.subr.mxu0 0.0
      %215 = vmatpush1.msra.mxu0 0.0
      %216 = vmatprep.subr.mxu0 0.0
      %217 = vmatpush1.msra.mxu0 0.0
      %218 = vmatprep.subr.mxu0 0.0
      %219 = vmatpush1.msra.mxu0 0.0
      %220 = vmatprep.subr.mxu0 0.0
      %221 = vmatpush1.msra.mxu0 0.0
      %222 = vmatprep.subr.mxu0 0.0
      %223 = vmatpush1.msra.mxu0 0.0
      %224 = vmatprep.subr.mxu0 0.0
      %225 = vmatpush1.msra.mxu0 0.0
      %226 = vmatprep.subr.mxu0 0.0
      %227 = vmatpush1.msra.mxu0 0.0
      %228 = vmatprep.subr.mxu0 0.0
      %229 = vmatpush1.msra.mxu0 0.0
      %230 = vmatprep.subr.mxu0 0.0
      %231 = vmatpush1.msra.mxu0 0.0
      %232 = vmatprep.subr.mxu0 0.0
      %233 = vmatpush1.msra.mxu0 0.0
      %234 = vmatprep.subr.mxu0 0.0
      %235 = vmatpush1.msra.mxu0 %v189
      %236 = vmatprep.subr.mxu0 0.0
      %237 = vmatpush2.msra.mxu0 0.0
      %238 = vmatprep.subr.mxu0 0.0
      %239 = vmatpush2.msra.mxu0 0.0
      %240 = vmatprep.subr.mxu0 0.0
      %241 = vmatpush2.msra.mxu0 0.0
      %242 = vmatprep.subr.mxu0 0.0
      %243 = vmatpush2.msra.mxu0 0.0
      %244 = vmatprep.subr.mxu0 0.0
      %245 = vmatpush2.msra.mxu0 0.0
      %246 = vmatprep.subr.mxu0 0.0
      %247 = vmatpush2.msra.mxu0 0.0
      %248 = vmatprep.subr.mxu0 0.0
      %249 = vmatpush2.msra.mxu0 0.0
      %250 = vmatprep.subr.mxu0 0.0
      %251 = vmatpush2.msra.mxu0 0.0
      %252 = vmatprep.subr.mxu0 0.0
      %253 = vmatpush2.msra.mxu0 0.0
      %254 = vmatprep.subr.mxu0 0.0
      %255 = vmatpush2.msra.mxu0 0.0
      %256 = vmatprep.subr.mxu0 0.0
      %257 = vmatpush2.msra.mxu0 0.0
      %258 = vmatprep.subr.mxu0 0.0
      %259 = vmatpush2.msra.mxu0 0.0
      %260 = vmatprep.subr.mxu0 0.0
      %261 = vmatpush2.msra.mxu0 0.0
      %262 = vmatprep.subr.mxu0 0.0
      %263 = vmatpush2.msra.mxu0 0.0
      %264 = vmatprep.subr.mxu0 0.0
      %265 = vmatpush2.msra.mxu0 0.0
      %266 = vmatprep.subr.mxu0 0.0
      %267 = vmatpush2.msra.mxu0 0.0
      %268 = vmatprep.mubr.f32.mxu0 0.0
      %269 = vmatmul.mubr.f32.gmra.mxu0 %v193
      %v270 = vpop.f32.mrf.mxu0
      %v271 = vadd.f32 0.0, %v270
      %v272 = vpop.f32.mrf.mxu0
      %273 = vmatprep.mubr.f32.mxu0 0.0
      %274 = vmatmul.mubr.f32.gmra.mxu0 %v196
      %v275 = vpop.f32.mrf.mxu0
      %v276 = vadd.f32 0.0, %v275
      %v277 = vpop.f32.mrf.mxu0
      %278 = vmatprep.mubr.f32.mxu0 0.0
      %279 = vmatmul.mubr.f32.gmra.mxu0 %v199
      %v280 = vpop.f32.mrf.mxu0
      %v281 = vadd.f32 0.0, %v280
      %v282 = vpop.f32.mrf.mxu0
      %283 = vmatprep.mubr.f32.mxu0 0.0
      %284 = vmatmul.mubr.f32.gmra.mxu0 %v202
      %v285 = vpop.f32.mrf.mxu0
      %v286 = vadd.f32 0.0, %v285
      %v287 = vpop.f32.mrf.mxu0
      %288 = vdwg.mxu0
      %v290 = vsel %vm191, %v172, 0
      %v293 = vsel %vm191, %v173, 0
      %v296 = vsel %vm191, %v174, 0
      %v299 = vsel %vm191, %v175, 0
      %301 = vmatprep.subr.mxu0 0.0
      %302 = vmatpush1.msra.mxu0 0.0
      %303 = vmatprep.subr.mxu0 0.0
      %304 = vmatpush1.msra.mxu0 0.0
      %305 = vmatprep.subr.mxu0 0.0
      %306 = vmatpush1.msra.mxu0 0.0
      %307 = vmatprep.subr.mxu0 0.0
      %308 = vmatpush1.msra.mxu0 0.0
      %309 = vmatprep.subr.mxu0 0.0
      %310 = vmatpush1.msra.mxu0 0.0
      %311 = vmatprep.subr.mxu0 0.0
      %312 = vmatpush1.msra.mxu0 0.0
      %313 = vmatprep.subr.mxu0 0.0
      %314 = vmatpush1.msra.mxu0 0.0
      %315 = vmatprep.subr.mxu0 0.0
      %316 = vmatpush1.msra.mxu0 0.0
      %317 = vmatprep.subr.mxu0 0.0
      %318 = vmatpush1.msra.mxu0 0.0
      %319 = vmatprep.subr.mxu0 0.0
      %320 = vmatpush1.msra.mxu0 0.0
      %321 = vmatprep.subr.mxu0 0.0
      %322 = vmatpush1.msra.mxu0 0.0
      %323 = vmatprep.subr.mxu0 0.0
      %324 = vmatpush1.msra.mxu0 0.0
      %325 = vmatprep.subr.mxu0 0.0
      %326 = vmatpush1.msra.mxu0 0.0
      %327 = vmatprep.subr.mxu0 0.0
      %328 = vmatpush1.msra.mxu0 0.0
      %329 = vmatprep.subr.mxu0 0.0
      %330 = vmatpush1.msra.mxu0 0.0
      %331 = vmatprep.subr.mxu0 0.0
      %332 = vmatpush1.msra.mxu0 %v177
      %333 = vmatprep.subr.mxu0 0.0
      %334 = vmatpush2.msra.mxu0 0.0
      %335 = vmatprep.subr.mxu0 0.0
      %336 = vmatpush2.msra.mxu0 0.0
      %337 = vmatprep.subr.mxu0 0.0
      %338 = vmatpush2.msra.mxu0 0.0
      %339 = vmatprep.subr.mxu0 0.0
      %340 = vmatpush2.msra.mxu0 0.0
      %341 = vmatprep.subr.mxu0 0.0
      %342 = vmatpush2.msra.mxu0 0.0
      %343 = vmatprep.subr.mxu0 0.0
      %344 = vmatpush2.msra.mxu0 0.0
      %345 = vmatprep.subr.mxu0 0.0
      %346 = vmatpush2.msra.mxu0 0.0
      %347 = vmatprep.subr.mxu0 0.0
      %348 = vmatpush2.msra.mxu0 0.0
      %349 = vmatprep.subr.mxu0 0.0
      %350 = vmatpush2.msra.mxu0 0.0
      %351 = vmatprep.subr.mxu0 0.0
      %352 = vmatpush2.msra.mxu0 0.0
      %353 = vmatprep.subr.mxu0 0.0
      %354 = vmatpush2.msra.mxu0 0.0
      %355 = vmatprep.subr.mxu0 0.0
      %356 = vmatpush2.msra.mxu0 0.0
      %357 = vmatprep.subr.mxu0 0.0
      %358 = vmatpush2.msra.mxu0 0.0
      %359 = vmatprep.subr.mxu0 0.0
      %360 = vmatpush2.msra.mxu0 0.0
      %361 = vmatprep.subr.mxu0 0.0
      %362 = vmatpush2.msra.mxu0 0.0
      %363 = vmatprep.subr.mxu0 0.0
      %364 = vmatpush2.msra.mxu0 0.0
      %365 = vmatprep.mubr.f32.mxu0 0.0
      %366 = vmatmul.mubr.f32.gmra.mxu0 %v290
      %v367 = vpop.f32.mrf.mxu0
      %v368 = vadd.f32 %v271, %v367
      %v369 = vpop.f32.mrf.mxu0
      %370 = vmatprep.mubr.f32.mxu0 0.0
      %371 = vmatmul.mubr.f32.gmra.mxu0 %v293
      %v372 = vpop.f32.mrf.mxu0
      %v373 = vadd.f32 %v276, %v372
      %v374 = vpop.f32.mrf.mxu0
      %375 = vmatprep.mubr.f32.mxu0 0.0
      %376 = vmatmul.mubr.f32.gmra.mxu0 %v296
      %v377 = vpop.f32.mrf.mxu0
      %v378 = vadd.f32 %v281, %v377
      %v379 = vpop.f32.mrf.mxu0
      %380 = vmatprep.mubr.f32.mxu0 0.0
      %381 = vmatmul.mubr.f32.gmra.mxu0 %v299
      %v382 = vpop.f32.mrf.mxu0
      %v383 = vadd.f32 %v286, %v382
      %v384 = vpop.f32.mrf.mxu0
      %385 = vdwg.mxu0
      %s386 = scalar_lea.vmem %s0, 32
      %v387 = vld [vmem:[%s386] sm:$0xf]
      %v388 = vld [vmem:[%s386 + $0x4] sm:$0xf]
      %v389 = vld [vmem:[%s386 + $0x8] sm:$0xf]
      %v390 = vld [vmem:[%s386 + $0xc] sm:$0xf]
      %v391 = vunpack.c.l.bf16 %v387
      %v392 = vunpack.c.l.bf16 %v388
      %v393 = vunpack.c.l.bf16 %v389
      %v394 = vunpack.c.l.bf16 %v390
      %395 = vrot.lane.b32.xlu0 %v177, 126
      %v396 = vpop.permute.xlu0 %395
      %v399 = vsel %vm191, %v391, 0
      %v402 = vsel %vm191, %v392, 0
      %v405 = vsel %vm191, %v393, 0
      %v408 = vsel %vm191, %v394, 0
      %410 = vmatprep.subr.mxu0 0.0
      %411 = vmatpush1.msra.mxu0 0.0
      %412 = vmatprep.subr.mxu0 0.0
      %413 = vmatpush1.msra.mxu0 0.0
      %414 = vmatprep.subr.mxu0 0.0
      %415 = vmatpush1.msra.mxu0 0.0
      %416 = vmatprep.subr.mxu0 0.0
      %417 = vmatpush1.msra.mxu0 0.0
      %418 = vmatprep.subr.mxu0 0.0
      %419 = vmatpush1.msra.mxu0 0.0
      %420 = vmatprep.subr.mxu0 0.0
      %421 = vmatpush1.msra.mxu0 0.0
      %422 = vmatprep.subr.mxu0 0.0
      %423 = vmatpush1.msra.mxu0 0.0
      %424 = vmatprep.subr.mxu0 0.0
      %425 = vmatpush1.msra.mxu0 0.0
      %426 = vmatprep.subr.mxu0 0.0
      %427 = vmatpush1.msra.mxu0 0.0
      %428 = vmatprep.subr.mxu0 0.0
      %429 = vmatpush1.msra.mxu0 0.0
      %430 = vmatprep.subr.mxu0 0.0
      %431 = vmatpush1.msra.mxu0 0.0
      %432 = vmatprep.subr.mxu0 0.0
      %433 = vmatpush1.msra.mxu0 0.0
      %434 = vmatprep.subr.mxu0 0.0
      %435 = vmatpush1.msra.mxu0 0.0
      %436 = vmatprep.subr.mxu0 0.0
      %437 = vmatpush1.msra.mxu0 0.0
      %438 = vmatprep.subr.mxu0 0.0
      %439 = vmatpush1.msra.mxu0 0.0
      %440 = vmatprep.subr.mxu0 0.0
      %441 = vmatpush1.msra.mxu0 %v396
      %442 = vmatprep.subr.mxu0 0.0
      %443 = vmatpush2.msra.mxu0 0.0
      %444 = vmatprep.subr.mxu0 0.0
      %445 = vmatpush2.msra.mxu0 0.0
      %446 = vmatprep.subr.mxu0 0.0
      %447 = vmatpush2.msra.mxu0 0.0
      %448 = vmatprep.subr.mxu0 0.0
      %449 = vmatpush2.msra.mxu0 0.0
      %450 = vmatprep.subr.mxu0 0.0
      %451 = vmatpush2.msra.mxu0 0.0
      %452 = vmatprep.subr.mxu0 0.0
      %453 = vmatpush2.msra.mxu0 0.0
      %454 = vmatprep.subr.mxu0 0.0
      %455 = vmatpush2.msra.mxu0 0.0
      %456 = vmatprep.subr.mxu0 0.0
      %457 = vmatpush2.msra.mxu0 0.0
      %458 = vmatprep.subr.mxu0 0.0
      %459 = vmatpush2.msra.mxu0 0.0
      %460 = vmatprep.subr.mxu0 0.0
      %461 = vmatpush2.msra.mxu0 0.0
      %462 = vmatprep.subr.mxu0 0.0
      %463 = vmatpush2.msra.mxu0 0.0
      %464 = vmatprep.subr.mxu0 0.0
      %465 = vmatpush2.msra.mxu0 0.0
      %466 = vmatprep.subr.mxu0 0.0
      %467 = vmatpush2.msra.mxu0 0.0
      %468 = vmatprep.subr.mxu0 0.0
      %469 = vmatpush2.msra.mxu0 0.0
      %470 = vmatprep.subr.mxu0 0.0
      %471 = vmatpush2.msra.mxu0 0.0
      %472 = vmatprep.subr.mxu0 0.0
      %473 = vmatpush2.msra.mxu0 0.0
      %474 = vmatprep.mubr.f32.mxu0 0.0
      %475 = vmatmul.mubr.f32.gmra.mxu0 %v399
      %v476 = vpop.f32.mrf.mxu0
      %v477 = vadd.f32 0.0, %v476
      %v478 = vpop.f32.mrf.mxu0
      %479 = vmatprep.mubr.f32.mxu0 0.0
      %480 = vmatmul.mubr.f32.gmra.mxu0 %v402
      %v481 = vpop.f32.mrf.mxu0
      %v482 = vadd.f32 0.0, %v481
      %v483 = vpop.f32.mrf.mxu0
      %484 = vmatprep.mubr.f32.mxu0 0.0
      %485 = vmatmul.mubr.f32.gmra.mxu0 %v405
      %v486 = vpop.f32.mrf.mxu0
      %v487 = vadd.f32 0.0, %v486
      %v488 = vpop.f32.mrf.mxu0
      %489 = vmatprep.mubr.f32.mxu0 0.0
      %490 = vmatmul.mubr.f32.gmra.mxu0 %v408
      %v491 = vpop.f32.mrf.mxu0
      %v492 = vadd.f32 0.0, %v491
      %v493 = vpop.f32.mrf.mxu0
      %494 = vdwg.mxu0
      %v495 = vadd.f32 %v368, %v477
      %v496 = vadd.f32 %v373, %v482
      %v497 = vadd.f32 %v378, %v487
      %v498 = vadd.f32 %v383, %v492
      %s499 = scalar_lea.vmem %s0, 48
      %v500 = vld [vmem:[%s499] sm:$0xf]
      %v501 = vld [vmem:[%s499 + $0x4] sm:$0xf]
      %v502 = vld [vmem:[%s499 + $0x8] sm:$0xf]
      %v503 = vld [vmem:[%s499 + $0xc] sm:$0xf]
      %v504 = vunpack.c.l.bf16 %v500
      %v505 = vunpack.c.l.bf16 %v501
      %v506 = vunpack.c.l.bf16 %v502
      %v507 = vunpack.c.l.bf16 %v503
      %508 = vrot.lane.b32.xlu0 %v177, 125
      %v509 = vpop.permute.xlu0 %508
      %v512 = vsel %vm191, %v504, 0
      %v515 = vsel %vm191, %v505, 0
      %v518 = vsel %vm191, %v506, 0
      %v521 = vsel %vm191, %v507, 0
      %523 = vmatprep.subr.mxu0 0.0
      %524 = vmatpush1.msra.mxu0 0.0
      %525 = vmatprep.subr.mxu0 0.0
      %526 = vmatpush1.msra.mxu0 0.0
      %527 = vmatprep.subr.mxu0 0.0
      %528 = vmatpush1.msra.mxu0 0.0
      %529 = vmatprep.subr.mxu0 0.0
      %530 = vmatpush1.msra.mxu0 0.0
      %531 = vmatprep.subr.mxu0 0.0
      %532 = vmatpush1.msra.mxu0 0.0
      %533 = vmatprep.subr.mxu0 0.0
      %534 = vmatpush1.msra.mxu0 0.0
      %535 = vmatprep.subr.mxu0 0.0
      %536 = vmatpush1.msra.mxu0 0.0
      %537 = vmatprep.subr.mxu0 0.0
      %538 = vmatpush1.msra.mxu0 0.0
      %539 = vmatprep.subr.mxu0 0.0
      %540 = vmatpush1.msra.mxu0 0.0
      %541 = vmatprep.subr.mxu0 0.0
      %542 = vmatpush1.msra.mxu0 0.0
      %543 = vmatprep.subr.mxu0 0.0
      %544 = vmatpush1.msra.mxu0 0.0
      %545 = vmatprep.subr.mxu0 0.0
      %546 = vmatpush1.msra.mxu0 0.0
      %547 = vmatprep.subr.mxu0 0.0
      %548 = vmatpush1.msra.mxu0 0.0
      %549 = vmatprep.subr.mxu0 0.0
      %550 = vmatpush1.msra.mxu0 0.0
      %551 = vmatprep.subr.mxu0 0.0
      %552 = vmatpush1.msra.mxu0 0.0
      %553 = vmatprep.subr.mxu0 0.0
      %554 = vmatpush1.msra.mxu0 %v509
      %555 = vmatprep.subr.mxu0 0.0
      %556 = vmatpush2.msra.mxu0 0.0
      %557 = vmatprep.subr.mxu0 0.0
      %558 = vmatpush2.msra.mxu0 0.0
      %559 = vmatprep.subr.mxu0 0.0
      %560 = vmatpush2.msra.mxu0 0.0
      %561 = vmatprep.subr.mxu0 0.0
      %562 = vmatpush2.msra.mxu0 0.0
      %563 = vmatprep.subr.mxu0 0.0
      %564 = vmatpush2.msra.mxu0 0.0
      %565 = vmatprep.subr.mxu0 0.0
      %566 = vmatpush2.msra.mxu0 0.0
      %567 = vmatprep.subr.mxu0 0.0
      %568 = vmatpush2.msra.mxu0 0.0
      %569 = vmatprep.subr.mxu0 0.0
      %570 = vmatpush2.msra.mxu0 0.0
      %571 = vmatprep.subr.mxu0 0.0
      %572 = vmatpush2.msra.mxu0 0.0
      %573 = vmatprep.subr.mxu0 0.0
      %574 = vmatpush2.msra.mxu0 0.0
      %575 = vmatprep.subr.mxu0 0.0
      %576 = vmatpush2.msra.mxu0 0.0
      %577 = vmatprep.subr.mxu0 0.0
      %578 = vmatpush2.msra.mxu0 0.0
      %579 = vmatprep.subr.mxu0 0.0
      %580 = vmatpush2.msra.mxu0 0.0
      %581 = vmatprep.subr.mxu0 0.0
      %582 = vmatpush2.msra.mxu0 0.0
      %583 = vmatprep.subr.mxu0 0.0
      %584 = vmatpush2.msra.mxu0 0.0
      %585 = vmatprep.subr.mxu0 0.0
      %586 = vmatpush2.msra.mxu0 0.0
      %587 = vmatprep.mubr.f32.mxu0 0.0
      %588 = vmatmul.mubr.f32.gmra.mxu0 %v512
      %v589 = vpop.f32.mrf.mxu0
      %v590 = vadd.f32 0.0, %v589
      %v591 = vpop.f32.mrf.mxu0
      %592 = vmatprep.mubr.f32.mxu0 0.0
      %593 = vmatmul.mubr.f32.gmra.mxu0 %v515
      %v594 = vpop.f32.mrf.mxu0
      %v595 = vadd.f32 0.0, %v594
      %v596 = vpop.f32.mrf.mxu0
      %597 = vmatprep.mubr.f32.mxu0 0.0
      %598 = vmatmul.mubr.f32.gmra.mxu0 %v518
      %v599 = vpop.f32.mrf.mxu0
      %v600 = vadd.f32 0.0, %v599
      %v601 = vpop.f32.mrf.mxu0
      %602 = vmatprep.mubr.f32.mxu0 0.0
      %603 = vmatmul.mubr.f32.gmra.mxu0 %v521
      %v604 = vpop.f32.mrf.mxu0
      %v605 = vadd.f32 0.0, %v604
      %v606 = vpop.f32.mrf.mxu0
      %607 = vdwg.mxu0
      %v608 = vadd.f32 %v495, %v590
      %v609 = vadd.f32 %v496, %v595
      %v610 = vadd.f32 %v497, %v600
      %v611 = vadd.f32 %v498, %v605
      %v612 = vld [vmem:[%s1] sm:$0xff]
      %v613 = vld [vmem:[%s1 + $0x8] sm:$0xff]
      %v614 = vld [vmem:[%s1 + $0x10] sm:$0xff]
      %v615 = vld [vmem:[%s1 + $0x18] sm:$0xff]
      %617 = vset.pattern.permute.xlu0 0
      %618 = vperm.xlu0 %617, %v612
      %v619 = vpop.permute.xlu0 %618
      %622 = vset.pattern.permute.xlu0 0
      %623 = vperm.xlu0 %622, %v613
      %v624 = vpop.permute.xlu0 %623
      %627 = vset.pattern.permute.xlu0 0
      %628 = vperm.xlu0 %627, %v614
      %v629 = vpop.permute.xlu0 %628
      %632 = vset.pattern.permute.xlu0 0
      %633 = vperm.xlu0 %632, %v615
      %v634 = vpop.permute.xlu0 %633
      %v636 = vadd.f32 %v608, %v619
      %v637 = vadd.f32 %v609, %v624
      %v638 = vadd.f32 %v610, %v629
      %v639 = vadd.f32 %v611, %v634
      %v640 = vmax.f32 %v636, 0.0
      %v641 = vmax.f32 %v637, 0.0
      %v642 = vmax.f32 %v638, 0.0
      %v643 = vmax.f32 %v639, 0.0
      %v644 = vpack.c.bf16 %v641, %v640
      %v645 = vpack.c.bf16 %v643, %v642
      %v648 = vunpack.c.l.b16 %v644
      %v649 = vunpack.c.h.b16 %v644
      %v650 = vunpack.c.l.b16 %v645
      %v651 = vunpack.c.h.b16 %v645
      %v652 = vpack.c.b16 %v648, %v648
      %v653 = vpack.c.b16 %v649, %v649
      %v654 = vpack.c.b16 %v650, %v650
      %v655 = vpack.c.b16 %v651, %v651
      %vm660 = vcmask 60416
      %661 = vst.msk [vmem:[%s167] sm:$0xf] %vm660, %v652
      %662 = vst.msk [vmem:[%s167 + $0x4] sm:$0xf] %vm660, %v653
      %663 = vst.msk [vmem:[%s167 + $0x8] sm:$0xf] %vm660, %v654
      %664 = vst.msk [vmem:[%s167 + $0xc] sm:$0xf] %vm660, %v655
      %p665 = scmp.lt.s32.totalorder %s14, 1
      %s666 = scalar_select %p665, %s14, 1
      %s667 = smul.addr %s666, 4
      %s668 = smul.addr %s667, 4
      %s669 = scalar_lea.vmem %s3, %s668
      // Predicated region
      $region33: #{autoencoder_forward.5} parent=31 // pred_check
        %p670 = pneg %p100
      $region34: #{autoencoder_forward.5} parent=31 // pred_check_branch
        %672 = sbr.rel (%p670) target = $region36
      $region35: #{autoencoder_forward.5} parent=31 // pred_region
        _
      $region36: #{autoencoder_forward.5} parent=31 // pred_fallthru
        _
    $region32: #{autoencoder_forward.5} parent=5 // pred_fallthru
      _
    %p673 = scmp.le.s32.totalorder 2, %s9
    // Predicated region
    $region37: #{autoencoder_forward.5} parent=5 // pred_check
      %p674 = pneg %p673
    $region38: #{autoencoder_forward.5} parent=5 // pred_check_branch
      %676 = sbr.rel (%p674) target = $region40
    $region39: #{autoencoder_forward.5} parent=5 // pred_region
      %s677 = ssub.s32 %s9, 2
      // Predicated region
      $region41: #{autoencoder_forward.5} parent=39 // pred_check
        %p678 = pneg %p106
      $region42: #{autoencoder_forward.5} parent=39 // pred_check_branch
        %680 = sbr.rel (%p678) target = $region44
      $region43: #{autoencoder_forward.5} parent=39 // pred_region
        %p681 = scmp.lt.s32.totalorder %s15, 1
        %s682 = scalar_select %p681, %s15, 1
        %s683 = smul.addr %s682, 4
        %s684 = smul.addr %s683, 4
        %s685 = scalar_lea.vmem %s3, %s684
      $region44: #{autoencoder_forward.5} parent=39 // pred_fallthru
        _
    $region40: #{autoencoder_forward.5} parent=5 // pred_fallthru
      _
  $region6: #{autoencoder_forward.5} parent=0 // loop_footer
    %s13 = sadd.s32 1, %s9
  $region7: #{autoencoder_forward.5} parent=0 // loop_footer_branch
    %8 = sbr.rel target = $region3
  $region8: #{autoencoder_forward.5} parent=0 // loop_exit
    _

// kernel: autoencoder_forward.6
$region0: #{autoencoder_forward.6}
  #allocation0 [shape = 'u32[]', space=smem, size = 0x4, offset = 0x4, fixed_abs, tag = 'smem constant byte address 0x4 - core index']
  #allocation1 [shape = 'u32[144,128]{1,0:T(1,128)}', space=vmem, size = 0x12000, scoped, tag = 'internal scratch']
  %s0 = inlined_call_operand.vmem [shape: bf16[4,16,64], index: 0, kind: input, shape index: {}]
  %s1 = inlined_call_operand.vmem [shape: f32[16,1], index: 1, kind: input, shape index: {}]
  %s2 = inlined_call_operand.vmem [shape: bf16[2,64,7], index: 2, kind: input, shape index: {}]
  %s3 = inlined_call_operand.vmem [shape: bf16[2,16,4], index: 3, kind: output, shape index: {}]
  %s4 = sld [smem:[#allocation0]]
  $region45: #{autoencoder_forward.6} parent=0
    _
  %s6 = ssub.s32 1, %s4
  %s7 = scalar_select 0, %s6, %s4
  loop: start=0, step=1, limit=4
  $region2: #{autoencoder_forward.6} parent=0 // loop_pre_header
    _
  $region3: #{autoencoder_forward.6} parent=0 // loop_header
    %s9 = sphi 0, %s13
    %p10 = scmp.ge.s32.totalorder %s9, 4
    %s17 = sphi 0, %s17
    %s19 = sphi 0, %s17
    %s20 = sphi 0, %s19
    %s34 = sphi 0, %s20
    %s38 = sphi 0, %s38
    %s40 = sphi 0, %s38
    %s41 = sphi 0, %s40
    %s55 = sphi 0, %s41
    %s61 = sphi 0, %s63
    %s64 = sphi 0, %s61
    %s65 = sphi 0, %s64
    %s81 = sphi 0, %s65
    %s87 = sphi 0, %s89
    %s90 = sphi 0, %s87
    %s91 = sphi 0, %s90
    %s107 = sphi 0, %s91
  $region4: #{autoencoder_forward.6} parent=0 // loop_header_branch
    %12 = sbr.rel (%p10) target = $region8
  $region5: #{autoencoder_forward.6} parent=0 // loop_body
    %s14 = ssub.s32 %s9, 1
    %s15 = ssub.s32 %s9, 2
    %s16 = sadd.s32 %s9, 1
    %s18 = sadd.s32 %s17, 1
    %p21 = scmp.eq.s32.totalorder %s9, 1
    %p22 = scmp.ne.s32.totalorder %s17, %s19
    %p23 = scmp.eq.s32.totalorder %s9, 0
    %p24 = por %p22, %p23
    %p25 = scmp.ne.s32.totalorder %s17, %s19
    %p26 = scmp.eq.s32.totalorder %s14, 1
    %p27 = por %p25, %p26
    %p28 = scmp.ne.s32.totalorder %s19, %s20
    %p29 = scmp.eq.s32.totalorder %s14, 0
    %p30 = por %p28, %p29
    %p31 = scmp.ne.s32.totalorder %s19, %s20
    %p32 = scmp.eq.s32.totalorder %s15, 1
    %p33 = por %p31, %p32
    %p35 = scmp.ne.s32.totalorder %s20, %s34
    %p36 = scmp.eq.s32.totalorder %s15, 0
    %p37 = por %p35, %p36
    %s39 = sadd.s32 %s38, 1
    %p42 = scmp.eq.s32.totalorder %s9, 1
    %p43 = scmp.ne.s32.totalorder %s38, %s40
    %p44 = scmp.eq.s32.totalorder %s9, 0
    %p45 = por %p43, %p44
    %p46 = scmp.ne.s32.totalorder %s38, %s40
    %p47 = scmp.eq.s32.totalorder %s14, 1
    %p48 = por %p46, %p47
    %p49 = scmp.ne.s32.totalorder %s40, %s41
    %p50 = scmp.eq.s32.totalorder %s14, 0
    %p51 = por %p49, %p50
    %p52 = scmp.ne.s32.totalorder %s40, %s41
    %p53 = scmp.eq.s32.totalorder %s15, 1
    %p54 = por %p52, %p53
    %p56 = scmp.ne.s32.totalorder %s41, %s55
    %p57 = scmp.eq.s32.totalorder %s15, 0
    %p58 = por %p56, %p57
    %s59 = ssub.s32 %s9, %s16
    %p60 = scmp.eq.s32.totalorder %s59, 0
    %s62 = sadd.s32 %s61, 1
    %s63 = scalar_select %p60, %s61, %s62
    %p66 = pneg %p60
    %p67 = scmp.eq.s32.totalorder %s9, 1
    %p68 = por %p66, %p67
    %p69 = scmp.ne.s32.totalorder %s61, %s64
    %p70 = scmp.eq.s32.totalorder %s9, 0
    %p71 = por %p69, %p70
    %p72 = scmp.ne.s32.totalorder %s61, %s64
    %p73 = scmp.eq.s32.totalorder %s14, 1
    %p74 = por %p72, %p73
    %p75 = scmp.ne.s32.totalorder %s64, %s65
    %p76 = scmp.eq.s32.totalorder %s14, 0
    %p77 = por %p75, %p76
    %p78 = scmp.ne.s32.totalorder %s64, %s65
    %p79 = scmp.eq.s32.totalorder %s15, 1
    %p80 = por %p78, %p79
    %p82 = scmp.ne.s32.totalorder %s65, %s81
    %p83 = scmp.eq.s32.totalorder %s15, 0
    %p84 = por %p82, %p83
    %s85 = ssub.s32 %s9, %s16
    %p86 = scmp.eq.s32.totalorder %s85, 0
    %s88 = sadd.s32 %s87, 1
    %s89 = scalar_select %p86, %s87, %s88
    %p92 = pneg %p86
    %p93 = scmp.eq.s32.totalorder %s9, 1
    %p94 = por %p92, %p93
    %p95 = scmp.ne.s32.totalorder %s87, %s90
    %p96 = scmp.eq.s32.totalorder %s9, 0
    %p97 = por %p95, %p96
    %p98 = scmp.ne.s32.totalorder %s87, %s90
    %p99 = scmp.eq.s32.totalorder %s14, 1
    %p100 = por %p98, %p99
    %p101 = scmp.ne.s32.totalorder %s90, %s91
    %p102 = scmp.eq.s32.totalorder %s14, 0
    %p103 = por %p101, %p102
    %p104 = scmp.ne.s32.totalorder %s90, %s91
    %p105 = scmp.eq.s32.totalorder %s15, 1
    %p106 = por %p104, %p105
    %p108 = scmp.ne.s32.totalorder %s91, %s107
    %p109 = scmp.eq.s32.totalorder %s15, 0
    %p110 = por %p108, %p109
    %p111 = scmp.le.s32.totalorder 1, %s9
    %p112 = scmp.lt.s32.totalorder %s9, 3
    %p113 = pnand %p111, %p112
    %p114 = pneg %p113
    // Predicated region
    $region9: #{autoencoder_forward.6} parent=5 // pred_check
      _
    $region10: #{autoencoder_forward.6} parent=5 // pred_check_branch
      %116 = sbr.rel (%p113) target = $region12
    $region11: #{autoencoder_forward.6} parent=5 // pred_region
      %s117 = ssub.s32 %s9, 1
      // Predicated region
      $region13: #{autoencoder_forward.6} parent=11 // pred_check
        %p118 = pneg %p30
      $region14: #{autoencoder_forward.6} parent=11 // pred_check_branch
        %120 = sbr.rel (%p118) target = $region16
      $region15: #{autoencoder_forward.6} parent=11 // pred_region
        _
      $region16: #{autoencoder_forward.6} parent=11 // pred_fallthru
        _
      // Predicated region
      $region17: #{autoencoder_forward.6} parent=11 // pred_check
        %p121 = pneg %p51
      $region18: #{autoencoder_forward.6} parent=11 // pred_check_branch
        %123 = sbr.rel (%p121) target = $region20
      $region19: #{autoencoder_forward.6} parent=11 // pred_region
        _
      $region20: #{autoencoder_forward.6} parent=11 // pred_fallthru
        _
    $region12: #{autoencoder_forward.6} parent=5 // pred_fallthru
      _
    %p124 = scmp.lt.s32.totalorder %s9, 2
    // Predicated region
    $region21: #{autoencoder_forward.6} parent=5 // pred_check
      %p125 = pneg %p124
    $region22: #{autoencoder_forward.6} parent=5 // pred_check_branch
      %127 = sbr.rel (%p125) target = $region24
    $region23: #{autoencoder_forward.6} parent=5 // pred_region
      // Predicated region
      $region25: #{autoencoder_forward.6} parent=23 // pred_check
        %p128 = pneg %p71
      $region26: #{autoencoder_forward.6} parent=23 // pred_check_branch
        %130 = sbr.rel (%p128) target = $region28
      $region27: #{autoencoder_forward.6} parent=23 // pred_region
        %p131 = scmp.lt.s32.totalorder %s9, 1
        %s132 = scalar_select %p131, %s9, 1
        %s133 = smul.addr %s132, 8
        %s134 = smul.addr %s133, 4
        %s135 = scalar_lea.vmem %s2, %s134
      $region28: #{autoencoder_forward.6} parent=23 // pred_fallthru
        _
    $region24: #{autoencoder_forward.6} parent=5 // pred_fallthru
      _
    %p136 = scmp.le.s32.totalorder 1, %s9
    %p137 = scmp.lt.s32.totalorder %s9, 3
    %p138 = pnand %p136, %p137
    %p139 = pneg %p138
    // Predicated region
    $region29: #{autoencoder_forward.6} parent=5 // pred_check
      _
    $region30: #{autoencoder_forward.6} parent=5 // pred_check_branch
      %141 = sbr.rel (%p138) target = $region32
    $region31: #{autoencoder_forward.6} parent=5 // pred_region
      %s142 = ssub.s32 %s9, 1
      %p143 = pneg %p30
      %p144 = pneg %p27
      %p145 = pneg %p51
      %p146 = pneg %p48
      %p147 = scmp.lt.s32.totalorder %s14, 1
      %s148 = scalar_select %p147, %s14, 1
      %s149 = smul.addr %s148, 8
      %s150 = smul.addr %s149, 4
      %s151 = scalar_lea.vmem %s2, %s150
      %p152 = pneg %p77
      %p153 = pneg %p74
      %p154 = pneg %p103
      %p155 = pneg %p100
      %p156 = scmp.lt.s32.totalorder %s14, 1
      %s157 = scalar_select %p156, %s14, 1
      %s158 = smul.addr %s157, 2
      %s159 = smul.addr %s158, 4
      %s160 = scalar_lea.vmem %s3, %s159
      %p161 = scmp.lt.s32.totalorder %s14, 1
      %s162 = scalar_select %p161, %s14, 1
      %s163 = smul.addr %s162, 8
      %s164 = smul.addr %s163, 4
      %s165 = scalar_lea.vmem %s2, %s164
      %p166 = scmp.lt.s32.totalorder %s14, 1
      %s167 = scalar_select %p166, %s14, 1
      %s168 = smul.addr %s167, 2
      %s169 = smul.addr %s168, 4
      %s170 = scalar_lea.vmem %s3, %s169
      %v171 = vld [vmem:[%s0] sm:$0xf]
      %v172 = vld [vmem:[%s0 + $0x4] sm:$0xf]
      %v173 = vunpack.c.l.bf16 %v171
      %v174 = vunpack.c.l.bf16 %v172
      %v175 = vld [vmem:[%s165] sm:$0xf]
      %v176 = vld [vmem:[%s165 + $0x4] sm:$0xf]
      %v177 = vld [vmem:[%s165 + $0x8] sm:$0xf]
      %v178 = vld [vmem:[%s165 + $0xc] sm:$0xf]
      %v179 = vld [vmem:[%s165 + $0x10] sm:$0xf]
      %v180 = vld [vmem:[%s165 + $0x14] sm:$0xf]
      %v181 = vld [vmem:[%s165 + $0x18] sm:$0xf]
      %v182 = vld [vmem:[%s165 + $0x1c] sm:$0xf]
      %v183 = vunpack.c.l.bf16 %v175
      %v184 = vunpack.c.l.bf16 %v176
      %v185 = vunpack.c.l.bf16 %v177
      %v186 = vunpack.c.l.bf16 %v178
      %v187 = vunpack.c.l.bf16 %v179
      %v188 = vunpack.c.l.bf16 %v180
      %v189 = vunpack.c.l.bf16 %v181
      %v190 = vunpack.c.l.bf16 %v182
      %s191 = scalar_lea.vmem %s0, 8
      %v192 = vld [vmem:[%s191] sm:$0xf]
      %v193 = vld [vmem:[%s191 + $0x4] sm:$0xf]
      %v194 = vunpack.c.l.bf16 %v192
      %v195 = vunpack.c.l.bf16 %v193
      %204 = vrot.lane.b32.xlu0 %v183, 127
      %v205 = vpop.permute.xlu0 %204
      %206 = vrot.lane.b32.xlu0 %v184, 127
      %v207 = vpop.permute.xlu0 %206
      %208 = vrot.lane.b32.xlu0 %v185, 127
      %v209 = vpop.permute.xlu0 %208
      %210 = vrot.lane.b32.xlu0 %v186, 127
      %v211 = vpop.permute.xlu0 %210
      %212 = vrot.lane.b32.xlu0 %v187, 127
      %v213 = vpop.permute.xlu0 %212
      %214 = vrot.lane.b32.xlu0 %v188, 127
      %v215 = vpop.permute.xlu0 %214
      %216 = vrot.lane.b32.xlu0 %v189, 127
      %v217 = vpop.permute.xlu0 %216
      %218 = vrot.lane.b32.xlu0 %v190, 127
      %v219 = vpop.permute.xlu0 %218
      %vm228 = vcmask 523264
      %v230 = vsel %vm228, %v194, 0
      %v233 = vsel %vm228, %v195, 0
      %235 = vmatprep.subr.mxu0 0.0
      %236 = vmatpush1.msra.mxu0 0.0
      %237 = vmatprep.subr.mxu0 0.0
      %238 = vmatpush1.msra.mxu0 0.0
      %239 = vmatprep.subr.mxu0 0.0
      %240 = vmatpush1.msra.mxu0 0.0
      %241 = vmatprep.subr.mxu0 0.0
      %242 = vmatpush1.msra.mxu0 0.0
      %243 = vmatprep.subr.mxu0 0.0
      %244 = vmatpush1.msra.mxu0 0.0
      %245 = vmatprep.subr.mxu0 0.0
      %246 = vmatpush1.msra.mxu0 0.0
      %247 = vmatprep.subr.mxu0 0.0
      %248 = vmatpush1.msra.mxu0 0.0
      %249 = vmatprep.subr.mxu0 0.0
      %250 = vmatpush1.msra.mxu0 0.0
      %251 = vmatprep.subr.mxu0 0.0
      %252 = vmatpush1.msra.mxu0 %v219
      %253 = vmatprep.subr.mxu0 0.0
      %254 = vmatpush1.msra.mxu0 %v217
      %255 = vmatprep.subr.mxu0 0.0
      %256 = vmatpush1.msra.mxu0 %v215
      %257 = vmatprep.subr.mxu0 0.0
      %258 = vmatpush1.msra.mxu0 %v213
      %259 = vmatprep.subr.mxu0 0.0
      %260 = vmatpush1.msra.mxu0 %v211
      %261 = vmatprep.subr.mxu0 0.0
      %262 = vmatpush1.msra.mxu0 %v209
      %263 = vmatprep.subr.mxu0 0.0
      %264 = vmatpush1.msra.mxu0 %v207
      %265 = vmatprep.subr.mxu0 0.0
      %266 = vmatpush1.msra.mxu0 %v205
      %267 = vmatprep.subr.mxu0 0.0
      %268 = vmatpush2.msra.mxu0 0.0
      %269 = vmatprep.subr.mxu0 0.0
      %270 = vmatpush2.msra.mxu0 0.0
      %271 = vmatprep.subr.mxu0 0.0
      %272 = vmatpush2.msra.mxu0 0.0
      %273 = vmatprep.subr.mxu0 0.0
      %274 = vmatpush2.msra.mxu0 0.0
      %275 = vmatprep.subr.mxu0 0.0
      %276 = vmatpush2.msra.mxu0 0.0
      %277 = vmatprep.subr.mxu0 0.0
      %278 = vmatpush2.msra.mxu0 0.0
      %279 = vmatprep.subr.mxu0 0.0
      %280 = vmatpush2.msra.mxu0 0.0
      %281 = vmatprep.subr.mxu0 0.0
      %282 = vmatpush2.msra.mxu0 0.0
      %283 = vmatprep.subr.mxu0 0.0
      %284 = vmatpush2.msra.mxu0 0.0
      %285 = vmatprep.subr.mxu0 0.0
      %286 = vmatpush2.msra.mxu0 0.0
      %287 = vmatprep.subr.mxu0 0.0
      %288 = vmatpush2.msra.mxu0 0.0
      %289 = vmatprep.subr.mxu0 0.0
      %290 = vmatpush2.msra.mxu0 0.0
      %291 = vmatprep.subr.mxu0 0.0
      %292 = vmatpush2.msra.mxu0 0.0
      %293 = vmatprep.subr.mxu0 0.0
      %294 = vmatpush2.msra.mxu0 0.0
      %295 = vmatprep.subr.mxu0 0.0
      %296 = vmatpush2.msra.mxu0 0.0
      %297 = vmatprep.subr.mxu0 0.0
      %298 = vmatpush2.msra.mxu0 0.0
      %299 = vmatprep.mubr.f32.mxu0 0.0
      %300 = vmatmul.mubr.f32.gmra.mxu0 %v230
      %v301 = vpop.f32.mrf.mxu0
      %v302 = vadd.f32 0.0, %v301
      %v303 = vpop.f32.mrf.mxu0
      %304 = vmatprep.mubr.f32.mxu0 0.0
      %305 = vmatmul.mubr.f32.gmra.mxu0 %v233
      %v306 = vpop.f32.mrf.mxu0
      %v307 = vadd.f32 0.0, %v306
      %v308 = vpop.f32.mrf.mxu0
      %309 = vdwg.mxu0
      %v311 = vsel %vm228, %v173, 0
      %v314 = vsel %vm228, %v174, 0
      %316 = vmatprep.subr.mxu0 0.0
      %317 = vmatpush1.msra.mxu0 0.0
      %318 = vmatprep.subr.mxu0 0.0
      %319 = vmatpush1.msra.mxu0 0.0
      %320 = vmatprep.subr.mxu0 0.0
      %321 = vmatpush1.msra.mxu0 0.0
      %322 = vmatprep.subr.mxu0 0.0
      %323 = vmatpush1.msra.mxu0 0.0
      %324 = vmatprep.subr.mxu0 0.0
      %325 = vmatpush1.msra.mxu0 0.0
      %326 = vmatprep.subr.mxu0 0.0
      %327 = vmatpush1.msra.mxu0 0.0
      %328 = vmatprep.subr.mxu0 0.0
      %329 = vmatpush1.msra.mxu0 0.0
      %330 = vmatprep.subr.mxu0 0.0
      %331 = vmatpush1.msra.mxu0 0.0
      %332 = vmatprep.subr.mxu0 0.0
      %333 = vmatpush1.msra.mxu0 %v190
      %334 = vmatprep.subr.mxu0 0.0
      %335 = vmatpush1.msra.mxu0 %v189
      %336 = vmatprep.subr.mxu0 0.0
      %337 = vmatpush1.msra.mxu0 %v188
      %338 = vmatprep.subr.mxu0 0.0
      %339 = vmatpush1.msra.mxu0 %v187
      %340 = vmatprep.subr.mxu0 0.0
      %341 = vmatpush1.msra.mxu0 %v186
      %342 = vmatprep.subr.mxu0 0.0
      %343 = vmatpush1.msra.mxu0 %v185
      %344 = vmatprep.subr.mxu0 0.0
      %345 = vmatpush1.msra.mxu0 %v184
      %346 = vmatprep.subr.mxu0 0.0
      %347 = vmatpush1.msra.mxu0 %v183
      %348 = vmatprep.subr.mxu0 0.0
      %349 = vmatpush2.msra.mxu0 0.0
      %350 = vmatprep.subr.mxu0 0.0
      %351 = vmatpush2.msra.mxu0 0.0
      %352 = vmatprep.subr.mxu0 0.0
      %353 = vmatpush2.msra.mxu0 0.0
      %354 = vmatprep.subr.mxu0 0.0
      %355 = vmatpush2.msra.mxu0 0.0
      %356 = vmatprep.subr.mxu0 0.0
      %357 = vmatpush2.msra.mxu0 0.0
      %358 = vmatprep.subr.mxu0 0.0
      %359 = vmatpush2.msra.mxu0 0.0
      %360 = vmatprep.subr.mxu0 0.0
      %361 = vmatpush2.msra.mxu0 0.0
      %362 = vmatprep.subr.mxu0 0.0
      %363 = vmatpush2.msra.mxu0 0.0
      %364 = vmatprep.subr.mxu0 0.0
      %365 = vmatpush2.msra.mxu0 0.0
      %366 = vmatprep.subr.mxu0 0.0
      %367 = vmatpush2.msra.mxu0 0.0
      %368 = vmatprep.subr.mxu0 0.0
      %369 = vmatpush2.msra.mxu0 0.0
      %370 = vmatprep.subr.mxu0 0.0
      %371 = vmatpush2.msra.mxu0 0.0
      %372 = vmatprep.subr.mxu0 0.0
      %373 = vmatpush2.msra.mxu0 0.0
      %374 = vmatprep.subr.mxu0 0.0
      %375 = vmatpush2.msra.mxu0 0.0
      %376 = vmatprep.subr.mxu0 0.0
      %377 = vmatpush2.msra.mxu0 0.0
      %378 = vmatprep.subr.mxu0 0.0
      %379 = vmatpush2.msra.mxu0 0.0
      %380 = vmatprep.mubr.f32.mxu0 0.0
      %381 = vmatmul.mubr.f32.gmra.mxu0 %v311
      %v382 = vpop.f32.mrf.mxu0
      %v383 = vadd.f32 %v302, %v382
      %v384 = vpop.f32.mrf.mxu0
      %385 = vmatprep.mubr.f32.mxu0 0.0
      %386 = vmatmul.mubr.f32.gmra.mxu0 %v314
      %v387 = vpop.f32.mrf.mxu0
      %v388 = vadd.f32 %v307, %v387
      %v389 = vpop.f32.mrf.mxu0
      %390 = vdwg.mxu0
      %s391 = scalar_lea.vmem %s0, 16
      %v392 = vld [vmem:[%s391] sm:$0xf]
      %v393 = vld [vmem:[%s391 + $0x4] sm:$0xf]
      %v394 = vunpack.c.l.bf16 %v392
      %v395 = vunpack.c.l.bf16 %v393
      %396 = vrot.lane.b32.xlu0 %v183, 126
      %v397 = vpop.permute.xlu0 %396
      %398 = vrot.lane.b32.xlu0 %v184, 126
      %v399 = vpop.permute.xlu0 %398
      %400 = vrot.lane.b32.xlu0 %v185, 126
      %v401 = vpop.permute.xlu0 %400
      %402 = vrot.lane.b32.xlu0 %v186, 126
      %v403 = vpop.permute.xlu0 %402
      %404 = vrot.lane.b32.xlu0 %v187, 126
      %v405 = vpop.permute.xlu0 %404
      %406 = vrot.lane.b32.xlu0 %v188, 126
      %v407 = vpop.permute.xlu0 %406
      %408 = vrot.lane.b32.xlu0 %v189, 126
      %v409 = vpop.permute.xlu0 %408
      %410 = vrot.lane.b32.xlu0 %v190, 126
      %v411 = vpop.permute.xlu0 %410
      %v421 = vsel %vm228, %v394, 0
      %v424 = vsel %vm228, %v395, 0
      %426 = vmatprep.subr.mxu0 0.0
      %427 = vmatpush1.msra.mxu0 0.0
      %428 = vmatprep.subr.mxu0 0.0
      %429 = vmatpush1.msra.mxu0 0.0
      %430 = vmatprep.subr.mxu0 0.0
      %431 = vmatpush1.msra.mxu0 0.0
      %432 = vmatprep.subr.mxu0 0.0
      %433 = vmatpush1.msra.mxu0 0.0
      %434 = vmatprep.subr.mxu0 0.0
      %435 = vmatpush1.msra.mxu0 0.0
      %436 = vmatprep.subr.mxu0 0.0
      %437 = vmatpush1.msra.mxu0 0.0
      %438 = vmatprep.subr.mxu0 0.0
      %439 = vmatpush1.msra.mxu0 0.0
      %440 = vmatprep.subr.mxu0 0.0
      %441 = vmatpush1.msra.mxu0 0.0
      %442 = vmatprep.subr.mxu0 0.0
      %443 = vmatpush1.msra.mxu0 %v411
      %444 = vmatprep.subr.mxu0 0.0
      %445 = vmatpush1.msra.mxu0 %v409
      %446 = vmatprep.subr.mxu0 0.0
      %447 = vmatpush1.msra.mxu0 %v407
      %448 = vmatprep.subr.mxu0 0.0
      %449 = vmatpush1.msra.mxu0 %v405
      %450 = vmatprep.subr.mxu0 0.0
      %451 = vmatpush1.msra.mxu0 %v403
      %452 = vmatprep.subr.mxu0 0.0
      %453 = vmatpush1.msra.mxu0 %v401
      %454 = vmatprep.subr.mxu0 0.0
      %455 = vmatpush1.msra.mxu0 %v399
      %456 = vmatprep.subr.mxu0 0.0
      %457 = vmatpush1.msra.mxu0 %v397
      %458 = vmatprep.subr.mxu0 0.0
      %459 = vmatpush2.msra.mxu0 0.0
      %460 = vmatprep.subr.mxu0 0.0
      %461 = vmatpush2.msra.mxu0 0.0
      %462 = vmatprep.subr.mxu0 0.0
      %463 = vmatpush2.msra.mxu0 0.0
      %464 = vmatprep.subr.mxu0 0.0
      %465 = vmatpush2.msra.mxu0 0.0
      %466 = vmatprep.subr.mxu0 0.0
      %467 = vmatpush2.msra.mxu0 0.0
      %468 = vmatprep.subr.mxu0 0.0
      %469 = vmatpush2.msra.mxu0 0.0
      %470 = vmatprep.subr.mxu0 0.0
      %471 = vmatpush2.msra.mxu0 0.0
      %472 = vmatprep.subr.mxu0 0.0
      %473 = vmatpush2.msra.mxu0 0.0
      %474 = vmatprep.subr.mxu0 0.0
      %475 = vmatpush2.msra.mxu0 0.0
      %476 = vmatprep.subr.mxu0 0.0
      %477 = vmatpush2.msra.mxu0 0.0
      %478 = vmatprep.subr.mxu0 0.0
      %479 = vmatpush2.msra.mxu0 0.0
      %480 = vmatprep.subr.mxu0 0.0
      %481 = vmatpush2.msra.mxu0 0.0
      %482 = vmatprep.subr.mxu0 0.0
      %483 = vmatpush2.msra.mxu0 0.0
      %484 = vmatprep.subr.mxu0 0.0
      %485 = vmatpush2.msra.mxu0 0.0
      %486 = vmatprep.subr.mxu0 0.0
      %487 = vmatpush2.msra.mxu0 0.0
      %488 = vmatprep.subr.mxu0 0.0
      %489 = vmatpush2.msra.mxu0 0.0
      %490 = vmatprep.mubr.f32.mxu0 0.0
      %491 = vmatmul.mubr.f32.gmra.mxu0 %v421
      %v492 = vpop.f32.mrf.mxu0
      %v493 = vadd.f32 0.0, %v492
      %v494 = vpop.f32.mrf.mxu0
      %495 = vmatprep.mubr.f32.mxu0 0.0
      %496 = vmatmul.mubr.f32.gmra.mxu0 %v424
      %v497 = vpop.f32.mrf.mxu0
      %v498 = vadd.f32 0.0, %v497
      %v499 = vpop.f32.mrf.mxu0
      %500 = vdwg.mxu0
      %v501 = vadd.f32 %v383, %v493
      %v502 = vadd.f32 %v388, %v498
      %s503 = scalar_lea.vmem %s0, 24
      %v504 = vld [vmem:[%s503] sm:$0xf]
      %v505 = vld [vmem:[%s503 + $0x4] sm:$0xf]
      %v506 = vunpack.c.l.bf16 %v504
      %v507 = vunpack.c.l.bf16 %v505
      %508 = vrot.lane.b32.xlu0 %v183, 125
      %v509 = vpop.permute.xlu0 %508
      %510 = vrot.lane.b32.xlu0 %v184, 125
      %v511 = vpop.permute.xlu0 %510
      %512 = vrot.lane.b32.xlu0 %v185, 125
      %v513 = vpop.permute.xlu0 %512
      %514 = vrot.lane.b32.xlu0 %v186, 125
      %v515 = vpop.permute.xlu0 %514
      %516 = vrot.lane.b32.xlu0 %v187, 125
      %v517 = vpop.permute.xlu0 %516
      %518 = vrot.lane.b32.xlu0 %v188, 125
      %v519 = vpop.permute.xlu0 %518
      %520 = vrot.lane.b32.xlu0 %v189, 125
      %v521 = vpop.permute.xlu0 %520
      %522 = vrot.lane.b32.xlu0 %v190, 125
      %v523 = vpop.permute.xlu0 %522
      %v533 = vsel %vm228, %v506, 0
      %v536 = vsel %vm228, %v507, 0
      %538 = vmatprep.subr.mxu0 0.0
      %539 = vmatpush1.msra.mxu0 0.0
      %540 = vmatprep.subr.mxu0 0.0
      %541 = vmatpush1.msra.mxu0 0.0
      %542 = vmatprep.subr.mxu0 0.0
      %543 = vmatpush1.msra.mxu0 0.0
      %544 = vmatprep.subr.mxu0 0.0
      %545 = vmatpush1.msra.mxu0 0.0
      %546 = vmatprep.subr.mxu0 0.0
      %547 = vmatpush1.msra.mxu0 0.0
      %548 = vmatprep.subr.mxu0 0.0
      %549 = vmatpush1.msra.mxu0 0.0
      %550 = vmatprep.subr.mxu0 0.0
      %551 = vmatpush1.msra.mxu0 0.0
      %552 = vmatprep.subr.mxu0 0.0
      %553 = vmatpush1.msra.mxu0 0.0
      %554 = vmatprep.subr.mxu0 0.0
      %555 = vmatpush1.msra.mxu0 %v523
      %556 = vmatprep.subr.mxu0 0.0
      %557 = vmatpush1.msra.mxu0 %v521
      %558 = vmatprep.subr.mxu0 0.0
      %559 = vmatpush1.msra.mxu0 %v519
      %560 = vmatprep.subr.mxu0 0.0
      %561 = vmatpush1.msra.mxu0 %v517
      %562 = vmatprep.subr.mxu0 0.0
      %563 = vmatpush1.msra.mxu0 %v515
      %564 = vmatprep.subr.mxu0 0.0
      %565 = vmatpush1.msra.mxu0 %v513
      %566 = vmatprep.subr.mxu0 0.0
      %567 = vmatpush1.msra.mxu0 %v511
      %568 = vmatprep.subr.mxu0 0.0
      %569 = vmatpush1.msra.mxu0 %v509
      %570 = vmatprep.subr.mxu0 0.0
      %571 = vmatpush2.msra.mxu0 0.0
      %572 = vmatprep.subr.mxu0 0.0
      %573 = vmatpush2.msra.mxu0 0.0
      %574 = vmatprep.subr.mxu0 0.0
      %575 = vmatpush2.msra.mxu0 0.0
      %576 = vmatprep.subr.mxu0 0.0
      %577 = vmatpush2.msra.mxu0 0.0
      %578 = vmatprep.subr.mxu0 0.0
      %579 = vmatpush2.msra.mxu0 0.0
      %580 = vmatprep.subr.mxu0 0.0
      %581 = vmatpush2.msra.mxu0 0.0
      %582 = vmatprep.subr.mxu0 0.0
      %583 = vmatpush2.msra.mxu0 0.0
      %584 = vmatprep.subr.mxu0 0.0
      %585 = vmatpush2.msra.mxu0 0.0
      %586 = vmatprep.subr.mxu0 0.0
      %587 = vmatpush2.msra.mxu0 0.0
      %588 = vmatprep.subr.mxu0 0.0
      %589 = vmatpush2.msra.mxu0 0.0
      %590 = vmatprep.subr.mxu0 0.0
      %591 = vmatpush2.msra.mxu0 0.0
      %592 = vmatprep.subr.mxu0 0.0
      %593 = vmatpush2.msra.mxu0 0.0
      %594 = vmatprep.subr.mxu0 0.0
      %595 = vmatpush2.msra.mxu0 0.0
      %596 = vmatprep.subr.mxu0 0.0
      %597 = vmatpush2.msra.mxu0 0.0
      %598 = vmatprep.subr.mxu0 0.0
      %599 = vmatpush2.msra.mxu0 0.0
      %600 = vmatprep.subr.mxu0 0.0
      %601 = vmatpush2.msra.mxu0 0.0
      %602 = vmatprep.mubr.f32.mxu0 0.0
      %603 = vmatmul.mubr.f32.gmra.mxu0 %v533
      %v604 = vpop.f32.mrf.mxu0
      %v605 = vadd.f32 0.0, %v604
      %v606 = vpop.f32.mrf.mxu0
      %607 = vmatprep.mubr.f32.mxu0 0.0
      %608 = vmatmul.mubr.f32.gmra.mxu0 %v536
      %v609 = vpop.f32.mrf.mxu0
      %v610 = vadd.f32 0.0, %v609
      %v611 = vpop.f32.mrf.mxu0
      %612 = vdwg.mxu0
      %v613 = vadd.f32 %v501, %v605
      %v614 = vadd.f32 %v502, %v610
      %v615 = vld [vmem:[%s1] sm:$0xff]
      %v616 = vld [vmem:[%s1 + $0x8] sm:$0xff]
      %618 = vset.pattern.permute.xlu0 0
      %619 = vperm.xlu0 %618, %v615
      %v620 = vpop.permute.xlu0 %619
      %623 = vset.pattern.permute.xlu0 0
      %624 = vperm.xlu0 %623, %v616
      %v625 = vpop.permute.xlu0 %624
      %v627 = vadd.f32 %v613, %v620
      %v628 = vadd.f32 %v614, %v625
      %v629 = vmax.f32 %v627, 0.0
      %v630 = vmax.f32 %v628, 0.0
      %v631 = vpack.c.bf16 %v630, %v629
      %v633 = vunpack.c.l.b16 %v631
      %v634 = vunpack.c.h.b16 %v631
      %v635 = vpack.c.b16 %v633, %v633
      %v636 = vpack.c.b16 %v634, %v634
      %vm639 = vcmask 27648
      %640 = vst.msk [vmem:[%s170] sm:$0xf] %vm639, %v635
      %641 = vst.msk [vmem:[%s170 + $0x4] sm:$0xf] %vm639, %v636
      %p642 = scmp.lt.s32.totalorder %s14, 1
      %s643 = scalar_select %p642, %s14, 1
      %s644 = smul.addr %s643, 2
      %s645 = smul.addr %s644, 4
      %s646 = scalar_lea.vmem %s3, %s645
      // Predicated region
      $region33: #{autoencoder_forward.6} parent=31 // pred_check
        %p647 = pneg %p100
      $region34: #{autoencoder_forward.6} parent=31 // pred_check_branch
        %649 = sbr.rel (%p647) target = $region36
      $region35: #{autoencoder_forward.6} parent=31 // pred_region
        _
      $region36: #{autoencoder_forward.6} parent=31 // pred_fallthru
        _
    $region32: #{autoencoder_forward.6} parent=5 // pred_fallthru
      _
    %p650 = scmp.le.s32.totalorder 2, %s9
    // Predicated region
    $region37: #{autoencoder_forward.6} parent=5 // pred_check
      %p651 = pneg %p650
    $region38: #{autoencoder_forward.6} parent=5 // pred_check_branch
      %653 = sbr.rel (%p651) target = $region40
    $region39: #{autoencoder_forward.6} parent=5 // pred_region
      %s654 = ssub.s32 %s9, 2
      // Predicated region
      $region41: #{autoencoder_forward.6} parent=39 // pred_check
        %p655 = pneg %p106
      $region42: #{autoencoder_forward.6} parent=39 // pred_check_branch
        %657 = sbr.rel (%p655) target = $region44
      $region43: #{autoencoder_forward.6} parent=39 // pred_region
        %p658 = scmp.lt.s32.totalorder %s15, 1
        %s659 = scalar_select %p658, %s15, 1
        %s660 = smul.addr %s659, 2
        %s661 = smul.addr %s660, 4
        %s662 = scalar_lea.vmem %s3, %s661
      $region44: #{autoencoder_forward.6} parent=39 // pred_fallthru
        _
    $region40: #{autoencoder_forward.6} parent=5 // pred_fallthru
      _
  $region6: #{autoencoder_forward.6} parent=0 // loop_footer
    %s13 = sadd.s32 1, %s9
  $region7: #{autoencoder_forward.6} parent=0 // loop_footer_branch
    %8 = sbr.rel target = $region3
  $region8: #{autoencoder_forward.6} parent=0 // loop_exit
    _

// kernel: autoencoder_forward.8
$region0: #{autoencoder_forward.8}
  #allocation0 [shape = 'u32[]', space=smem, size = 0x4, offset = 0x4, fixed_abs, tag = 'smem constant byte address 0x4 - core index']
  #allocation1 [shape = 'u32[144,128]{1,0:T(1,128)}', space=vmem, size = 0x12000, scoped, tag = 'internal scratch']
  %s0 = inlined_call_operand.vmem [shape: bf16[4,64,16], index: 0, kind: input, shape index: {}]
  %s1 = inlined_call_operand.vmem [shape: f32[64,1], index: 1, kind: input, shape index: {}]
  %s2 = inlined_call_operand.vmem [shape: bf16[2,16,11], index: 2, kind: input, shape index: {}]
  %s3 = inlined_call_operand.vmem [shape: bf16[2,64,8], index: 3, kind: output, shape index: {}]
  %s4 = sld [smem:[#allocation0]]
  $region45: #{autoencoder_forward.8} parent=0
    _
  %s6 = ssub.s32 1, %s4
  %s7 = scalar_select 0, %s6, %s4
  loop: start=0, step=1, limit=4
  $region2: #{autoencoder_forward.8} parent=0 // loop_pre_header
    _
  $region3: #{autoencoder_forward.8} parent=0 // loop_header
    %s9 = sphi 0, %s13
    %p10 = scmp.ge.s32.totalorder %s9, 4
    %s17 = sphi 0, %s17
    %s19 = sphi 0, %s17
    %s20 = sphi 0, %s19
    %s34 = sphi 0, %s20
    %s38 = sphi 0, %s38
    %s40 = sphi 0, %s38
    %s41 = sphi 0, %s40
    %s55 = sphi 0, %s41
    %s61 = sphi 0, %s63
    %s64 = sphi 0, %s61
    %s65 = sphi 0, %s64
    %s81 = sphi 0, %s65
    %s87 = sphi 0, %s89
    %s90 = sphi 0, %s87
    %s91 = sphi 0, %s90
    %s107 = sphi 0, %s91
  $region4: #{autoencoder_forward.8} parent=0 // loop_header_branch
    %12 = sbr.rel (%p10) target = $region8
  $region5: #{autoencoder_forward.8} parent=0 // loop_body
    %s14 = ssub.s32 %s9, 1
    %s15 = ssub.s32 %s9, 2
    %s16 = sadd.s32 %s9, 1
    %s18 = sadd.s32 %s17, 1
    %p21 = scmp.eq.s32.totalorder %s9, 1
    %p22 = scmp.ne.s32.totalorder %s17, %s19
    %p23 = scmp.eq.s32.totalorder %s9, 0
    %p24 = por %p22, %p23
    %p25 = scmp.ne.s32.totalorder %s17, %s19
    %p26 = scmp.eq.s32.totalorder %s14, 1
    %p27 = por %p25, %p26
    %p28 = scmp.ne.s32.totalorder %s19, %s20
    %p29 = scmp.eq.s32.totalorder %s14, 0
    %p30 = por %p28, %p29
    %p31 = scmp.ne.s32.totalorder %s19, %s20
    %p32 = scmp.eq.s32.totalorder %s15, 1
    %p33 = por %p31, %p32
    %p35 = scmp.ne.s32.totalorder %s20, %s34
    %p36 = scmp.eq.s32.totalorder %s15, 0
    %p37 = por %p35, %p36
    %s39 = sadd.s32 %s38, 1
    %p42 = scmp.eq.s32.totalorder %s9, 1
    %p43 = scmp.ne.s32.totalorder %s38, %s40
    %p44 = scmp.eq.s32.totalorder %s9, 0
    %p45 = por %p43, %p44
    %p46 = scmp.ne.s32.totalorder %s38, %s40
    %p47 = scmp.eq.s32.totalorder %s14, 1
    %p48 = por %p46, %p47
    %p49 = scmp.ne.s32.totalorder %s40, %s41
    %p50 = scmp.eq.s32.totalorder %s14, 0
    %p51 = por %p49, %p50
    %p52 = scmp.ne.s32.totalorder %s40, %s41
    %p53 = scmp.eq.s32.totalorder %s15, 1
    %p54 = por %p52, %p53
    %p56 = scmp.ne.s32.totalorder %s41, %s55
    %p57 = scmp.eq.s32.totalorder %s15, 0
    %p58 = por %p56, %p57
    %s59 = ssub.s32 %s9, %s16
    %p60 = scmp.eq.s32.totalorder %s59, 0
    %s62 = sadd.s32 %s61, 1
    %s63 = scalar_select %p60, %s61, %s62
    %p66 = pneg %p60
    %p67 = scmp.eq.s32.totalorder %s9, 1
    %p68 = por %p66, %p67
    %p69 = scmp.ne.s32.totalorder %s61, %s64
    %p70 = scmp.eq.s32.totalorder %s9, 0
    %p71 = por %p69, %p70
    %p72 = scmp.ne.s32.totalorder %s61, %s64
    %p73 = scmp.eq.s32.totalorder %s14, 1
    %p74 = por %p72, %p73
    %p75 = scmp.ne.s32.totalorder %s64, %s65
    %p76 = scmp.eq.s32.totalorder %s14, 0
    %p77 = por %p75, %p76
    %p78 = scmp.ne.s32.totalorder %s64, %s65
    %p79 = scmp.eq.s32.totalorder %s15, 1
    %p80 = por %p78, %p79
    %p82 = scmp.ne.s32.totalorder %s65, %s81
    %p83 = scmp.eq.s32.totalorder %s15, 0
    %p84 = por %p82, %p83
    %s85 = ssub.s32 %s9, %s16
    %p86 = scmp.eq.s32.totalorder %s85, 0
    %s88 = sadd.s32 %s87, 1
    %s89 = scalar_select %p86, %s87, %s88
    %p92 = pneg %p86
    %p93 = scmp.eq.s32.totalorder %s9, 1
    %p94 = por %p92, %p93
    %p95 = scmp.ne.s32.totalorder %s87, %s90
    %p96 = scmp.eq.s32.totalorder %s9, 0
    %p97 = por %p95, %p96
    %p98 = scmp.ne.s32.totalorder %s87, %s90
    %p99 = scmp.eq.s32.totalorder %s14, 1
    %p100 = por %p98, %p99
    %p101 = scmp.ne.s32.totalorder %s90, %s91
    %p102 = scmp.eq.s32.totalorder %s14, 0
    %p103 = por %p101, %p102
    %p104 = scmp.ne.s32.totalorder %s90, %s91
    %p105 = scmp.eq.s32.totalorder %s15, 1
    %p106 = por %p104, %p105
    %p108 = scmp.ne.s32.totalorder %s91, %s107
    %p109 = scmp.eq.s32.totalorder %s15, 0
    %p110 = por %p108, %p109
    %p111 = scmp.le.s32.totalorder 1, %s9
    %p112 = scmp.lt.s32.totalorder %s9, 3
    %p113 = pnand %p111, %p112
    %p114 = pneg %p113
    // Predicated region
    $region9: #{autoencoder_forward.8} parent=5 // pred_check
      _
    $region10: #{autoencoder_forward.8} parent=5 // pred_check_branch
      %116 = sbr.rel (%p113) target = $region12
    $region11: #{autoencoder_forward.8} parent=5 // pred_region
      %s117 = ssub.s32 %s9, 1
      // Predicated region
      $region13: #{autoencoder_forward.8} parent=11 // pred_check
        %p118 = pneg %p30
      $region14: #{autoencoder_forward.8} parent=11 // pred_check_branch
        %120 = sbr.rel (%p118) target = $region16
      $region15: #{autoencoder_forward.8} parent=11 // pred_region
        _
      $region16: #{autoencoder_forward.8} parent=11 // pred_fallthru
        _
      // Predicated region
      $region17: #{autoencoder_forward.8} parent=11 // pred_check
        %p121 = pneg %p51
      $region18: #{autoencoder_forward.8} parent=11 // pred_check_branch
        %123 = sbr.rel (%p121) target = $region20
      $region19: #{autoencoder_forward.8} parent=11 // pred_region
        _
      $region20: #{autoencoder_forward.8} parent=11 // pred_fallthru
        _
    $region12: #{autoencoder_forward.8} parent=5 // pred_fallthru
      _
    %p124 = scmp.lt.s32.totalorder %s9, 2
    // Predicated region
    $region21: #{autoencoder_forward.8} parent=5 // pred_check
      %p125 = pneg %p124
    $region22: #{autoencoder_forward.8} parent=5 // pred_check_branch
      %127 = sbr.rel (%p125) target = $region24
    $region23: #{autoencoder_forward.8} parent=5 // pred_region
      // Predicated region
      $region25: #{autoencoder_forward.8} parent=23 // pred_check
        %p128 = pneg %p71
      $region26: #{autoencoder_forward.8} parent=23 // pred_check_branch
        %130 = sbr.rel (%p128) target = $region28
      $region27: #{autoencoder_forward.8} parent=23 // pred_region
        %p131 = scmp.lt.s32.totalorder %s9, 1
        %s132 = scalar_select %p131, %s9, 1
        %s133 = smul.addr %s132, 2
        %s134 = smul.addr %s133, 4
        %s135 = scalar_lea.vmem %s2, %s134
      $region28: #{autoencoder_forward.8} parent=23 // pred_fallthru
        _
    $region24: #{autoencoder_forward.8} parent=5 // pred_fallthru
      _
    %p136 = scmp.le.s32.totalorder 1, %s9
    %p137 = scmp.lt.s32.totalorder %s9, 3
    %p138 = pnand %p136, %p137
    %p139 = pneg %p138
    // Predicated region
    $region29: #{autoencoder_forward.8} parent=5 // pred_check
      _
    $region30: #{autoencoder_forward.8} parent=5 // pred_check_branch
      %141 = sbr.rel (%p138) target = $region32
    $region31: #{autoencoder_forward.8} parent=5 // pred_region
      %s142 = ssub.s32 %s9, 1
      %p143 = pneg %p30
      %p144 = pneg %p27
      %p145 = pneg %p51
      %p146 = pneg %p48
      %p147 = scmp.lt.s32.totalorder %s14, 1
      %s148 = scalar_select %p147, %s14, 1
      %s149 = smul.addr %s148, 2
      %s150 = smul.addr %s149, 4
      %s151 = scalar_lea.vmem %s2, %s150
      %p152 = pneg %p77
      %p153 = pneg %p74
      %p154 = pneg %p103
      %p155 = pneg %p100
      %p156 = scmp.lt.s32.totalorder %s14, 1
      %s157 = scalar_select %p156, %s14, 1
      %s158 = smul.addr %s157, 8
      %s159 = smul.addr %s158, 4
      %s160 = scalar_lea.vmem %s3, %s159
      %p161 = scmp.lt.s32.totalorder %s14, 1
      %s162 = scalar_select %p161, %s14, 1
      %s163 = smul.addr %s162, 2
      %s164 = smul.addr %s163, 4
      %s165 = scalar_lea.vmem %s2, %s164
      %p166 = scmp.lt.s32.totalorder %s14, 1
      %s167 = scalar_select %p166, %s14, 1
      %s168 = smul.addr %s167, 8
      %s169 = smul.addr %s168, 4
      %s170 = scalar_lea.vmem %s3, %s169
      %v171 = vld [vmem:[%s0] sm:$0xf]
      %v172 = vld [vmem:[%s0 + $0x4] sm:$0xf]
      %v173 = vld [vmem:[%s0 + $0x8] sm:$0xf]
      %v174 = vld [vmem:[%s0 + $0xc] sm:$0xf]
      %v175 = vld [vmem:[%s0 + $0x10] sm:$0xf]
      %v176 = vld [vmem:[%s0 + $0x14] sm:$0xf]
      %v177 = vld [vmem:[%s0 + $0x18] sm:$0xf]
      %v178 = vld [vmem:[%s0 + $0x1c] sm:$0xf]
      %v179 = vunpack.c.l.bf16 %v171
      %v180 = vunpack.c.l.bf16 %v172
      %v181 = vunpack.c.l.bf16 %v173
      %v182 = vunpack.c.l.bf16 %v174
      %v183 = vunpack.c.l.bf16 %v175
      %v184 = vunpack.c.l.bf16 %v176
      %v185 = vunpack.c.l.bf16 %v177
      %v186 = vunpack.c.l.bf16 %v178
      %v187 = vld [vmem:[%s165] sm:$0xf]
      %v188 = vld [vmem:[%s165 + $0x4] sm:$0xf]
      %v189 = vunpack.c.l.bf16 %v187
      %v190 = vunpack.c.l.bf16 %v188
      %s191 = scalar_lea.vmem %s0, 32
      %v192 = vld [vmem:[%s191] sm:$0xf]
      %v193 = vld [vmem:[%s191 + $0x4] sm:$0xf]
      %v194 = vld [vmem:[%s191 + $0x8] sm:$0xf]
      %v195 = vld [vmem:[%s191 + $0xc] sm:$0xf]
      %v196 = vld [vmem:[%s191 + $0x10] sm:$0xf]
      %v197 = vld [vmem:[%s191 + $0x14] sm:$0xf]
      %v198 = vld [vmem:[%s191 + $0x18] sm:$0xf]
      %v199 = vld [vmem:[%s191 + $0x1c] sm:$0xf]
      %v200 = vunpack.c.l.bf16 %v192
      %v201 = vunpack.c.l.bf16 %v193
      %v202 = vunpack.c.l.bf16 %v194
      %v203 = vunpack.c.l.bf16 %v195
      %v204 = vunpack.c.l.bf16 %v196
      %v205 = vunpack.c.l.bf16 %v197
      %v206 = vunpack.c.l.bf16 %v198
      %v207 = vunpack.c.l.bf16 %v199
      %210 = vrot.lane.b32.xlu0 %v189, 127
      %v211 = vpop.permute.xlu0 %210
      %212 = vrot.lane.b32.xlu0 %v190, 127
      %v213 = vpop.permute.xlu0 %212
      %vm216 = vcmask 130048
      %v218 = vsel %vm216, %v200, 0
      %v221 = vsel %vm216, %v201, 0
      %v224 = vsel %vm216, %v202, 0
      %v227 = vsel %vm216, %v203, 0
      %v230 = vsel %vm216, %v204, 0
      %v233 = vsel %vm216, %v205, 0
      %v236 = vsel %vm216, %v206, 0
      %v239 = vsel %vm216, %v207, 0
      %241 = vmatprep.subr.mxu0 0.0
      %242 = vmatpush1.msra.mxu0 0.0
      %243 = vmatprep.subr.mxu0 0.0
      %244 = vmatpush1.msra.mxu0 0.0
      %245 = vmatprep.subr.mxu0 0.0
      %246 = vmatpush1.msra.mxu0 0.0
      %247 = vmatprep.subr.mxu0 0.0
      %248 = vmatpush1.msra.mxu0 0.0
      %249 = vmatprep.subr.mxu0 0.0
      %250 = vmatpush1.msra.mxu0 0.0
      %251 = vmatprep.subr.mxu0 0.0
      %252 = vmatpush1.msra.mxu0 0.0
      %253 = vmatprep.subr.mxu0 0.0
      %254 = vmatpush1.msra.mxu0 0.0
      %255 = vmatprep.subr.mxu0 0.0
      %256 = vmatpush1.msra.mxu0 0.0
      %257 = vmatprep.subr.mxu0 0.0
      %258 = vmatpush1.msra.mxu0 0.0
      %259 = vmatprep.subr.mxu0 0.0
      %260 = vmatpush1.msra.mxu0 0.0
      %261 = vmatprep.subr.mxu0 0.0
      %262 = vmatpush1.msra.mxu0 0.0
      %263 = vmatprep.subr.mxu0 0.0
      %264 = vmatpush1.msra.mxu0 0.0
      %265 = vmatprep.subr.mxu0 0.0
      %266 = vmatpush1.msra.mxu0 0.0
      %267 = vmatprep.subr.mxu0 0.0
      %268 = vmatpush1.msra.mxu0 0.0
      %269 = vmatprep.subr.mxu0 0.0
      %270 = vmatpush1.msra.mxu0 %v213
      %271 = vmatprep.subr.mxu0 0.0
      %272 = vmatpush1.msra.mxu0 %v211
      %273 = vmatprep.subr.mxu0 0.0
      %274 = vmatpush2.msra.mxu0 0.0
      %275 = vmatprep.subr.mxu0 0.0
      %276 = vmatpush2.msra.mxu0 0.0
      %277 = vmatprep.subr.mxu0 0.0
      %278 = vmatpush2.msra.mxu0 0.0
      %279 = vmatprep.subr.mxu0 0.0
      %280 = vmatpush2.msra.mxu0 0.0
      %281 = vmatprep.subr.mxu0 0.0
      %282 = vmatpush2.msra.mxu0 0.0
      %283 = vmatprep.subr.mxu0 0.0
      %284 = vmatpush2.msra.mxu0 0.0
      %285 = vmatprep.subr.mxu0 0.0
      %286 = vmatpush2.msra.mxu0 0.0
      %287 = vmatprep.subr.mxu0 0.0
      %288 = vmatpush2.msra.mxu0 0.0
      %289 = vmatprep.subr.mxu0 0.0
      %290 = vmatpush2.msra.mxu0 0.0
      %291 = vmatprep.subr.mxu0 0.0
      %292 = vmatpush2.msra.mxu0 0.0
      %293 = vmatprep.subr.mxu0 0.0
      %294 = vmatpush2.msra.mxu0 0.0
      %295 = vmatprep.subr.mxu0 0.0
      %296 = vmatpush2.msra.mxu0 0.0
      %297 = vmatprep.subr.mxu0 0.0
      %298 = vmatpush2.msra.mxu0 0.0
      %299 = vmatprep.subr.mxu0 0.0
      %300 = vmatpush2.msra.mxu0 0.0
      %301 = vmatprep.subr.mxu0 0.0
      %302 = vmatpush2.msra.mxu0 0.0
      %303 = vmatprep.subr.mxu0 0.0
      %304 = vmatpush2.msra.mxu0 0.0
      %305 = vmatprep.mubr.f32.mxu0 0.0
      %306 = vmatmul.mubr.f32.gmra.mxu0 %v218
      %v307 = vpop.f32.mrf.mxu0
      %v308 = vadd.f32 0.0, %v307
      %v309 = vpop.f32.mrf.mxu0
      %310 = vmatprep.mubr.f32.mxu0 0.0
      %311 = vmatmul.mubr.f32.gmra.mxu0 %v221
      %v312 = vpop.f32.mrf.mxu0
      %v313 = vadd.f32 0.0, %v312
      %v314 = vpop.f32.mrf.mxu0
      %315 = vmatprep.mubr.f32.mxu0 0.0
      %316 = vmatmul.mubr.f32.gmra.mxu0 %v224
      %v317 = vpop.f32.mrf.mxu0
      %v318 = vadd.f32 0.0, %v317
      %v319 = vpop.f32.mrf.mxu0
      %320 = vmatprep.mubr.f32.mxu0 0.0
      %321 = vmatmul.mubr.f32.gmra.mxu0 %v227
      %v322 = vpop.f32.mrf.mxu0
      %v323 = vadd.f32 0.0, %v322
      %v324 = vpop.f32.mrf.mxu0
      %325 = vmatprep.mubr.f32.mxu0 0.0
      %326 = vmatmul.mubr.f32.gmra.mxu0 %v230
      %v327 = vpop.f32.mrf.mxu0
      %v328 = vadd.f32 0.0, %v327
      %v329 = vpop.f32.mrf.mxu0
      %330 = vmatprep.mubr.f32.mxu0 0.0
      %331 = vmatmul.mubr.f32.gmra.mxu0 %v233
      %v332 = vpop.f32.mrf.mxu0
      %v333 = vadd.f32 0.0, %v332
      %v334 = vpop.f32.mrf.mxu0
      %335 = vmatprep.mubr.f32.mxu0 0.0
      %336 = vmatmul.mubr.f32.gmra.mxu0 %v236
      %v337 = vpop.f32.mrf.mxu0
      %v338 = vadd.f32 0.0, %v337
      %v339 = vpop.f32.mrf.mxu0
      %340 = vmatprep.mubr.f32.mxu0 0.0
      %341 = vmatmul.mubr.f32.gmra.mxu0 %v239
      %v342 = vpop.f32.mrf.mxu0
      %v343 = vadd.f32 0.0, %v342
      %v344 = vpop.f32.mrf.mxu0
      %345 = vdwg.mxu0
      %v347 = vsel %vm216, %v179, 0
      %v350 = vsel %vm216, %v180, 0
      %v353 = vsel %vm216, %v181, 0
      %v356 = vsel %vm216, %v182, 0
      %v359 = vsel %vm216, %v183, 0
      %v362 = vsel %vm216, %v184, 0
      %v365 = vsel %vm216, %v185, 0
      %v368 = vsel %vm216, %v186, 0
      %370 = vmatprep.subr.mxu0 0.0
      %371 = vmatpush1.msra.mxu0 0.0
      %372 = vmatprep.subr.mxu0 0.0
      %373 = vmatpush1.msra.mxu0 0.0
      %374 = vmatprep.subr.mxu0 0.0
      %375 = vmatpush1.msra.mxu0 0.0
      %376 = vmatprep.subr.mxu0 0.0
      %377 = vmatpush1.msra.mxu0 0.0
      %378 = vmatprep.subr.mxu0 0.0
      %379 = vmatpush1.msra.mxu0 0.0
      %380 = vmatprep.subr.mxu0 0.0
      %381 = vmatpush1.msra.mxu0 0.0
      %382 = vmatprep.subr.mxu0 0.0
      %383 = vmatpush1.msra.mxu0 0.0
      %384 = vmatprep.subr.mxu0 0.0
      %385 = vmatpush1.msra.mxu0 0.0
      %386 = vmatprep.subr.mxu0 0.0
      %387 = vmatpush1.msra.mxu0 0.0
      %388 = vmatprep.subr.mxu0 0.0
      %389 = vmatpush1.msra.mxu0 0.0
      %390 = vmatprep.subr.mxu0 0.0
      %391 = vmatpush1.msra.mxu0 0.0
      %392 = vmatprep.subr.mxu0 0.0
      %393 = vmatpush1.msra.mxu0 0.0
      %394 = vmatprep.subr.mxu0 0.0
      %395 = vmatpush1.msra.mxu0 0.0
      %396 = vmatprep.subr.mxu0 0.0
      %397 = vmatpush1.msra.mxu0 0.0
      %398 = vmatprep.subr.mxu0 0.0
      %399 = vmatpush1.msra.mxu0 %v190
      %400 = vmatprep.subr.mxu0 0.0
      %401 = vmatpush1.msra.mxu0 %v189
      %402 = vmatprep.subr.mxu0 0.0
      %403 = vmatpush2.msra.mxu0 0.0
      %404 = vmatprep.subr.mxu0 0.0
      %405 = vmatpush2.msra.mxu0 0.0
      %406 = vmatprep.subr.mxu0 0.0
      %407 = vmatpush2.msra.mxu0 0.0
      %408 = vmatprep.subr.mxu0 0.0
      %409 = vmatpush2.msra.mxu0 0.0
      %410 = vmatprep.subr.mxu0 0.0
      %411 = vmatpush2.msra.mxu0 0.0
      %412 = vmatprep.subr.mxu0 0.0
      %413 = vmatpush2.msra.mxu0 0.0
      %414 = vmatprep.subr.mxu0 0.0
      %415 = vmatpush2.msra.mxu0 0.0
      %416 = vmatprep.subr.mxu0 0.0
      %417 = vmatpush2.msra.mxu0 0.0
      %418 = vmatprep.subr.mxu0 0.0
      %419 = vmatpush2.msra.mxu0 0.0
      %420 = vmatprep.subr.mxu0 0.0
      %421 = vmatpush2.msra.mxu0 0.0
      %422 = vmatprep.subr.mxu0 0.0
      %423 = vmatpush2.msra.mxu0 0.0
      %424 = vmatprep.subr.mxu0 0.0
      %425 = vmatpush2.msra.mxu0 0.0
      %426 = vmatprep.subr.mxu0 0.0
      %427 = vmatpush2.msra.mxu0 0.0
      %428 = vmatprep.subr.mxu0 0.0
      %429 = vmatpush2.msra.mxu0 0.0
      %430 = vmatprep.subr.mxu0 0.0
      %431 = vmatpush2.msra.mxu0 0.0
      %432 = vmatprep.subr.mxu0 0.0
      %433 = vmatpush2.msra.mxu0 0.0
      %434 = vmatprep.mubr.f32.mxu0 0.0
      %435 = vmatmul.mubr.f32.gmra.mxu0 %v347
      %v436 = vpop.f32.mrf.mxu0
      %v437 = vadd.f32 %v308, %v436
      %v438 = vpop.f32.mrf.mxu0
      %439 = vmatprep.mubr.f32.mxu0 0.0
      %440 = vmatmul.mubr.f32.gmra.mxu0 %v350
      %v441 = vpop.f32.mrf.mxu0
      %v442 = vadd.f32 %v313, %v441
      %v443 = vpop.f32.mrf.mxu0
      %444 = vmatprep.mubr.f32.mxu0 0.0
      %445 = vmatmul.mubr.f32.gmra.mxu0 %v353
      %v446 = vpop.f32.mrf.mxu0
      %v447 = vadd.f32 %v318, %v446
      %v448 = vpop.f32.mrf.mxu0
      %449 = vmatprep.mubr.f32.mxu0 0.0
      %450 = vmatmul.mubr.f32.gmra.mxu0 %v356
      %v451 = vpop.f32.mrf.mxu0
      %v452 = vadd.f32 %v323, %v451
      %v453 = vpop.f32.mrf.mxu0
      %454 = vmatprep.mubr.f32.mxu0 0.0
      %455 = vmatmul.mubr.f32.gmra.mxu0 %v359
      %v456 = vpop.f32.mrf.mxu0
      %v457 = vadd.f32 %v328, %v456
      %v458 = vpop.f32.mrf.mxu0
      %459 = vmatprep.mubr.f32.mxu0 0.0
      %460 = vmatmul.mubr.f32.gmra.mxu0 %v362
      %v461 = vpop.f32.mrf.mxu0
      %v462 = vadd.f32 %v333, %v461
      %v463 = vpop.f32.mrf.mxu0
      %464 = vmatprep.mubr.f32.mxu0 0.0
      %465 = vmatmul.mubr.f32.gmra.mxu0 %v365
      %v466 = vpop.f32.mrf.mxu0
      %v467 = vadd.f32 %v338, %v466
      %v468 = vpop.f32.mrf.mxu0
      %469 = vmatprep.mubr.f32.mxu0 0.0
      %470 = vmatmul.mubr.f32.gmra.mxu0 %v368
      %v471 = vpop.f32.mrf.mxu0
      %v472 = vadd.f32 %v343, %v471
      %v473 = vpop.f32.mrf.mxu0
      %474 = vdwg.mxu0
      %s475 = scalar_lea.vmem %s0, 64
      %v476 = vld [vmem:[%s475] sm:$0xf]
      %v477 = vld [vmem:[%s475 + $0x4] sm:$0xf]
      %v478 = vld [vmem:[%s475 + $0x8] sm:$0xf]
      %v479 = vld [vmem:[%s475 + $0xc] sm:$0xf]
      %v480 = vld [vmem:[%s475 + $0x10] sm:$0xf]
      %v481 = vld [vmem:[%s475 + $0x14] sm:$0xf]
      %v482 = vld [vmem:[%s475 + $0x18] sm:$0xf]
      %v483 = vld [vmem:[%s475 + $0x1c] sm:$0xf]
      %v484 = vunpack.c.l.bf16 %v476
      %v485 = vunpack.c.l.bf16 %v477
      %v486 = vunpack.c.l.bf16 %v478
      %v487 = vunpack.c.l.bf16 %v479
      %v488 = vunpack.c.l.bf16 %v480
      %v489 = vunpack.c.l.bf16 %v481
      %v490 = vunpack.c.l.bf16 %v482
      %v491 = vunpack.c.l.bf16 %v483
      %492 = vrot.lane.b32.xlu0 %v189, 126
      %v493 = vpop.permute.xlu0 %492
      %494 = vrot.lane.b32.xlu0 %v190, 126
      %v495 = vpop.permute.xlu0 %494
      %v499 = vsel %vm216, %v484, 0
      %v502 = vsel %vm216, %v485, 0
      %v505 = vsel %vm216, %v486, 0
      %v508 = vsel %vm216, %v487, 0
      %v511 = vsel %vm216, %v488, 0
      %v514 = vsel %vm216, %v489, 0
      %v517 = vsel %vm216, %v490, 0
      %v520 = vsel %vm216, %v491, 0
      %522 = vmatprep.subr.mxu0 0.0
      %523 = vmatpush1.msra.mxu0 0.0
      %524 = vmatprep.subr.mxu0 0.0
      %525 = vmatpush1.msra.mxu0 0.0
      %526 = vmatprep.subr.mxu0 0.0
      %527 = vmatpush1.msra.mxu0 0.0
      %528 = vmatprep.subr.mxu0 0.0
      %529 = vmatpush1.msra.mxu0 0.0
      %530 = vmatprep.subr.mxu0 0.0
      %531 = vmatpush1.msra.mxu0 0.0
      %532 = vmatprep.subr.mxu0 0.0
      %533 = vmatpush1.msra.mxu0 0.0
      %534 = vmatprep.subr.mxu0 0.0
      %535 = vmatpush1.msra.mxu0 0.0
      %536 = vmatprep.subr.mxu0 0.0
      %537 = vmatpush1.msra.mxu0 0.0
      %538 = vmatprep.subr.mxu0 0.0
      %539 = vmatpush1.msra.mxu0 0.0
      %540 = vmatprep.subr.mxu0 0.0
      %541 = vmatpush1.msra.mxu0 0.0
      %542 = vmatprep.subr.mxu0 0.0
      %543 = vmatpush1.msra.mxu0 0.0
      %544 = vmatprep.subr.mxu0 0.0
      %545 = vmatpush1.msra.mxu0 0.0
      %546 = vmatprep.subr.mxu0 0.0
      %547 = vmatpush1.msra.mxu0 0.0
      %548 = vmatprep.subr.mxu0 0.0
      %549 = vmatpush1.msra.mxu0 0.0
      %550 = vmatprep.subr.mxu0 0.0
      %551 = vmatpush1.msra.mxu0 %v495
      %552 = vmatprep.subr.mxu0 0.0
      %553 = vmatpush1.msra.mxu0 %v493
      %554 = vmatprep.subr.mxu0 0.0
      %555 = vmatpush2.msra.mxu0 0.0
      %556 = vmatprep.subr.mxu0 0.0
      %557 = vmatpush2.msra.mxu0 0.0
      %558 = vmatprep.subr.mxu0 0.0
      %559 = vmatpush2.msra.mxu0 0.0
      %560 = vmatprep.subr.mxu0 0.0
      %561 = vmatpush2.msra.mxu0 0.0
      %562 = vmatprep.subr.mxu0 0.0
      %563 = vmatpush2.msra.mxu0 0.0
      %564 = vmatprep.subr.mxu0 0.0
      %565 = vmatpush2.msra.mxu0 0.0
      %566 = vmatprep.subr.mxu0 0.0
      %567 = vmatpush2.msra.mxu0 0.0
      %568 = vmatprep.subr.mxu0 0.0
      %569 = vmatpush2.msra.mxu0 0.0
      %570 = vmatprep.subr.mxu0 0.0
      %571 = vmatpush2.msra.mxu0 0.0
      %572 = vmatprep.subr.mxu0 0.0
      %573 = vmatpush2.msra.mxu0 0.0
      %574 = vmatprep.subr.mxu0 0.0
      %575 = vmatpush2.msra.mxu0 0.0
      %576 = vmatprep.subr.mxu0 0.0
      %577 = vmatpush2.msra.mxu0 0.0
      %578 = vmatprep.subr.mxu0 0.0
      %579 = vmatpush2.msra.mxu0 0.0
      %580 = vmatprep.subr.mxu0 0.0
      %581 = vmatpush2.msra.mxu0 0.0
      %582 = vmatprep.subr.mxu0 0.0
      %583 = vmatpush2.msra.mxu0 0.0
      %584 = vmatprep.subr.mxu0 0.0
      %585 = vmatpush2.msra.mxu0 0.0
      %586 = vmatprep.mubr.f32.mxu0 0.0
      %587 = vmatmul.mubr.f32.gmra.mxu0 %v499
      %v588 = vpop.f32.mrf.mxu0
      %v589 = vadd.f32 0.0, %v588
      %v590 = vpop.f32.mrf.mxu0
      %591 = vmatprep.mubr.f32.mxu0 0.0
      %592 = vmatmul.mubr.f32.gmra.mxu0 %v502
      %v593 = vpop.f32.mrf.mxu0
      %v594 = vadd.f32 0.0, %v593
      %v595 = vpop.f32.mrf.mxu0
      %596 = vmatprep.mubr.f32.mxu0 0.0
      %597 = vmatmul.mubr.f32.gmra.mxu0 %v505
      %v598 = vpop.f32.mrf.mxu0
      %v599 = vadd.f32 0.0, %v598
      %v600 = vpop.f32.mrf.mxu0
      %601 = vmatprep.mubr.f32.mxu0 0.0
      %602 = vmatmul.mubr.f32.gmra.mxu0 %v508
      %v603 = vpop.f32.mrf.mxu0
      %v604 = vadd.f32 0.0, %v603
      %v605 = vpop.f32.mrf.mxu0
      %606 = vmatprep.mubr.f32.mxu0 0.0
      %607 = vmatmul.mubr.f32.gmra.mxu0 %v511
      %v608 = vpop.f32.mrf.mxu0
      %v609 = vadd.f32 0.0, %v608
      %v610 = vpop.f32.mrf.mxu0
      %611 = vmatprep.mubr.f32.mxu0 0.0
      %612 = vmatmul.mubr.f32.gmra.mxu0 %v514
      %v613 = vpop.f32.mrf.mxu0
      %v614 = vadd.f32 0.0, %v613
      %v615 = vpop.f32.mrf.mxu0
      %616 = vmatprep.mubr.f32.mxu0 0.0
      %617 = vmatmul.mubr.f32.gmra.mxu0 %v517
      %v618 = vpop.f32.mrf.mxu0
      %v619 = vadd.f32 0.0, %v618
      %v620 = vpop.f32.mrf.mxu0
      %621 = vmatprep.mubr.f32.mxu0 0.0
      %622 = vmatmul.mubr.f32.gmra.mxu0 %v520
      %v623 = vpop.f32.mrf.mxu0
      %v624 = vadd.f32 0.0, %v623
      %v625 = vpop.f32.mrf.mxu0
      %626 = vdwg.mxu0
      %v627 = vadd.f32 %v437, %v589
      %v628 = vadd.f32 %v442, %v594
      %v629 = vadd.f32 %v447, %v599
      %v630 = vadd.f32 %v452, %v604
      %v631 = vadd.f32 %v457, %v609
      %v632 = vadd.f32 %v462, %v614
      %v633 = vadd.f32 %v467, %v619
      %v634 = vadd.f32 %v472, %v624
      %s635 = scalar_lea.vmem %s0, 96
      %v636 = vld [vmem:[%s635] sm:$0xf]
      %v637 = vld [vmem:[%s635 + $0x4] sm:$0xf]
      %v638 = vld [vmem:[%s635 + $0x8] sm:$0xf]
      %v639 = vld [vmem:[%s635 + $0xc] sm:$0xf]
      %v640 = vld [vmem:[%s635 + $0x10] sm:$0xf]
      %v641 = vld [vmem:[%s635 + $0x14] sm:$0xf]
      %v642 = vld [vmem:[%s635 + $0x18] sm:$0xf]
      %v643 = vld [vmem:[%s635 + $0x1c] sm:$0xf]
      %v644 = vunpack.c.l.bf16 %v636
      %v645 = vunpack.c.l.bf16 %v637
      %v646 = vunpack.c.l.bf16 %v638
      %v647 = vunpack.c.l.bf16 %v639
      %v648 = vunpack.c.l.bf16 %v640
      %v649 = vunpack.c.l.bf16 %v641
      %v650 = vunpack.c.l.bf16 %v642
      %v651 = vunpack.c.l.bf16 %v643
      %652 = vrot.lane.b32.xlu0 %v189, 125
      %v653 = vpop.permute.xlu0 %652
      %654 = vrot.lane.b32.xlu0 %v190, 125
      %v655 = vpop.permute.xlu0 %654
      %v659 = vsel %vm216, %v644, 0
      %v662 = vsel %vm216, %v645, 0
      %v665 = vsel %vm216, %v646, 0
      %v668 = vsel %vm216, %v647, 0
      %v671 = vsel %vm216, %v648, 0
      %v674 = vsel %vm216, %v649, 0
      %v677 = vsel %vm216, %v650, 0
      %v680 = vsel %vm216, %v651, 0
      %682 = vmatprep.subr.mxu0 0.0
      %683 = vmatpush1.msra.mxu0 0.0
      %684 = vmatprep.subr.mxu0 0.0
      %685 = vmatpush1.msra.mxu0 0.0
      %686 = vmatprep.subr.mxu0 0.0
      %687 = vmatpush1.msra.mxu0 0.0
      %688 = vmatprep.subr.mxu0 0.0
      %689 = vmatpush1.msra.mxu0 0.0
      %690 = vmatprep.subr.mxu0 0.0
      %691 = vmatpush1.msra.mxu0 0.0
      %692 = vmatprep.subr.mxu0 0.0
      %693 = vmatpush1.msra.mxu0 0.0
      %694 = vmatprep.subr.mxu0 0.0
      %695 = vmatpush1.msra.mxu0 0.0
      %696 = vmatprep.subr.mxu0 0.0
      %697 = vmatpush1.msra.mxu0 0.0
      %698 = vmatprep.subr.mxu0 0.0
      %699 = vmatpush1.msra.mxu0 0.0
      %700 = vmatprep.subr.mxu0 0.0
      %701 = vmatpush1.msra.mxu0 0.0
      %702 = vmatprep.subr.mxu0 0.0
      %703 = vmatpush1.msra.mxu0 0.0
      %704 = vmatprep.subr.mxu0 0.0
      %705 = vmatpush1.msra.mxu0 0.0
      %706 = vmatprep.subr.mxu0 0.0
      %707 = vmatpush1.msra.mxu0 0.0
      %708 = vmatprep.subr.mxu0 0.0
      %709 = vmatpush1.msra.mxu0 0.0
      %710 = vmatprep.subr.mxu0 0.0
      %711 = vmatpush1.msra.mxu0 %v655
      %712 = vmatprep.subr.mxu0 0.0
      %713 = vmatpush1.msra.mxu0 %v653
      %714 = vmatprep.subr.mxu0 0.0
      %715 = vmatpush2.msra.mxu0 0.0
      %716 = vmatprep.subr.mxu0 0.0
      %717 = vmatpush2.msra.mxu0 0.0
      %718 = vmatprep.subr.mxu0 0.0
      %719 = vmatpush2.msra.mxu0 0.0
      %720 = vmatprep.subr.mxu0 0.0
      %721 = vmatpush2.msra.mxu0 0.0
      %722 = vmatprep.subr.mxu0 0.0
      %723 = vmatpush2.msra.mxu0 0.0
      %724 = vmatprep.subr.mxu0 0.0
      %725 = vmatpush2.msra.mxu0 0.0
      %726 = vmatprep.subr.mxu0 0.0
      %727 = vmatpush2.msra.mxu0 0.0
      %728 = vmatprep.subr.mxu0 0.0
      %729 = vmatpush2.msra.mxu0 0.0
      %730 = vmatprep.subr.mxu0 0.0
      %731 = vmatpush2.msra.mxu0 0.0
      %732 = vmatprep.subr.mxu0 0.0
      %733 = vmatpush2.msra.mxu0 0.0
      %734 = vmatprep.subr.mxu0 0.0
      %735 = vmatpush2.msra.mxu0 0.0
      %736 = vmatprep.subr.mxu0 0.0
      %737 = vmatpush2.msra.mxu0 0.0
      %738 = vmatprep.subr.mxu0 0.0
      %739 = vmatpush2.msra.mxu0 0.0
      %740 = vmatprep.subr.mxu0 0.0
      %741 = vmatpush2.msra.mxu0 0.0
      %742 = vmatprep.subr.mxu0 0.0
      %743 = vmatpush2.msra.mxu0 0.0
      %744 = vmatprep.subr.mxu0 0.0
      %745 = vmatpush2.msra.mxu0 0.0
      %746 = vmatprep.mubr.f32.mxu0 0.0
      %747 = vmatmul.mubr.f32.gmra.mxu0 %v659
      %v748 = vpop.f32.mrf.mxu0
      %v749 = vadd.f32 0.0, %v748
      %v750 = vpop.f32.mrf.mxu0
      %751 = vmatprep.mubr.f32.mxu0 0.0
      %752 = vmatmul.mubr.f32.gmra.mxu0 %v662
      %v753 = vpop.f32.mrf.mxu0
      %v754 = vadd.f32 0.0, %v753
      %v755 = vpop.f32.mrf.mxu0
      %756 = vmatprep.mubr.f32.mxu0 0.0
      %757 = vmatmul.mubr.f32.gmra.mxu0 %v665
      %v758 = vpop.f32.mrf.mxu0
      %v759 = vadd.f32 0.0, %v758
      %v760 = vpop.f32.mrf.mxu0
      %761 = vmatprep.mubr.f32.mxu0 0.0
      %762 = vmatmul.mubr.f32.gmra.mxu0 %v668
      %v763 = vpop.f32.mrf.mxu0
      %v764 = vadd.f32 0.0, %v763
      %v765 = vpop.f32.mrf.mxu0
      %766 = vmatprep.mubr.f32.mxu0 0.0
      %767 = vmatmul.mubr.f32.gmra.mxu0 %v671
      %v768 = vpop.f32.mrf.mxu0
      %v769 = vadd.f32 0.0, %v768
      %v770 = vpop.f32.mrf.mxu0
      %771 = vmatprep.mubr.f32.mxu0 0.0
      %772 = vmatmul.mubr.f32.gmra.mxu0 %v674
      %v773 = vpop.f32.mrf.mxu0
      %v774 = vadd.f32 0.0, %v773
      %v775 = vpop.f32.mrf.mxu0
      %776 = vmatprep.mubr.f32.mxu0 0.0
      %777 = vmatmul.mubr.f32.gmra.mxu0 %v677
      %v778 = vpop.f32.mrf.mxu0
      %v779 = vadd.f32 0.0, %v778
      %v780 = vpop.f32.mrf.mxu0
      %781 = vmatprep.mubr.f32.mxu0 0.0
      %782 = vmatmul.mubr.f32.gmra.mxu0 %v680
      %v783 = vpop.f32.mrf.mxu0
      %v784 = vadd.f32 0.0, %v783
      %v785 = vpop.f32.mrf.mxu0
      %786 = vdwg.mxu0
      %v787 = vadd.f32 %v627, %v749
      %v788 = vadd.f32 %v628, %v754
      %v789 = vadd.f32 %v629, %v759
      %v790 = vadd.f32 %v630, %v764
      %v791 = vadd.f32 %v631, %v769
      %v792 = vadd.f32 %v632, %v774
      %v793 = vadd.f32 %v633, %v779
      %v794 = vadd.f32 %v634, %v784
      %v795 = vld [vmem:[%s1] sm:$0xff]
      %v796 = vld [vmem:[%s1 + $0x8] sm:$0xff]
      %v797 = vld [vmem:[%s1 + $0x10] sm:$0xff]
      %v798 = vld [vmem:[%s1 + $0x18] sm:$0xff]
      %v799 = vld [vmem:[%s1 + $0x20] sm:$0xff]
      %v800 = vld [vmem:[%s1 + $0x28] sm:$0xff]
      %v801 = vld [vmem:[%s1 + $0x30] sm:$0xff]
      %v802 = vld [vmem:[%s1 + $0x38] sm:$0xff]
      %804 = vset.pattern.permute.xlu0 0
      %805 = vperm.xlu0 %804, %v795
      %v806 = vpop.permute.xlu0 %805
      %809 = vset.pattern.permute.xlu0 0
      %810 = vperm.xlu0 %809, %v796
      %v811 = vpop.permute.xlu0 %810
      %814 = vset.pattern.permute.xlu0 0
      %815 = vperm.xlu0 %814, %v797
      %v816 = vpop.permute.xlu0 %815
      %819 = vset.pattern.permute.xlu0 0
      %820 = vperm.xlu0 %819, %v798
      %v821 = vpop.permute.xlu0 %820
      %824 = vset.pattern.permute.xlu0 0
      %825 = vperm.xlu0 %824, %v799
      %v826 = vpop.permute.xlu0 %825
      %829 = vset.pattern.permute.xlu0 0
      %830 = vperm.xlu0 %829, %v800
      %v831 = vpop.permute.xlu0 %830
      %834 = vset.pattern.permute.xlu0 0
      %835 = vperm.xlu0 %834, %v801
      %v836 = vpop.permute.xlu0 %835
      %839 = vset.pattern.permute.xlu0 0
      %840 = vperm.xlu0 %839, %v802
      %v841 = vpop.permute.xlu0 %840
      %v843 = vadd.f32 %v787, %v806
      %v844 = vadd.f32 %v788, %v811
      %v845 = vadd.f32 %v789, %v816
      %v846 = vadd.f32 %v790, %v821
      %v847 = vadd.f32 %v791, %v826
      %v848 = vadd.f32 %v792, %v831
      %v849 = vadd.f32 %v793, %v836
      %v850 = vadd.f32 %v794, %v841
      %v851 = vmax.f32 %v843, 0.0
      %v852 = vmax.f32 %v844, 0.0
      %v853 = vmax.f32 %v845, 0.0
      %v854 = vmax.f32 %v846, 0.0
      %v855 = vmax.f32 %v847, 0.0
      %v856 = vmax.f32 %v848, 0.0
      %v857 = vmax.f32 %v849, 0.0
      %v858 = vmax.f32 %v850, 0.0
      %v859 = vpack.c.bf16 %v852, %v851
      %v860 = vpack.c.bf16 %v854, %v853
      %v861 = vpack.c.bf16 %v856, %v855
      %v862 = vpack.c.bf16 %v858, %v857
      %v867 = vunpack.c.l.b16 %v859
      %v868 = vunpack.c.h.b16 %v859
      %v869 = vunpack.c.l.b16 %v860
      %v870 = vunpack.c.h.b16 %v860
      %v871 = vunpack.c.l.b16 %v861
      %v872 = vunpack.c.h.b16 %v861
      %v873 = vunpack.c.l.b16 %v862
      %v874 = vunpack.c.h.b16 %v862
      %v875 = vpack.c.b16 %v867, %v867
      %v876 = vpack.c.b16 %v868, %v868
      %v877 = vpack.c.b16 %v869, %v869
      %v878 = vpack.c.b16 %v870, %v870
      %v879 = vpack.c.b16 %v871, %v871
      %v880 = vpack.c.b16 %v872, %v872
      %v881 = vpack.c.b16 %v873, %v873
      %v882 = vpack.c.b16 %v874, %v874
      %vm891 = vcmask 60416
      %892 = vst.msk [vmem:[%s170] sm:$0xf] %vm891, %v875
      %893 = vst.msk [vmem:[%s170 + $0x4] sm:$0xf] %vm891, %v876
      %894 = vst.msk [vmem:[%s170 + $0x8] sm:$0xf] %vm891, %v877
      %895 = vst.msk [vmem:[%s170 + $0xc] sm:$0xf] %vm891, %v878
      %896 = vst.msk [vmem:[%s170 + $0x10] sm:$0xf] %vm891, %v879
      %897 = vst.msk [vmem:[%s170 + $0x14] sm:$0xf] %vm891, %v880
      %898 = vst.msk [vmem:[%s170 + $0x18] sm:$0xf] %vm891, %v881
      %899 = vst.msk [vmem:[%s170 + $0x1c] sm:$0xf] %vm891, %v882
      %p900 = scmp.lt.s32.totalorder %s14, 1
      %s901 = scalar_select %p900, %s14, 1
      %s902 = smul.addr %s901, 8
      %s903 = smul.addr %s902, 4
      %s904 = scalar_lea.vmem %s3, %s903
      // Predicated region
      $region33: #{autoencoder_forward.8} parent=31 // pred_check
        %p905 = pneg %p100
      $region34: #{autoencoder_forward.8} parent=31 // pred_check_branch
        %907 = sbr.rel (%p905) target = $region36
      $region35: #{autoencoder_forward.8} parent=31 // pred_region
        _
      $region36: #{autoencoder_forward.8} parent=31 // pred_fallthru
        _
    $region32: #{autoencoder_forward.8} parent=5 // pred_fallthru
      _
    %p908 = scmp.le.s32.totalorder 2, %s9
    // Predicated region
    $region37: #{autoencoder_forward.8} parent=5 // pred_check
      %p909 = pneg %p908
    $region38: #{autoencoder_forward.8} parent=5 // pred_check_branch
      %911 = sbr.rel (%p909) target = $region40
    $region39: #{autoencoder_forward.8} parent=5 // pred_region
      %s912 = ssub.s32 %s9, 2
      // Predicated region
      $region41: #{autoencoder_forward.8} parent=39 // pred_check
        %p913 = pneg %p106
      $region42: #{autoencoder_forward.8} parent=39 // pred_check_branch
        %915 = sbr.rel (%p913) target = $region44
      $region43: #{autoencoder_forward.8} parent=39 // pred_region
        %p916 = scmp.lt.s32.totalorder %s15, 1
        %s917 = scalar_select %p916, %s15, 1
        %s918 = smul.addr %s917, 8
        %s919 = smul.addr %s918, 4
        %s920 = scalar_lea.vmem %s3, %s919
      $region44: #{autoencoder_forward.8} parent=39 // pred_fallthru
        _
    $region40: #{autoencoder_forward.8} parent=5 // pred_fallthru
      _
  $region6: #{autoencoder_forward.8} parent=0 // loop_footer
    %s13 = sadd.s32 1, %s9
  $region7: #{autoencoder_forward.8} parent=0 // loop_footer_branch
    %8 = sbr.rel target = $region3
  $region8: #{autoencoder_forward.8} parent=0 // loop_exit
    _

// kernel: autoencoder_forward.9
$region0: #{autoencoder_forward.9}
  #allocation0 [shape = 'u32[]', space=smem, size = 0x4, offset = 0x4, fixed_abs, tag = 'smem constant byte address 0x4 - core index']
  #allocation1 [shape = 'u32[144,128]{1,0:T(1,128)}', space=vmem, size = 0x12000, scoped, tag = 'internal scratch']
  %s0 = inlined_call_operand.vmem [shape: bf16[7,4,32], index: 0, kind: input, shape index: {}]
  %s1 = inlined_call_operand.vmem [shape: f32[4,1], index: 1, kind: input, shape index: {}]
  %s2 = inlined_call_operand.vmem [shape: bf16[2,32,22], index: 2, kind: input, shape index: {}]
  %s3 = inlined_call_operand.hbm [shape: f32[2,4,16], index: 3, kind: output, shape index: {}]
  %s4 = sld [smem:[#allocation0]]
  $region45: #{autoencoder_forward.9} parent=0
    _
  %s6 = ssub.s32 1, %s4
  %s7 = scalar_select 0, %s6, %s4
  $region1: #{autoencoder_forward.9} parent=0
    #allocation2 [shape = 'u8[4096]{0}', space=vmem, size = 0x1000, scoped, tag = 'output window, operand 0']
    #allocation3 [shape = 's32[2]{0}', space=sflag, size = 0x8, scoped, tag = 'scoped memory for autoencoder_forward.9']
    %8 = vsyncpa [#allocation3], 0
    %s9 = scalar_lea.sflag [#allocation3], 1
    %10 = vsyncpa %s9, 0
    loop: start=0, step=1, limit=4
    $region2: #{autoencoder_forward.9} parent=1 // loop_pre_header
      _
    $region3: #{autoencoder_forward.9} parent=1 // loop_header
      %s12 = sphi 0, %s16
      %p13 = scmp.ge.s32.totalorder %s12, 4
      %s20 = sphi 0, %s20
      %s22 = sphi 0, %s20
      %s23 = sphi 0, %s22
      %s37 = sphi 0, %s23
      %s41 = sphi 0, %s41
      %s43 = sphi 0, %s41
      %s44 = sphi 0, %s43
      %s58 = sphi 0, %s44
      %s64 = sphi 0, %s66
      %s67 = sphi 0, %s64
      %s68 = sphi 0, %s67
      %s84 = sphi 0, %s68
      %s90 = sphi 0, %s92
      %s93 = sphi 0, %s90
      %s94 = sphi 0, %s93
      %s110 = sphi 0, %s94
    $region4: #{autoencoder_forward.9} parent=1 // loop_header_branch
      %15 = sbr.rel (%p13) target = $region8
    $region5: #{autoencoder_forward.9} parent=1 // loop_body
      %s17 = ssub.s32 %s12, 1
      %s18 = ssub.s32 %s12, 2
      %s19 = sadd.s32 %s12, 1
      %s21 = sadd.s32 %s20, 1
      %p24 = scmp.eq.s32.totalorder %s12, 1
      %p25 = scmp.ne.s32.totalorder %s20, %s22
      %p26 = scmp.eq.s32.totalorder %s12, 0
      %p27 = por %p25, %p26
      %p28 = scmp.ne.s32.totalorder %s20, %s22
      %p29 = scmp.eq.s32.totalorder %s17, 1
      %p30 = por %p28, %p29
      %p31 = scmp.ne.s32.totalorder %s22, %s23
      %p32 = scmp.eq.s32.totalorder %s17, 0
      %p33 = por %p31, %p32
      %p34 = scmp.ne.s32.totalorder %s22, %s23
      %p35 = scmp.eq.s32.totalorder %s18, 1
      %p36 = por %p34, %p35
      %p38 = scmp.ne.s32.totalorder %s23, %s37
      %p39 = scmp.eq.s32.totalorder %s18, 0
      %p40 = por %p38, %p39
      %s42 = sadd.s32 %s41, 1
      %p45 = scmp.eq.s32.totalorder %s12, 1
      %p46 = scmp.ne.s32.totalorder %s41, %s43
      %p47 = scmp.eq.s32.totalorder %s12, 0
      %p48 = por %p46, %p47
      %p49 = scmp.ne.s32.totalorder %s41, %s43
      %p50 = scmp.eq.s32.totalorder %s17, 1
      %p51 = por %p49, %p50
      %p52 = scmp.ne.s32.totalorder %s43, %s44
      %p53 = scmp.eq.s32.totalorder %s17, 0
      %p54 = por %p52, %p53
      %p55 = scmp.ne.s32.totalorder %s43, %s44
      %p56 = scmp.eq.s32.totalorder %s18, 1
      %p57 = por %p55, %p56
      %p59 = scmp.ne.s32.totalorder %s44, %s58
      %p60 = scmp.eq.s32.totalorder %s18, 0
      %p61 = por %p59, %p60
      %s62 = ssub.s32 %s12, %s19
      %p63 = scmp.eq.s32.totalorder %s62, 0
      %s65 = sadd.s32 %s64, 1
      %s66 = scalar_select %p63, %s64, %s65
      %p69 = pneg %p63
      %p70 = scmp.eq.s32.totalorder %s12, 1
      %p71 = por %p69, %p70
      %p72 = scmp.ne.s32.totalorder %s64, %s67
      %p73 = scmp.eq.s32.totalorder %s12, 0
      %p74 = por %p72, %p73
      %p75 = scmp.ne.s32.totalorder %s64, %s67
      %p76 = scmp.eq.s32.totalorder %s17, 1
      %p77 = por %p75, %p76
      %p78 = scmp.ne.s32.totalorder %s67, %s68
      %p79 = scmp.eq.s32.totalorder %s17, 0
      %p80 = por %p78, %p79
      %p81 = scmp.ne.s32.totalorder %s67, %s68
      %p82 = scmp.eq.s32.totalorder %s18, 1
      %p83 = por %p81, %p82
      %p85 = scmp.ne.s32.totalorder %s68, %s84
      %p86 = scmp.eq.s32.totalorder %s18, 0
      %p87 = por %p85, %p86
      %s88 = ssub.s32 %s12, %s19
      %p89 = scmp.eq.s32.totalorder %s88, 0
      %s91 = sadd.s32 %s90, 1
      %s92 = scalar_select %p89, %s90, %s91
      %p95 = pneg %p89
      %p96 = scmp.eq.s32.totalorder %s12, 1
      %p97 = por %p95, %p96
      %p98 = scmp.ne.s32.totalorder %s90, %s93
      %p99 = scmp.eq.s32.totalorder %s12, 0
      %p100 = por %p98, %p99
      %p101 = scmp.ne.s32.totalorder %s90, %s93
      %p102 = scmp.eq.s32.totalorder %s17, 1
      %p103 = por %p101, %p102
      %p104 = scmp.ne.s32.totalorder %s93, %s94
      %p105 = scmp.eq.s32.totalorder %s17, 0
      %p106 = por %p104, %p105
      %p107 = scmp.ne.s32.totalorder %s93, %s94
      %p108 = scmp.eq.s32.totalorder %s18, 1
      %p109 = por %p107, %p108
      %p111 = scmp.ne.s32.totalorder %s94, %s110
      %p112 = scmp.eq.s32.totalorder %s18, 0
      %p113 = por %p111, %p112
      %p114 = scmp.le.s32.totalorder 1, %s12
      %p115 = scmp.lt.s32.totalorder %s12, 3
      %p116 = pnand %p114, %p115
      %p117 = pneg %p116
      // Predicated region
      $region9: #{autoencoder_forward.9} parent=5 // pred_check
        _
      $region10: #{autoencoder_forward.9} parent=5 // pred_check_branch
        %119 = sbr.rel (%p116) target = $region12
      $region11: #{autoencoder_forward.9} parent=5 // pred_region
        %s120 = ssub.s32 %s12, 1
        // Predicated region
        $region13: #{autoencoder_forward.9} parent=11 // pred_check
          %p121 = pneg %p33
        $region14: #{autoencoder_forward.9} parent=11 // pred_check_branch
          %123 = sbr.rel (%p121) target = $region16
        $region15: #{autoencoder_forward.9} parent=11 // pred_region
          _
        $region16: #{autoencoder_forward.9} parent=11 // pred_fallthru
          _
        // Predicated region
        $region17: #{autoencoder_forward.9} parent=11 // pred_check
          %p124 = pneg %p54
        $region18: #{autoencoder_forward.9} parent=11 // pred_check_branch
          %126 = sbr.rel (%p124) target = $region20
        $region19: #{autoencoder_forward.9} parent=11 // pred_region
          _
        $region20: #{autoencoder_forward.9} parent=11 // pred_fallthru
          _
      $region12: #{autoencoder_forward.9} parent=5 // pred_fallthru
        _
      %p127 = scmp.lt.s32.totalorder %s12, 2
      // Predicated region
      $region21: #{autoencoder_forward.9} parent=5 // pred_check
        %p128 = pneg %p127
      $region22: #{autoencoder_forward.9} parent=5 // pred_check_branch
        %130 = sbr.rel (%p128) target = $region24
      $region23: #{autoencoder_forward.9} parent=5 // pred_region
        // Predicated region
        $region25: #{autoencoder_forward.9} parent=23 // pred_check
          %p131 = pneg %p74
        $region26: #{autoencoder_forward.9} parent=23 // pred_check_branch
          %133 = sbr.rel (%p131) target = $region28
        $region27: #{autoencoder_forward.9} parent=23 // pred_region
          %p134 = scmp.lt.s32.totalorder %s12, 1
          %s135 = scalar_select %p134, %s12, 1
          %s136 = smul.addr %s135, 4
          %s137 = smul.addr %s136, 4
          %s138 = scalar_lea.vmem %s2, %s137
        $region28: #{autoencoder_forward.9} parent=23 // pred_fallthru
          _
      $region24: #{autoencoder_forward.9} parent=5 // pred_fallthru
        _
      %p139 = scmp.le.s32.totalorder 1, %s12
      %p140 = scmp.lt.s32.totalorder %s12, 3
      %p141 = pnand %p139, %p140
      %p142 = pneg %p141
      // Predicated region
      $region29: #{autoencoder_forward.9} parent=5 // pred_check
        _
      $region30: #{autoencoder_forward.9} parent=5 // pred_check_branch
        %144 = sbr.rel (%p141) target = $region32
      $region31: #{autoencoder_forward.9} parent=5 // pred_region
        %s145 = ssub.s32 %s12, 1
        %p146 = pneg %p33
        %p147 = pneg %p30
        %p148 = pneg %p54
        %p149 = pneg %p51
        %p150 = scmp.lt.s32.totalorder %s17, 1
        %s151 = scalar_select %p150, %s17, 1
        %s152 = smul.addr %s151, 4
        %s153 = smul.addr %s152, 4
        %s154 = scalar_lea.vmem %s2, %s153
        %p155 = pneg %p80
        %p156 = pneg %p77
        %p157 = pneg %p106
        %p158 = pneg %p103
        %s159 = sand.u32 %s93, 1
        %s160 = scalar_lea.sflag [#allocation3], %s159
        %s161 = sand.u32 %s93, 1
        %s162 = smul.addr %s161, 4
        %s163 = scalar_lea.vmem [#allocation2], %s162
        %p164 = scmp.lt.s32.totalorder %s17, 1
        %s165 = scalar_select %p164, %s17, 1
        %s166 = smul.addr %s165, 4
        %s167 = smul.addr %s166, 4
        %s168 = scalar_lea.vmem %s2, %s167
        %v169 = vld [vmem:[%s0] sm:$0x3]
        %v170 = vunpack.c.l.bf16 %v169
        %v171 = vld [vmem:[%s168] sm:$0xf]
        %v172 = vld [vmem:[%s168 + $0x4] sm:$0xf]
        %v173 = vld [vmem:[%s168 + $0x8] sm:$0xf]
        %v174 = vld [vmem:[%s168 + $0xc] sm:$0xf]
        %v175 = vunpack.c.l.bf16 %v171
        %v176 = vunpack.c.l.bf16 %v172
        %v177 = vunpack.c.l.bf16 %v173
        %v178 = vunpack.c.l.bf16 %v174
        %s179 = scalar_lea.vmem %s0, 2
        %v180 = vld [vmem:[%s179] sm:$0x3]
        %v181 = vunpack.c.l.bf16 %v180
        %186 = vrot.lane.b32.xlu0 %v175, 127
        %v187 = vpop.permute.xlu0 %186
        %188 = vrot.lane.b32.xlu0 %v176, 127
        %v189 = vpop.permute.xlu0 %188
        %190 = vrot.lane.b32.xlu0 %v177, 127
        %v191 = vpop.permute.xlu0 %190
        %192 = vrot.lane.b32.xlu0 %v178, 127
        %v193 = vpop.permute.xlu0 %192
        %vm198 = vcmask 261120
        %v200 = vsel %vm198, %v181, 0
        %202 = vmatprep.subr.mxu0 0.0
        %203 = vmatpush1.msra.mxu0 0.0
        %204 = vmatprep.subr.mxu0 0.0
        %205 = vmatpush1.msra.mxu0 0.0
        %206 = vmatprep.subr.mxu0 0.0
        %207 = vmatpush1.msra.mxu0 0.0
        %208 = vmatprep.subr.mxu0 0.0
        %209 = vmatpush1.msra.mxu0 0.0
        %210 = vmatprep.subr.mxu0 0.0
        %211 = vmatpush1.msra.mxu0 0.0
        %212 = vmatprep.subr.mxu0 0.0
        %213 = vmatpush1.msra.mxu0 0.0
        %214 = vmatprep.subr.mxu0 0.0
        %215 = vmatpush1.msra.mxu0 0.0
        %216 = vmatprep.subr.mxu0 0.0
        %217 = vmatpush1.msra.mxu0 0.0
        %218 = vmatprep.subr.mxu0 0.0
        %219 = vmatpush1.msra.mxu0 0.0
        %220 = vmatprep.subr.mxu0 0.0
        %221 = vmatpush1.msra.mxu0 0.0
        %222 = vmatprep.subr.mxu0 0.0
        %223 = vmatpush1.msra.mxu0 0.0
        %224 = vmatprep.subr.mxu0 0.0
        %225 = vmatpush1.msra.mxu0 0.0
        %226 = vmatprep.subr.mxu0 0.0
        %227 = vmatpush1.msra.mxu0 %v193
        %228 = vmatprep.subr.mxu0 0.0
        %229 = vmatpush1.msra.mxu0 %v191
        %230 = vmatprep.subr.mxu0 0.0
        %231 = vmatpush1.msra.mxu0 %v189
        %232 = vmatprep.subr.mxu0 0.0
        %233 = vmatpush1.msra.mxu0 %v187
        %234 = vmatprep.subr.mxu0 0.0
        %235 = vmatpush2.msra.mxu0 0.0
        %236 = vmatprep.subr.mxu0 0.0
        %237 = vmatpush2.msra.mxu0 0.0
        %238 = vmatprep.subr.mxu0 0.0
        %239 = vmatpush2.msra.mxu0 0.0
        %240 = vmatprep.subr.mxu0 0.0
        %241 = vmatpush2.msra.mxu0 0.0
        %242 = vmatprep.subr.mxu0 0.0
        %243 = vmatpush2.msra.mxu0 0.0
        %244 = vmatprep.subr.mxu0 0.0
        %245 = vmatpush2.msra.mxu0 0.0
        %246 = vmatprep.subr.mxu0 0.0
        %247 = vmatpush2.msra.mxu0 0.0
        %248 = vmatprep.subr.mxu0 0.0
        %249 = vmatpush2.msra.mxu0 0.0
        %250 = vmatprep.subr.mxu0 0.0
        %251 = vmatpush2.msra.mxu0 0.0
        %252 = vmatprep.subr.mxu0 0.0
        %253 = vmatpush2.msra.mxu0 0.0
        %254 = vmatprep.subr.mxu0 0.0
        %255 = vmatpush2.msra.mxu0 0.0
        %256 = vmatprep.subr.mxu0 0.0
        %257 = vmatpush2.msra.mxu0 0.0
        %258 = vmatprep.subr.mxu0 0.0
        %259 = vmatpush2.msra.mxu0 0.0
        %260 = vmatprep.subr.mxu0 0.0
        %261 = vmatpush2.msra.mxu0 0.0
        %262 = vmatprep.subr.mxu0 0.0
        %263 = vmatpush2.msra.mxu0 0.0
        %264 = vmatprep.subr.mxu0 0.0
        %265 = vmatpush2.msra.mxu0 0.0
        %266 = vmatprep.mubr.f32.mxu0 0.0
        %267 = vmatmul.mubr.f32.gmra.mxu0 %v200
        %v268 = vpop.f32.mrf.mxu0
        %v269 = vadd.f32 0.0, %v268
        %v270 = vpop.f32.mrf.mxu0
        %271 = vdwg.mxu0
        %v273 = vsel %vm198, %v170, 0
        %275 = vmatprep.subr.mxu0 0.0
        %276 = vmatpush1.msra.mxu0 0.0
        %277 = vmatprep.subr.mxu0 0.0
        %278 = vmatpush1.msra.mxu0 0.0
        %279 = vmatprep.subr.mxu0 0.0
        %280 = vmatpush1.msra.mxu0 0.0
        %281 = vmatprep.subr.mxu0 0.0
        %282 = vmatpush1.msra.mxu0 0.0
        %283 = vmatprep.subr.mxu0 0.0
        %284 = vmatpush1.msra.mxu0 0.0
        %285 = vmatprep.subr.mxu0 0.0
        %286 = vmatpush1.msra.mxu0 0.0
        %287 = vmatprep.subr.mxu0 0.0
        %288 = vmatpush1.msra.mxu0 0.0
        %289 = vmatprep.subr.mxu0 0.0
        %290 = vmatpush1.msra.mxu0 0.0
        %291 = vmatprep.subr.mxu0 0.0
        %292 = vmatpush1.msra.mxu0 0.0
        %293 = vmatprep.subr.mxu0 0.0
        %294 = vmatpush1.msra.mxu0 0.0
        %295 = vmatprep.subr.mxu0 0.0
        %296 = vmatpush1.msra.mxu0 0.0
        %297 = vmatprep.subr.mxu0 0.0
        %298 = vmatpush1.msra.mxu0 0.0
        %299 = vmatprep.subr.mxu0 0.0
        %300 = vmatpush1.msra.mxu0 %v178
        %301 = vmatprep.subr.mxu0 0.0
        %302 = vmatpush1.msra.mxu0 %v177
        %303 = vmatprep.subr.mxu0 0.0
        %304 = vmatpush1.msra.mxu0 %v176
        %305 = vmatprep.subr.mxu0 0.0
        %306 = vmatpush1.msra.mxu0 %v175
        %307 = vmatprep.subr.mxu0 0.0
        %308 = vmatpush2.msra.mxu0 0.0
        %309 = vmatprep.subr.mxu0 0.0
        %310 = vmatpush2.msra.mxu0 0.0
        %311 = vmatprep.subr.mxu0 0.0
        %312 = vmatpush2.msra.mxu0 0.0
        %313 = vmatprep.subr.mxu0 0.0
        %314 = vmatpush2.msra.mxu0 0.0
        %315 = vmatprep.subr.mxu0 0.0
        %316 = vmatpush2.msra.mxu0 0.0
        %317 = vmatprep.subr.mxu0 0.0
        %318 = vmatpush2.msra.mxu0 0.0
        %319 = vmatprep.subr.mxu0 0.0
        %320 = vmatpush2.msra.mxu0 0.0
        %321 = vmatprep.subr.mxu0 0.0
        %322 = vmatpush2.msra.mxu0 0.0
        %323 = vmatprep.subr.mxu0 0.0
        %324 = vmatpush2.msra.mxu0 0.0
        %325 = vmatprep.subr.mxu0 0.0
        %326 = vmatpush2.msra.mxu0 0.0
        %327 = vmatprep.subr.mxu0 0.0
        %328 = vmatpush2.msra.mxu0 0.0
        %329 = vmatprep.subr.mxu0 0.0
        %330 = vmatpush2.msra.mxu0 0.0
        %331 = vmatprep.subr.mxu0 0.0
        %332 = vmatpush2.msra.mxu0 0.0
        %333 = vmatprep.subr.mxu0 0.0
        %334 = vmatpush2.msra.mxu0 0.0
        %335 = vmatprep.subr.mxu0 0.0
        %336 = vmatpush2.msra.mxu0 0.0
        %337 = vmatprep.subr.mxu0 0.0
        %338 = vmatpush2.msra.mxu0 0.0
        %339 = vmatprep.mubr.f32.mxu0 0.0
        %340 = vmatmul.mubr.f32.gmra.mxu0 %v273
        %v341 = vpop.f32.mrf.mxu0
        %v342 = vadd.f32 %v269, %v341
        %v343 = vpop.f32.mrf.mxu0
        %344 = vdwg.mxu0
        %s345 = scalar_lea.vmem %s0, 4
        %v346 = vld [vmem:[%s345] sm:$0x3]
        %v347 = vunpack.c.l.bf16 %v346
        %348 = vrot.lane.b32.xlu0 %v175, 126
        %v349 = vpop.permute.xlu0 %348
        %350 = vrot.lane.b32.xlu0 %v176, 126
        %v351 = vpop.permute.xlu0 %350
        %352 = vrot.lane.b32.xlu0 %v177, 126
        %v353 = vpop.permute.xlu0 %352
        %354 = vrot.lane.b32.xlu0 %v178, 126
        %v355 = vpop.permute.xlu0 %354
        %v361 = vsel %vm198, %v347, 0
        %363 = vmatprep.subr.mxu0 0.0
        %364 = vmatpush1.msra.mxu0 0.0
        %365 = vmatprep.subr.mxu0 0.0
        %366 = vmatpush1.msra.mxu0 0.0
        %367 = vmatprep.subr.mxu0 0.0
        %368 = vmatpush1.msra.mxu0 0.0
        %369 = vmatprep.subr.mxu0 0.0
        %370 = vmatpush1.msra.mxu0 0.0
        %371 = vmatprep.subr.mxu0 0.0
        %372 = vmatpush1.msra.mxu0 0.0
        %373 = vmatprep.subr.mxu0 0.0
        %374 = vmatpush1.msra.mxu0 0.0
        %375 = vmatprep.subr.mxu0 0.0
        %376 = vmatpush1.msra.mxu0 0.0
        %377 = vmatprep.subr.mxu0 0.0
        %378 = vmatpush1.msra.mxu0 0.0
        %379 = vmatprep.subr.mxu0 0.0
        %380 = vmatpush1.msra.mxu0 0.0
        %381 = vmatprep.subr.mxu0 0.0
        %382 = vmatpush1.msra.mxu0 0.0
        %383 = vmatprep.subr.mxu0 0.0
        %384 = vmatpush1.msra.mxu0 0.0
        %385 = vmatprep.subr.mxu0 0.0
        %386 = vmatpush1.msra.mxu0 0.0
        %387 = vmatprep.subr.mxu0 0.0
        %388 = vmatpush1.msra.mxu0 %v355
        %389 = vmatprep.subr.mxu0 0.0
        %390 = vmatpush1.msra.mxu0 %v353
        %391 = vmatprep.subr.mxu0 0.0
        %392 = vmatpush1.msra.mxu0 %v351
        %393 = vmatprep.subr.mxu0 0.0
        %394 = vmatpush1.msra.mxu0 %v349
        %395 = vmatprep.subr.mxu0 0.0
        %396 = vmatpush2.msra.mxu0 0.0
        %397 = vmatprep.subr.mxu0 0.0
        %398 = vmatpush2.msra.mxu0 0.0
        %399 = vmatprep.subr.mxu0 0.0
        %400 = vmatpush2.msra.mxu0 0.0
        %401 = vmatprep.subr.mxu0 0.0
        %402 = vmatpush2.msra.mxu0 0.0
        %403 = vmatprep.subr.mxu0 0.0
        %404 = vmatpush2.msra.mxu0 0.0
        %405 = vmatprep.subr.mxu0 0.0
        %406 = vmatpush2.msra.mxu0 0.0
        %407 = vmatprep.subr.mxu0 0.0
        %408 = vmatpush2.msra.mxu0 0.0
        %409 = vmatprep.subr.mxu0 0.0
        %410 = vmatpush2.msra.mxu0 0.0
        %411 = vmatprep.subr.mxu0 0.0
        %412 = vmatpush2.msra.mxu0 0.0
        %413 = vmatprep.subr.mxu0 0.0
        %414 = vmatpush2.msra.mxu0 0.0
        %415 = vmatprep.subr.mxu0 0.0
        %416 = vmatpush2.msra.mxu0 0.0
        %417 = vmatprep.subr.mxu0 0.0
        %418 = vmatpush2.msra.mxu0 0.0
        %419 = vmatprep.subr.mxu0 0.0
        %420 = vmatpush2.msra.mxu0 0.0
        %421 = vmatprep.subr.mxu0 0.0
        %422 = vmatpush2.msra.mxu0 0.0
        %423 = vmatprep.subr.mxu0 0.0
        %424 = vmatpush2.msra.mxu0 0.0
        %425 = vmatprep.subr.mxu0 0.0
        %426 = vmatpush2.msra.mxu0 0.0
        %427 = vmatprep.mubr.f32.mxu0 0.0
        %428 = vmatmul.mubr.f32.gmra.mxu0 %v361
        %v429 = vpop.f32.mrf.mxu0
        %v430 = vadd.f32 0.0, %v429
        %v431 = vpop.f32.mrf.mxu0
        %432 = vdwg.mxu0
        %v433 = vadd.f32 %v342, %v430
        %s434 = scalar_lea.vmem %s0, 6
        %v435 = vld [vmem:[%s434] sm:$0x3]
        %v436 = vunpack.c.l.bf16 %v435
        %437 = vrot.lane.b32.xlu0 %v175, 125
        %v438 = vpop.permute.xlu0 %437
        %439 = vrot.lane.b32.xlu0 %v176, 125
        %v440 = vpop.permute.xlu0 %439
        %441 = vrot.lane.b32.xlu0 %v177, 125
        %v442 = vpop.permute.xlu0 %441
        %443 = vrot.lane.b32.xlu0 %v178, 125
        %v444 = vpop.permute.xlu0 %443
        %v450 = vsel %vm198, %v436, 0
        %452 = vmatprep.subr.mxu0 0.0
        %453 = vmatpush1.msra.mxu0 0.0
        %454 = vmatprep.subr.mxu0 0.0
        %455 = vmatpush1.msra.mxu0 0.0
        %456 = vmatprep.subr.mxu0 0.0
        %457 = vmatpush1.msra.mxu0 0.0
        %458 = vmatprep.subr.mxu0 0.0
        %459 = vmatpush1.msra.mxu0 0.0
        %460 = vmatprep.subr.mxu0 0.0
        %461 = vmatpush1.msra.mxu0 0.0
        %462 = vmatprep.subr.mxu0 0.0
        %463 = vmatpush1.msra.mxu0 0.0
        %464 = vmatprep.subr.mxu0 0.0
        %465 = vmatpush1.msra.mxu0 0.0
        %466 = vmatprep.subr.mxu0 0.0
        %467 = vmatpush1.msra.mxu0 0.0
        %468 = vmatprep.subr.mxu0 0.0
        %469 = vmatpush1.msra.mxu0 0.0
        %470 = vmatprep.subr.mxu0 0.0
        %471 = vmatpush1.msra.mxu0 0.0
        %472 = vmatprep.subr.mxu0 0.0
        %473 = vmatpush1.msra.mxu0 0.0
        %474 = vmatprep.subr.mxu0 0.0
        %475 = vmatpush1.msra.mxu0 0.0
        %476 = vmatprep.subr.mxu0 0.0
        %477 = vmatpush1.msra.mxu0 %v444
        %478 = vmatprep.subr.mxu0 0.0
        %479 = vmatpush1.msra.mxu0 %v442
        %480 = vmatprep.subr.mxu0 0.0
        %481 = vmatpush1.msra.mxu0 %v440
        %482 = vmatprep.subr.mxu0 0.0
        %483 = vmatpush1.msra.mxu0 %v438
        %484 = vmatprep.subr.mxu0 0.0
        %485 = vmatpush2.msra.mxu0 0.0
        %486 = vmatprep.subr.mxu0 0.0
        %487 = vmatpush2.msra.mxu0 0.0
        %488 = vmatprep.subr.mxu0 0.0
        %489 = vmatpush2.msra.mxu0 0.0
        %490 = vmatprep.subr.mxu0 0.0
        %491 = vmatpush2.msra.mxu0 0.0
        %492 = vmatprep.subr.mxu0 0.0
        %493 = vmatpush2.msra.mxu0 0.0
        %494 = vmatprep.subr.mxu0 0.0
        %495 = vmatpush2.msra.mxu0 0.0
        %496 = vmatprep.subr.mxu0 0.0
        %497 = vmatpush2.msra.mxu0 0.0
        %498 = vmatprep.subr.mxu0 0.0
        %499 = vmatpush2.msra.mxu0 0.0
        %500 = vmatprep.subr.mxu0 0.0
        %501 = vmatpush2.msra.mxu0 0.0
        %502 = vmatprep.subr.mxu0 0.0
        %503 = vmatpush2.msra.mxu0 0.0
        %504 = vmatprep.subr.mxu0 0.0
        %505 = vmatpush2.msra.mxu0 0.0
        %506 = vmatprep.subr.mxu0 0.0
        %507 = vmatpush2.msra.mxu0 0.0
        %508 = vmatprep.subr.mxu0 0.0
        %509 = vmatpush2.msra.mxu0 0.0
        %510 = vmatprep.subr.mxu0 0.0
        %511 = vmatpush2.msra.mxu0 0.0
        %512 = vmatprep.subr.mxu0 0.0
        %513 = vmatpush2.msra.mxu0 0.0
        %514 = vmatprep.subr.mxu0 0.0
        %515 = vmatpush2.msra.mxu0 0.0
        %516 = vmatprep.mubr.f32.mxu0 0.0
        %517 = vmatmul.mubr.f32.gmra.mxu0 %v450
        %v518 = vpop.f32.mrf.mxu0
        %v519 = vadd.f32 0.0, %v518
        %v520 = vpop.f32.mrf.mxu0
        %521 = vdwg.mxu0
        %v522 = vadd.f32 %v433, %v519
        %s523 = scalar_lea.vmem %s0, 8
        %v524 = vld [vmem:[%s523] sm:$0x3]
        %v525 = vunpack.c.l.bf16 %v524
        %526 = vrot.lane.b32.xlu0 %v175, 124
        %v527 = vpop.permute.xlu0 %526
        %528 = vrot.lane.b32.xlu0 %v176, 124
        %v529 = vpop.permute.xlu0 %528
        %530 = vrot.lane.b32.xlu0 %v177, 124
        %v531 = vpop.permute.xlu0 %530
        %532 = vrot.lane.b32.xlu0 %v178, 124
        %v533 = vpop.permute.xlu0 %532
        %v539 = vsel %vm198, %v525, 0
        %541 = vmatprep.subr.mxu0 0.0
        %542 = vmatpush1.msra.mxu0 0.0
        %543 = vmatprep.subr.mxu0 0.0
        %544 = vmatpush1.msra.mxu0 0.0
        %545 = vmatprep.subr.mxu0 0.0
        %546 = vmatpush1.msra.mxu0 0.0
        %547 = vmatprep.subr.mxu0 0.0
        %548 = vmatpush1.msra.mxu0 0.0
        %549 = vmatprep.subr.mxu0 0.0
        %550 = vmatpush1.msra.mxu0 0.0
        %551 = vmatprep.subr.mxu0 0.0
        %552 = vmatpush1.msra.mxu0 0.0
        %553 = vmatprep.subr.mxu0 0.0
        %554 = vmatpush1.msra.mxu0 0.0
        %555 = vmatprep.subr.mxu0 0.0
        %556 = vmatpush1.msra.mxu0 0.0
        %557 = vmatprep.subr.mxu0 0.0
        %558 = vmatpush1.msra.mxu0 0.0
        %559 = vmatprep.subr.mxu0 0.0
        %560 = vmatpush1.msra.mxu0 0.0
        %561 = vmatprep.subr.mxu0 0.0
        %562 = vmatpush1.msra.mxu0 0.0
        %563 = vmatprep.subr.mxu0 0.0
        %564 = vmatpush1.msra.mxu0 0.0
        %565 = vmatprep.subr.mxu0 0.0
        %566 = vmatpush1.msra.mxu0 %v533
        %567 = vmatprep.subr.mxu0 0.0
        %568 = vmatpush1.msra.mxu0 %v531
        %569 = vmatprep.subr.mxu0 0.0
        %570 = vmatpush1.msra.mxu0 %v529
        %571 = vmatprep.subr.mxu0 0.0
        %572 = vmatpush1.msra.mxu0 %v527
        %573 = vmatprep.subr.mxu0 0.0
        %574 = vmatpush2.msra.mxu0 0.0
        %575 = vmatprep.subr.mxu0 0.0
        %576 = vmatpush2.msra.mxu0 0.0
        %577 = vmatprep.subr.mxu0 0.0
        %578 = vmatpush2.msra.mxu0 0.0
        %579 = vmatprep.subr.mxu0 0.0
        %580 = vmatpush2.msra.mxu0 0.0
        %581 = vmatprep.subr.mxu0 0.0
        %582 = vmatpush2.msra.mxu0 0.0
        %583 = vmatprep.subr.mxu0 0.0
        %584 = vmatpush2.msra.mxu0 0.0
        %585 = vmatprep.subr.mxu0 0.0
        %586 = vmatpush2.msra.mxu0 0.0
        %587 = vmatprep.subr.mxu0 0.0
        %588 = vmatpush2.msra.mxu0 0.0
        %589 = vmatprep.subr.mxu0 0.0
        %590 = vmatpush2.msra.mxu0 0.0
        %591 = vmatprep.subr.mxu0 0.0
        %592 = vmatpush2.msra.mxu0 0.0
        %593 = vmatprep.subr.mxu0 0.0
        %594 = vmatpush2.msra.mxu0 0.0
        %595 = vmatprep.subr.mxu0 0.0
        %596 = vmatpush2.msra.mxu0 0.0
        %597 = vmatprep.subr.mxu0 0.0
        %598 = vmatpush2.msra.mxu0 0.0
        %599 = vmatprep.subr.mxu0 0.0
        %600 = vmatpush2.msra.mxu0 0.0
        %601 = vmatprep.subr.mxu0 0.0
        %602 = vmatpush2.msra.mxu0 0.0
        %603 = vmatprep.subr.mxu0 0.0
        %604 = vmatpush2.msra.mxu0 0.0
        %605 = vmatprep.mubr.f32.mxu0 0.0
        %606 = vmatmul.mubr.f32.gmra.mxu0 %v539
        %v607 = vpop.f32.mrf.mxu0
        %v608 = vadd.f32 0.0, %v607
        %v609 = vpop.f32.mrf.mxu0
        %610 = vdwg.mxu0
        %v611 = vadd.f32 %v522, %v608
        %s612 = scalar_lea.vmem %s0, 10
        %v613 = vld [vmem:[%s612] sm:$0x3]
        %v614 = vunpack.c.l.bf16 %v613
        %615 = vrot.lane.b32.xlu0 %v175, 123
        %v616 = vpop.permute.xlu0 %615
        %617 = vrot.lane.b32.xlu0 %v176, 123
        %v618 = vpop.permute.xlu0 %617
        %619 = vrot.lane.b32.xlu0 %v177, 123
        %v620 = vpop.permute.xlu0 %619
        %621 = vrot.lane.b32.xlu0 %v178, 123
        %v622 = vpop.permute.xlu0 %621
        %v628 = vsel %vm198, %v614, 0
        %630 = vmatprep.subr.mxu0 0.0
        %631 = vmatpush1.msra.mxu0 0.0
        %632 = vmatprep.subr.mxu0 0.0
        %633 = vmatpush1.msra.mxu0 0.0
        %634 = vmatprep.subr.mxu0 0.0
        %635 = vmatpush1.msra.mxu0 0.0
        %636 = vmatprep.subr.mxu0 0.0
        %637 = vmatpush1.msra.mxu0 0.0
        %638 = vmatprep.subr.mxu0 0.0
        %639 = vmatpush1.msra.mxu0 0.0
        %640 = vmatprep.subr.mxu0 0.0
        %641 = vmatpush1.msra.mxu0 0.0
        %642 = vmatprep.subr.mxu0 0.0
        %643 = vmatpush1.msra.mxu0 0.0
        %644 = vmatprep.subr.mxu0 0.0
        %645 = vmatpush1.msra.mxu0 0.0
        %646 = vmatprep.subr.mxu0 0.0
        %647 = vmatpush1.msra.mxu0 0.0
        %648 = vmatprep.subr.mxu0 0.0
        %649 = vmatpush1.msra.mxu0 0.0
        %650 = vmatprep.subr.mxu0 0.0
        %651 = vmatpush1.msra.mxu0 0.0
        %652 = vmatprep.subr.mxu0 0.0
        %653 = vmatpush1.msra.mxu0 0.0
        %654 = vmatprep.subr.mxu0 0.0
        %655 = vmatpush1.msra.mxu0 %v622
        %656 = vmatprep.subr.mxu0 0.0
        %657 = vmatpush1.msra.mxu0 %v620
        %658 = vmatprep.subr.mxu0 0.0
        %659 = vmatpush1.msra.mxu0 %v618
        %660 = vmatprep.subr.mxu0 0.0
        %661 = vmatpush1.msra.mxu0 %v616
        %662 = vmatprep.subr.mxu0 0.0
        %663 = vmatpush2.msra.mxu0 0.0
        %664 = vmatprep.subr.mxu0 0.0
        %665 = vmatpush2.msra.mxu0 0.0
        %666 = vmatprep.subr.mxu0 0.0
        %667 = vmatpush2.msra.mxu0 0.0
        %668 = vmatprep.subr.mxu0 0.0
        %669 = vmatpush2.msra.mxu0 0.0
        %670 = vmatprep.subr.mxu0 0.0
        %671 = vmatpush2.msra.mxu0 0.0
        %672 = vmatprep.subr.mxu0 0.0
        %673 = vmatpush2.msra.mxu0 0.0
        %674 = vmatprep.subr.mxu0 0.0
        %675 = vmatpush2.msra.mxu0 0.0
        %676 = vmatprep.subr.mxu0 0.0
        %677 = vmatpush2.msra.mxu0 0.0
        %678 = vmatprep.subr.mxu0 0.0
        %679 = vmatpush2.msra.mxu0 0.0
        %680 = vmatprep.subr.mxu0 0.0
        %681 = vmatpush2.msra.mxu0 0.0
        %682 = vmatprep.subr.mxu0 0.0
        %683 = vmatpush2.msra.mxu0 0.0
        %684 = vmatprep.subr.mxu0 0.0
        %685 = vmatpush2.msra.mxu0 0.0
        %686 = vmatprep.subr.mxu0 0.0
        %687 = vmatpush2.msra.mxu0 0.0
        %688 = vmatprep.subr.mxu0 0.0
        %689 = vmatpush2.msra.mxu0 0.0
        %690 = vmatprep.subr.mxu0 0.0
        %691 = vmatpush2.msra.mxu0 0.0
        %692 = vmatprep.subr.mxu0 0.0
        %693 = vmatpush2.msra.mxu0 0.0
        %694 = vmatprep.mubr.f32.mxu0 0.0
        %695 = vmatmul.mubr.f32.gmra.mxu0 %v628
        %v696 = vpop.f32.mrf.mxu0
        %v697 = vadd.f32 0.0, %v696
        %v698 = vpop.f32.mrf.mxu0
        %699 = vdwg.mxu0
        %v700 = vadd.f32 %v611, %v697
        %s701 = scalar_lea.vmem %s0, 12
        %v702 = vld [vmem:[%s701] sm:$0x3]
        %v703 = vunpack.c.l.bf16 %v702
        %704 = vrot.lane.b32.xlu0 %v175, 122
        %v705 = vpop.permute.xlu0 %704
        %706 = vrot.lane.b32.xlu0 %v176, 122
        %v707 = vpop.permute.xlu0 %706
        %708 = vrot.lane.b32.xlu0 %v177, 122
        %v709 = vpop.permute.xlu0 %708
        %710 = vrot.lane.b32.xlu0 %v178, 122
        %v711 = vpop.permute.xlu0 %710
        %v717 = vsel %vm198, %v703, 0
        %719 = vmatprep.subr.mxu0 0.0
        %720 = vmatpush1.msra.mxu0 0.0
        %721 = vmatprep.subr.mxu0 0.0
        %722 = vmatpush1.msra.mxu0 0.0
        %723 = vmatprep.subr.mxu0 0.0
        %724 = vmatpush1.msra.mxu0 0.0
        %725 = vmatprep.subr.mxu0 0.0
        %726 = vmatpush1.msra.mxu0 0.0
        %727 = vmatprep.subr.mxu0 0.0
        %728 = vmatpush1.msra.mxu0 0.0
        %729 = vmatprep.subr.mxu0 0.0
        %730 = vmatpush1.msra.mxu0 0.0
        %731 = vmatprep.subr.mxu0 0.0
        %732 = vmatpush1.msra.mxu0 0.0
        %733 = vmatprep.subr.mxu0 0.0
        %734 = vmatpush1.msra.mxu0 0.0
        %735 = vmatprep.subr.mxu0 0.0
        %736 = vmatpush1.msra.mxu0 0.0
        %737 = vmatprep.subr.mxu0 0.0
        %738 = vmatpush1.msra.mxu0 0.0
        %739 = vmatprep.subr.mxu0 0.0
        %740 = vmatpush1.msra.mxu0 0.0
        %741 = vmatprep.subr.mxu0 0.0
        %742 = vmatpush1.msra.mxu0 0.0
        %743 = vmatprep.subr.mxu0 0.0
        %744 = vmatpush1.msra.mxu0 %v711
        %745 = vmatprep.subr.mxu0 0.0
        %746 = vmatpush1.msra.mxu0 %v709
        %747 = vmatprep.subr.mxu0 0.0
        %748 = vmatpush1.msra.mxu0 %v707
        %749 = vmatprep.subr.mxu0 0.0
        %750 = vmatpush1.msra.mxu0 %v705
        %751 = vmatprep.subr.mxu0 0.0
        %752 = vmatpush2.msra.mxu0 0.0
        %753 = vmatprep.subr.mxu0 0.0
        %754 = vmatpush2.msra.mxu0 0.0
        %755 = vmatprep.subr.mxu0 0.0
        %756 = vmatpush2.msra.mxu0 0.0
        %757 = vmatprep.subr.mxu0 0.0
        %758 = vmatpush2.msra.mxu0 0.0
        %759 = vmatprep.subr.mxu0 0.0
        %760 = vmatpush2.msra.mxu0 0.0
        %761 = vmatprep.subr.mxu0 0.0
        %762 = vmatpush2.msra.mxu0 0.0
        %763 = vmatprep.subr.mxu0 0.0
        %764 = vmatpush2.msra.mxu0 0.0
        %765 = vmatprep.subr.mxu0 0.0
        %766 = vmatpush2.msra.mxu0 0.0
        %767 = vmatprep.subr.mxu0 0.0
        %768 = vmatpush2.msra.mxu0 0.0
        %769 = vmatprep.subr.mxu0 0.0
        %770 = vmatpush2.msra.mxu0 0.0
        %771 = vmatprep.subr.mxu0 0.0
        %772 = vmatpush2.msra.mxu0 0.0
        %773 = vmatprep.subr.mxu0 0.0
        %774 = vmatpush2.msra.mxu0 0.0
        %775 = vmatprep.subr.mxu0 0.0
        %776 = vmatpush2.msra.mxu0 0.0
        %777 = vmatprep.subr.mxu0 0.0
        %778 = vmatpush2.msra.mxu0 0.0
        %779 = vmatprep.subr.mxu0 0.0
        %780 = vmatpush2.msra.mxu0 0.0
        %781 = vmatprep.subr.mxu0 0.0
        %782 = vmatpush2.msra.mxu0 0.0
        %783 = vmatprep.mubr.f32.mxu0 0.0
        %784 = vmatmul.mubr.f32.gmra.mxu0 %v717
        %v785 = vpop.f32.mrf.mxu0
        %v786 = vadd.f32 0.0, %v785
        %v787 = vpop.f32.mrf.mxu0
        %788 = vdwg.mxu0
        %v789 = vadd.f32 %v700, %v786
        %v790 = vld [vmem:[%s1] sm:$0xf]
        %792 = vset.pattern.permute.xlu0 0
        %793 = vperm.xlu0 %792, %v790
        %v794 = vpop.permute.xlu0 %793
        %v796 = vadd.f32 %v789, %v794
        %vm797 = vcmask 125952
        %798 = vst.msk [vmem:[%s163] sm:$0xf] %vm797, %v796
        %s799 = sand.u32 %s93, 1
        %s800 = scalar_lea.sflag [#allocation3], %s799
        %s801 = sand.u32 %s93, 1
        %s802 = smul.addr %s801, 4
        %s803 = scalar_lea.vmem [#allocation2], %s802
        // Predicated region
        $region33: #{autoencoder_forward.9} parent=31 // pred_check
          %p804 = pneg %p103
        $region34: #{autoencoder_forward.9} parent=31 // pred_check_branch
          %806 = sbr.rel (%p804) target = $region36
        $region35: #{autoencoder_forward.9} parent=31 // pred_region
          %s808 = ssub.s32 64, 64
          %809 = vsyncadd %s800, %s808
          %s810 = smul.addr %s17, 64
          %s811 = scalar_lea.hbm %s3, %s810
          %s813 = sshll.u32 %s803, 4
          %s814 = int_to_ptr.vmem [resolvable:$true] %s813
          %816 = dma.vmem_to_hbm [thread:$0]  %s814, 64, %s811, %s800
        $region36: #{autoencoder_forward.9} parent=31 // pred_fallthru
          _
      $region32: #{autoencoder_forward.9} parent=5 // pred_fallthru
        _
      %p817 = scmp.le.s32.totalorder 2, %s12
      // Predicated region
      $region37: #{autoencoder_forward.9} parent=5 // pred_check
        %p818 = pneg %p817
      $region38: #{autoencoder_forward.9} parent=5 // pred_check_branch
        %820 = sbr.rel (%p818) target = $region40
      $region39: #{autoencoder_forward.9} parent=5 // pred_region
        %s821 = ssub.s32 %s12, 2
        // Predicated region
        $region41: #{autoencoder_forward.9} parent=39 // pred_check
          %p822 = pneg %p109
        $region42: #{autoencoder_forward.9} parent=39 // pred_check_branch
          %824 = sbr.rel (%p822) target = $region44
        $region43: #{autoencoder_forward.9} parent=39 // pred_region
          %s825 = sand.u32 %s94, 1
          %s826 = scalar_lea.sflag [#allocation3], %s825
          %s827 = sand.u32 %s94, 1
          %s828 = smul.addr %s827, 4
          %s829 = scalar_lea.vmem [#allocation2], %s828
          %830 = dma.done %s826, 64
        $region44: #{autoencoder_forward.9} parent=39 // pred_fallthru
          _
      $region40: #{autoencoder_forward.9} parent=5 // pred_fallthru
        _
    $region6: #{autoencoder_forward.9} parent=1 // loop_footer
      %s16 = sadd.s32 1, %s12
    $region7: #{autoencoder_forward.9} parent=1 // loop_footer_branch
      %11 = sbr.rel target = $region3
    $region8: #{autoencoder_forward.9} parent=1 // loop_exit
      _
    %831 = vsyncpa [#allocation3], 1
    %s832 = scalar_lea.sflag [#allocation3], 1
    %833 = vsyncpa %s832, 1

</llo_original>
